<compile_context>
chip_gen: v5e
topology: v5e:2x2
jax: 0.10.0
libtpu: 0.0.40
codegen_flags: <defaults>
</compile_context>

<pallas_src>
import jax
import jax.numpy as jnp
from jax import lax
from jax.experimental import pallas as pl
from jax.experimental.pallas import tpu as pltpu

LANES = 128
BF16 = jnp.bfloat16
F32 = jnp.float32


# ----------------------------------------------------------------------------
# Single fused kernel: conv1+ReLU+pool -> conv2+ReLU+pool -> fc1 -> fc2.
#   p_ref   : (TB, 768, 32) bf16  conv1 im2col patches, rows = corner*192 + h*16 + w
#                                 (w padded 12->16 with zero rows), K padded 25->32
#   w1_ref  : (32, 128)  bf16     conv1 weight (Cout 10 -> 128 lanes)
#   b1_ref  : (1, 128)   f32
#   w2_ref  : (5, 128, 128) bf16  conv2 kh-packed: [kh][ci, kw*20+co]
#   b2_ref  : (1, 128)   f32
#   sel_ref : (5, 128, 128) bf16  selection: [kw][kw*20+co, co] = 1
#   wf1_ref : (16, 128, 128) bf16 fc1 per pooled spatial position [i*4+j][ci, o]
#   bf1_ref : (1, 128)   f32
#   wf2_ref : (128, 128) bf16     fc2 (50 pad -> 10 pad)
#   bf2_ref : (1, 128)   f32
#   o_ref   : (TB, 128)  f32      logits padded to 128 lanes
# ----------------------------------------------------------------------------
def net_kernel(p_ref, w1_ref, b1_ref, w2_ref, b2_ref, sel_ref,
               wf1_ref, bf1_ref, wf2_ref, bf2_ref,
               o_ref, p1_scr, z_scr, hp_scr):
    TB = o_ref.shape[0]
    w1 = w1_ref[...]

    # ---- conv1 (im2col matmul) + MaxPool2d(2) + bias + ReLU -----------------
    # Pool = elementwise max of the 4 corner blocks; bias/ReLU hoisted after it.
    def corner(c):
        pv = p_ref[:, c * 192:(c + 1) * 192, :]            # (TB,192,32) bf16
        pv = pv.reshape(TB * 192, 32)                       # aligned pure view
        return jnp.dot(pv, w1, preferred_element_type=F32)  # (TB*192,128)

    m = jnp.maximum(jnp.maximum(corner(0), corner(1)),
                    jnp.maximum(corner(2), corner(3)))
    pooled1 = jnp.maximum(m + b1_ref[...], 0.0)              # (TB*192,128) f32
    # pooled conv1 map stays in VMEM (bf16): rows = h*16 + w, w in 0..15 (12..15 dummy)
    p1_scr[...] = pooled1.reshape(TB, 192, LANES).astype(BF16)

    # ---- conv2: 5 kh-packed matmuls, accumulated in an f32 VMEM scratch -----
    # Z[b, oh, w, kw*20+co] = sum_{kh,ci} p1[b, oh+kh, w, ci] * w2[co,ci,kh,kw]
    for kh in range(5):
        lhs = p1_scr[:, kh * 16:kh * 16 + 128, :]            # (TB,128,128) bf16, aligned
        lhs = lhs.reshape(TB * 128, LANES)                   # pure view
        zk = jnp.dot(lhs, w2_ref[kh], preferred_element_type=F32)
        zk = zk.reshape(TB * 8, 16, LANES)                   # pure view (rows=(b,oh), w)
        if kh == 0:
            z_scr[...] = zk
        else:
            z_scr[...] += zk

    # ---- conv2: kw recombination (spatial shift + lane realign) + bias + ReLU
    yacc = None
    for kw in range(5):
        zs = z_scr[:, kw:kw + 8, :]                          # (TB*8,8,128) f32
        zs = zs.reshape(TB * 64, LANES).astype(BF16)         # pure view, rows=(b,oh,ow)
        t = jnp.dot(zs, sel_ref[kw], preferred_element_type=F32)
        yacc = t if yacc is None else yacc + t
    a2 = jnp.maximum(yacc + b2_ref[...], 0.0)                # (TB*64,128) f32

    # ---- MaxPool2d(2): h-direction as one vector max; w-direction in fc1 ----
    a2r = a2.reshape(TB * 4, 2, 8, LANES)                    # (b,i) x r x ow x c
    hpool = jnp.maximum(a2r[:, 0], a2r[:, 1])                # (TB*4,8,128)
    hp_scr[...] = hpool.reshape(TB, 32, LANES)               # rows = i*8 + ow

    # ---- fc1 (flatten + w-pool folded into 16 per-position matmuls) + fc2 ---
    fc1 = jnp.zeros((TB, LANES), F32) + bf1_ref[...]
    for i in range(4):
        for j in range(4):
            x0 = hp_scr[:, i * 8 + 2 * j, :]
            x1 = hp_scr[:, i * 8 + 2 * j + 1, :]
            xp = jnp.maximum(x0, x1).astype(BF16)            # (TB,128)
            fc1 = fc1 + jnp.dot(xp, wf1_ref[i * 4 + j],
                                preferred_element_type=F32)
    out = jnp.dot(fc1.astype(BF16), wf2_ref[...],
                  preferred_element_type=F32) + bf2_ref[...]
    o_ref[...] = out


# ----------------------------------------------------------------------------
# pallas_call wrapper (single fused call, batch-tiled parallel grid)
# ----------------------------------------------------------------------------
def fused_net_call(p1, prepped, Bp, TB):
    (w1p, b1p, w2p, b2p, selp, wf1p, bf1p, wf2p, bf2p) = prepped
    nb = Bp // TB
    flops = 2 * Bp * (4 * 192 * 32 * LANES          # conv1
                      + 5 * 128 * LANES * LANES     # conv2 kh-pack
                      + 5 * 64 * LANES * LANES      # conv2 kw selection
                      + 16 * LANES * LANES          # fc1
                      + LANES * LANES)              # fc2
    bytes_accessed = (Bp * 768 * 32 * 2              # patches (bf16)
                      + (32 * LANES + 27 * LANES * LANES) * 2  # weights (bf16)
                      + 4 * LANES * 4                # biases
                      + Bp * LANES * 4)              # output
    return pl.pallas_call(
        net_kernel,
        out_shape=jax.ShapeDtypeStruct((Bp, LANES), jnp.float32),
        grid=(nb,),
        in_specs=[
            pl.BlockSpec((TB, 768, 32), lambda b: (b, 0, 0)),
            pl.BlockSpec((32, LANES), lambda b: (0, 0)),
            pl.BlockSpec((1, LANES), lambda b: (0, 0)),
            pl.BlockSpec((5, LANES, LANES), lambda b: (0, 0, 0)),
            pl.BlockSpec((1, LANES), lambda b: (0, 0)),
            pl.BlockSpec((5, LANES, LANES), lambda b: (0, 0, 0)),
            pl.BlockSpec((16, LANES, LANES), lambda b: (0, 0, 0)),
            pl.BlockSpec((1, LANES), lambda b: (0, 0)),
            pl.BlockSpec((LANES, LANES), lambda b: (0, 0)),
            pl.BlockSpec((1, LANES), lambda b: (0, 0)),
        ],
        out_specs=pl.BlockSpec((TB, LANES), lambda b: (b, 0)),
        scratch_shapes=[
            pltpu.VMEM((TB, 192, LANES), jnp.bfloat16),   # pooled conv1 map
            pltpu.VMEM((TB * 8, 16, LANES), jnp.float32),  # conv2 kh-pack accumulator
            pltpu.VMEM((TB, 32, LANES), jnp.float32),      # h-pooled conv2 map
        ],
        compiler_params=pltpu.CompilerParams(dimension_semantics=("parallel",)),
        cost_estimate=pl.CostEstimate(flops=int(flops), transcendentals=0,
                                      bytes_accessed=int(bytes_accessed)),
    )(p1, w1p, b1p, w2p, b2p, selp, wf1p, bf1p, wf2p, bf2p)


# ----------------------------------------------------------------------------
# Forward pass (jitted): tiny XLA glue (conv1 patch build) + ONE fused kernel.
# ----------------------------------------------------------------------------
def net_forward(x, prepped):
    B = x.shape[0]
    assert x.shape[1:] == (1, 28, 28)
    TB = B if B < 8 else 8
    Bp = -(-B // TB) * TB

    # conv1 im2col patches in pool/conv2-friendly layout:
    #   per batch, rows = corner*192 + ph*16 + pw  (pw 12..15 are zero dummy rows)
    #   cols = kh*5 + kw, padded 25 -> 32.  Shipped to the kernel in bf16.
    xs = x[:, 0]                                                       # (B,28,28)
    cols = [xs[:, kh:kh + 24, kw:kw + 24] for kh in range(5) for kw in range(5)]
    pt = jnp.stack(cols, axis=-1)                                      # (B,24,24,25)
    corners = [pt[:, dh::2, dw::2, :] for dh in (0, 1) for dw in (0, 1)]
    pc = jnp.stack(corners, axis=1)                                    # (B,4,12,12,25)
    pc = jnp.pad(pc, ((0, 0), (0, 0), (0, 0), (0, 4), (0, 0)))         # pw 12 -> 16
    p1 = pc.reshape(B, 768, 25)
    p1 = jnp.pad(p1, ((0, Bp - B), (0, 0), (0, 7))).astype(jnp.bfloat16)

    out = fused_net_call(p1, prepped, Bp, TB)                          # (Bp, 128)
    return out[:B, :10]


# ----------------------------------------------------------------------------
# Parameters (torch layouts) and one-time weight re-layout / padding (bf16).
# ----------------------------------------------------------------------------
def init_params():
    key = jax.random.PRNGKey(42)
    ks = jax.random.split(key, 8)
    w1 = 0.1 * jax.random.normal(ks[0], (10, 1, 5, 5), jnp.float32)
    b1 = 0.1 * jax.random.normal(ks[1], (10,), jnp.float32)
    w2 = 0.05 * jax.random.normal(ks[2], (20, 10, 5, 5), jnp.float32)
    b2 = 0.1 * jax.random.normal(ks[3], (20,), jnp.float32)
    fw1 = 0.05 * jax.random.normal(ks[4], (50, 320), jnp.float32)   # torch (out, in)
    fb1 = 0.1 * jax.random.normal(ks[5], (50,), jnp.float32)
    fw2 = 0.1 * jax.random.normal(ks[6], (10, 50), jnp.float32)
    fb2 = 0.1 * jax.random.normal(ks[7], (10,), jnp.float32)
    return (w1, b1, w2, b2, fw1, fb1, fw2, fb2)


def prepare_params(params):
    """One-time (outside jit) weight re-layout: pad to 128 lanes, pack conv2 per kh,
    build the kw selection matrices, fold the NCHW flatten into fc1, cast to bf16."""
    w1, b1, w2, b2, fw1, fb1, fw2, fb2 = params
    f32 = jnp.float32
    # conv1: [kh*5+kw, co]
    w1p = jnp.zeros((32, LANES), f32).at[:25, :10].set(
        w1.reshape(10, 25).T).astype(BF16)
    b1p = jnp.zeros((1, LANES), f32).at[0, :10].set(b1)
    # conv2 kh-packed: A[kh][ci, kw*20+co] = w2[co, ci, kh, kw]
    t = w2.transpose(2, 3, 1, 0)            # (kh, kw, ci, co)
    u = t.transpose(0, 2, 1, 3)             # (kh, ci, kw, co)
    w2p = jnp.zeros((5, LANES, LANES), f32).at[:, :10, :100].set(
        u.reshape(5, 10, 100)).astype(BF16)
    b2p = jnp.zeros((1, LANES), f32).at[0, :20].set(b2)
    # kw selection / lane-realignment matrices: S[kw][kw*20+co, co] = 1
    selp = jnp.zeros((5, LANES, LANES), f32)
    eye20 = jnp.eye(20, dtype=f32)
    for kw in range(5):
        selp = selp.at[kw, kw * 20:kw * 20 + 20, :20].set(eye20)
    selp = selp.astype(BF16)
    # fc1 per pooled spatial position (folds the NCHW flatten order c*16 + i*4 + j)
    wf1p = jnp.zeros((16, LANES, LANES), f32).at[:, :20, :50].set(
        fw1.reshape(50, 20, 4, 4).transpose(2, 3, 1, 0).reshape(16, 20, 50)).astype(BF16)
    bf1p = jnp.zeros((1, LANES), f32).at[0, :50].set(fb1)
    wf2p = jnp.zeros((LANES, LANES), f32).at[:50, :10].set(fw2.T).astype(BF16)
    bf2p = jnp.zeros((1, LANES), f32).at[0, :10].set(fb2)
    return (w1p, b1p, w2p, b2p, selp, wf1p, bf1p, wf2p, bf2p)


# ----------------------------------------------------------------------------
# Pure-JAX reference (torch semantics, f32 HIGHEST) for the correctness check.
# ----------------------------------------------------------------------------
def reference_forward(x, params):
    w1, b1, w2, b2, fw1, fb1, fw2, fb2 = params

    def conv(t, w, b):
        y = lax.conv_general_dilated(t, w, (1, 1), 'VALID',
                                     dimension_numbers=('NCHW', 'OIHW', 'NCHW'),
                                     precision=lax.Precision.HIGHEST)
        return y + b[None, :, None, None]

    def pool(t):
        return jnp.maximum(jnp.maximum(t[:, :, 0::2, 0::2], t[:, :, 0::2, 1::2]),
                           jnp.maximum(t[:, :, 1::2, 0::2], t[:, :, 1::2, 1::2]))

    y = pool(jnp.maximum(conv(x, w1, b1), 0.0))
    y = pool(jnp.maximum(conv(y, w2, b2), 0.0))
    y = y.reshape(x.shape[0], -1)
    y = y @ fw1.T + fb1
    y = y @ fw2.T + fb2
    return y


if __name__ == "__main__":
    params = init_params()
    prepped = prepare_params(params)          # one-time weight prep, outside jit

    # MNIST-style input: batch=2, 1 channel, 28x28 (required by the 320-dim flatten)
    x = jax.random.normal(jax.random.PRNGKey(0), (2, 1, 28, 28), jnp.float32)

    fwd = jax.jit(net_forward)
    out = jax.block_until_ready(fwd(x, prepped))

    assert out.shape == (2, 10), out.shape
    assert out.dtype == jnp.float32

    ref = reference_forward(x, params)
    err = float(jnp.max(jnp.abs(out - ref)))
    # bf16 matmul inputs (f32 accumulation): tolerance a bit looser than pure f32.
    assert err < 6e-2, f"max abs err vs reference: {err}"

    print("KERNEL_OK")
</pallas_src>

<mosaic_0001>
module attributes {stable_mosaic.version = 11 : i64} {
  func.func @net_kernel(%arg0: i32, %arg1: memref<2x768x32xbf16, #tpu.memory_space<vmem>>, %arg2: memref<32x128xbf16, #tpu.memory_space<vmem>>, %arg3: memref<1x128xf32, #tpu.memory_space<vmem>>, %arg4: memref<5x128x128xbf16, #tpu.memory_space<vmem>>, %arg5: memref<1x128xf32, #tpu.memory_space<vmem>>, %arg6: memref<5x128x128xbf16, #tpu.memory_space<vmem>>, %arg7: memref<16x128x128xbf16, #tpu.memory_space<vmem>>, %arg8: memref<1x128xf32, #tpu.memory_space<vmem>>, %arg9: memref<128x128xbf16, #tpu.memory_space<vmem>>, %arg10: memref<1x128xf32, #tpu.memory_space<vmem>>, %arg11: memref<2x128xf32, #tpu.memory_space<vmem>>, %arg12: memref<2x192x128xbf16, #tpu.memory_space<vmem>>, %arg13: memref<16x16x128xf32, #tpu.memory_space<vmem>>, %arg14: memref<2x32x128xf32, #tpu.memory_space<vmem>>) attributes {dimension_semantics = [#tpu.dimension_semantics<parallel>], iteration_bounds = array<i64: 1>, scalar_prefetch = 0 : i64, scratch_operands = 3 : i64, tpu.core_type = #tpu.core_type<tc>, window_params = [{transform_indices = @transform_0, window_bounds = array<i64: 2, 768, 32>}, {pipeline_mode = #tpu.pipeline_mode<synchronous>, transform_indices = @transform_1, window_bounds = array<i64: 32, 128>}, {pipeline_mode = #tpu.pipeline_mode<synchronous>, transform_indices = @transform_2, window_bounds = array<i64: 1, 128>}, {pipeline_mode = #tpu.pipeline_mode<synchronous>, transform_indices = @transform_3, window_bounds = array<i64: 5, 128, 128>}, {pipeline_mode = #tpu.pipeline_mode<synchronous>, transform_indices = @transform_4, window_bounds = array<i64: 1, 128>}, {pipeline_mode = #tpu.pipeline_mode<synchronous>, transform_indices = @transform_5, window_bounds = array<i64: 5, 128, 128>}, {pipeline_mode = #tpu.pipeline_mode<synchronous>, transform_indices = @transform_6, window_bounds = array<i64: 16, 128, 128>}, {pipeline_mode = #tpu.pipeline_mode<synchronous>, transform_indices = @transform_7, window_bounds = array<i64: 1, 128>}, {pipeline_mode = #tpu.pipeline_mode<synchronous>, transform_indices = @transform_8, window_bounds = array<i64: 128, 128>}, {pipeline_mode = #tpu.pipeline_mode<synchronous>, transform_indices = @transform_9, window_bounds = array<i64: 1, 128>}, {transform_indices = @transform_10, window_bounds = array<i64: 2, 128>}]} {
    %c0 = arith.constant 0 : index
    %c0_0 = arith.constant 0 : index
    %0 = vector.load %arg2[%c0, %c0_0] : memref<32x128xbf16, #tpu.memory_space<vmem>>, vector<32x128xbf16>
    %c0_1 = arith.constant 0 : index
    %c0_2 = arith.constant 0 : index
    %c0_3 = arith.constant 0 : index
    %1 = vector.load %arg1[%c0_1, %c0_2, %c0_3] : memref<2x768x32xbf16, #tpu.memory_space<vmem>>, vector<2x192x32xbf16>
    %2 = vector.shape_cast %1 : vector<2x192x32xbf16> to vector<384x32xbf16>
    %cst = arith.constant dense<0.000000e+00> : vector<384x128xf32>
    %3 = tpu.matmul %2, %0, %cst {dimension_numbers = #tpu.dot_dimension_numbers<[1], [0], [0], [1], [0, 0, 1, 1], [], []>} : vector<384x32xbf16>, vector<32x128xbf16>, vector<384x128xf32> -> vector<384x128xf32>
    %c0_4 = arith.constant 0 : index
    %c192 = arith.constant 192 : index
    %c0_5 = arith.constant 0 : index
    %4 = vector.load %arg1[%c0_4, %c192, %c0_5] : memref<2x768x32xbf16, #tpu.memory_space<vmem>>, vector<2x192x32xbf16>
    %5 = vector.shape_cast %4 : vector<2x192x32xbf16> to vector<384x32xbf16>
    %cst_6 = arith.constant dense<0.000000e+00> : vector<384x128xf32>
    %6 = tpu.matmul %5, %0, %cst_6 {dimension_numbers = #tpu.dot_dimension_numbers<[1], [0], [0], [1], [0, 0, 1, 1], [], []>} : vector<384x32xbf16>, vector<32x128xbf16>, vector<384x128xf32> -> vector<384x128xf32>
    %7 = arith.maximumf %3, %6 : vector<384x128xf32>
    %c0_7 = arith.constant 0 : index
    %c384 = arith.constant 384 : index
    %c0_8 = arith.constant 0 : index
    %8 = vector.load %arg1[%c0_7, %c384, %c0_8] : memref<2x768x32xbf16, #tpu.memory_space<vmem>>, vector<2x192x32xbf16>
    %9 = vector.shape_cast %8 : vector<2x192x32xbf16> to vector<384x32xbf16>
    %cst_9 = arith.constant dense<0.000000e+00> : vector<384x128xf32>
    %10 = tpu.matmul %9, %0, %cst_9 {dimension_numbers = #tpu.dot_dimension_numbers<[1], [0], [0], [1], [0, 0, 1, 1], [], []>} : vector<384x32xbf16>, vector<32x128xbf16>, vector<384x128xf32> -> vector<384x128xf32>
    %c0_10 = arith.constant 0 : index
    %c576 = arith.constant 576 : index
    %c0_11 = arith.constant 0 : index
    %11 = vector.load %arg1[%c0_10, %c576, %c0_11] : memref<2x768x32xbf16, #tpu.memory_space<vmem>>, vector<2x192x32xbf16>
    %12 = vector.shape_cast %11 : vector<2x192x32xbf16> to vector<384x32xbf16>
    %cst_12 = arith.constant dense<0.000000e+00> : vector<384x128xf32>
    %13 = tpu.matmul %12, %0, %cst_12 {dimension_numbers = #tpu.dot_dimension_numbers<[1], [0], [0], [1], [0, 0, 1, 1], [], []>} : vector<384x32xbf16>, vector<32x128xbf16>, vector<384x128xf32> -> vector<384x128xf32>
    %14 = arith.maximumf %10, %13 : vector<384x128xf32>
    %15 = arith.maximumf %7, %14 : vector<384x128xf32>
    %c0_13 = arith.constant 0 : index
    %c0_14 = arith.constant 0 : index
    %16 = vector.load %arg3[%c0_13, %c0_14] : memref<1x128xf32, #tpu.memory_space<vmem>>, vector<1x128xf32>
    %17 = vector.broadcast %16 : vector<1x128xf32> to vector<384x128xf32>
    %18 = arith.addf %15, %17 : vector<384x128xf32>
    %cst_15 = arith.constant 0.000000e+00 : f32
    %19 = vector.broadcast %cst_15 : f32 to vector<384x128xf32>
    %20 = arith.maximumf %18, %19 : vector<384x128xf32>
    %21 = vector.shape_cast %20 : vector<384x128xf32> to vector<2x192x128xf32>
    %22 = arith.truncf %21 : vector<2x192x128xf32> to vector<2x192x128xbf16>
    %c0_16 = arith.constant 0 : index
    %c0_17 = arith.constant 0 : index
    %c0_18 = arith.constant 0 : index
    %23 = vector.load %arg12[%c0_16, %c0_17, %c0_18] : memref<2x192x128xbf16, #tpu.memory_space<vmem>>, vector<2x192x128xbf16>
    tpu.vector_store %arg12[%c0_16, %c0_17, %c0_18], %22 {strides = array<i32>} : memref<2x192x128xbf16, #tpu.memory_space<vmem>>, vector<2x192x128xbf16>,
    %c0_19 = arith.constant 0 : index
    %c0_20 = arith.constant 0 : index
    %c0_21 = arith.constant 0 : index
    %24 = vector.load %arg12[%c0_19, %c0_20, %c0_21] : memref<2x192x128xbf16, #tpu.memory_space<vmem>>, vector<2x128x128xbf16>
    %25 = vector.shape_cast %24 : vector<2x128x128xbf16> to vector<256x128xbf16>
    %c0_22 = arith.constant 0 : index
    %c0_23 = arith.constant 0 : index
    %c0_24 = arith.constant 0 : index
    %26 = vector.load %arg4[%c0_22, %c0_23, %c0_24] : memref<5x128x128xbf16, #tpu.memory_space<vmem>>, vector<1x128x128xbf16>
    %27 = vector.shape_cast %26 : vector<1x128x128xbf16> to vector<128x128xbf16>
    %cst_25 = arith.constant dense<0.000000e+00> : vector<256x128xf32>
    %28 = tpu.matmul %25, %27, %cst_25 {dimension_numbers = #tpu.dot_dimension_numbers<[1], [0], [0], [1], [0, 0, 1, 1], [], []>} : vector<256x128xbf16>, vector<128x128xbf16>, vector<256x128xf32> -> vector<256x128xf32>
    %29 = vector.shape_cast %28 : vector<256x128xf32> to vector<16x16x128xf32>
    %c0_26 = arith.constant 0 : index
    %c0_27 = arith.constant 0 : index
    %c0_28 = arith.constant 0 : index
    %30 = vector.load %arg13[%c0_26, %c0_27, %c0_28] : memref<16x16x128xf32, #tpu.memory_space<vmem>>, vector<16x16x128xf32>
    tpu.vector_store %arg13[%c0_26, %c0_27, %c0_28], %29 {strides = array<i32>} : memref<16x16x128xf32, #tpu.memory_space<vmem>>, vector<16x16x128xf32>,
    %c0_29 = arith.constant 0 : index
    %c16 = arith.constant 16 : index
    %c0_30 = arith.constant 0 : index
    %31 = vector.load %arg12[%c0_29, %c16, %c0_30] : memref<2x192x128xbf16, #tpu.memory_space<vmem>>, vector<2x128x128xbf16>
    %32 = vector.shape_cast %31 : vector<2x128x128xbf16> to vector<256x128xbf16>
    %c1 = arith.constant 1 : index
    %c0_31 = arith.constant 0 : index
    %c0_32 = arith.constant 0 : index
    %33 = vector.load %arg4[%c1, %c0_31, %c0_32] : memref<5x128x128xbf16, #tpu.memory_space<vmem>>, vector<1x128x128xbf16>
    %34 = vector.shape_cast %33 : vector<1x128x128xbf16> to vector<128x128xbf16>
    %cst_33 = arith.constant dense<0.000000e+00> : vector<256x128xf32>
    %35 = tpu.matmul %32, %34, %cst_33 {dimension_numbers = #tpu.dot_dimension_numbers<[1], [0], [0], [1], [0, 0, 1, 1], [], []>} : vector<256x128xbf16>, vector<128x128xbf16>, vector<256x128xf32> -> vector<256x128xf32>
    %36 = vector.shape_cast %35 : vector<256x128xf32> to vector<16x16x128xf32>
    %c0_34 = arith.constant 0 : index
    %c0_35 = arith.constant 0 : index
    %c0_36 = arith.constant 0 : index
    %37 = vector.load %arg13[%c0_34, %c0_35, %c0_36] : memref<16x16x128xf32, #tpu.memory_space<vmem>>, vector<16x16x128xf32>
    %38 = arith.addf %37, %36 : vector<16x16x128xf32>
    %c0_37 = arith.constant 0 : index
    %c0_38 = arith.constant 0 : index
    %c0_39 = arith.constant 0 : index
    %39 = vector.load %arg13[%c0_37, %c0_38, %c0_39] : memref<16x16x128xf32, #tpu.memory_space<vmem>>, vector<16x16x128xf32>
    tpu.vector_store %arg13[%c0_37, %c0_38, %c0_39], %38 {strides = array<i32>} : memref<16x16x128xf32, #tpu.memory_space<vmem>>, vector<16x16x128xf32>,
    %c0_40 = arith.constant 0 : index
    %c32 = arith.constant 32 : index
    %c0_41 = arith.constant 0 : index
    %40 = vector.load %arg12[%c0_40, %c32, %c0_41] : memref<2x192x128xbf16, #tpu.memory_space<vmem>>, vector<2x128x128xbf16>
    %41 = vector.shape_cast %40 : vector<2x128x128xbf16> to vector<256x128xbf16>
    %c2 = arith.constant 2 : index
    %c0_42 = arith.constant 0 : index
    %c0_43 = arith.constant 0 : index
    %42 = vector.load %arg4[%c2, %c0_42, %c0_43] : memref<5x128x128xbf16, #tpu.memory_space<vmem>>, vector<1x128x128xbf16>
    %43 = vector.shape_cast %42 : vector<1x128x128xbf16> to vector<128x128xbf16>
    %cst_44 = arith.constant dense<0.000000e+00> : vector<256x128xf32>
    %44 = tpu.matmul %41, %43, %cst_44 {dimension_numbers = #tpu.dot_dimension_numbers<[1], [0], [0], [1], [0, 0, 1, 1], [], []>} : vector<256x128xbf16>, vector<128x128xbf16>, vector<256x128xf32> -> vector<256x128xf32>
    %45 = vector.shape_cast %44 : vector<256x128xf32> to vector<16x16x128xf32>
    %c0_45 = arith.constant 0 : index
    %c0_46 = arith.constant 0 : index
    %c0_47 = arith.constant 0 : index
    %46 = vector.load %arg13[%c0_45, %c0_46, %c0_47] : memref<16x16x128xf32, #tpu.memory_space<vmem>>, vector<16x16x128xf32>
    %47 = arith.addf %46, %45 : vector<16x16x128xf32>
    %c0_48 = arith.constant 0 : index
    %c0_49 = arith.constant 0 : index
    %c0_50 = arith.constant 0 : index
    %48 = vector.load %arg13[%c0_48, %c0_49, %c0_50] : memref<16x16x128xf32, #tpu.memory_space<vmem>>, vector<16x16x128xf32>
    tpu.vector_store %arg13[%c0_48, %c0_49, %c0_50], %47 {strides = array<i32>} : memref<16x16x128xf32, #tpu.memory_space<vmem>>, vector<16x16x128xf32>,
    %c0_51 = arith.constant 0 : index
    %c48 = arith.constant 48 : index
    %c0_52 = arith.constant 0 : index
    %49 = vector.load %arg12[%c0_51, %c48, %c0_52] : memref<2x192x128xbf16, #tpu.memory_space<vmem>>, vector<2x128x128xbf16>
    %50 = vector.shape_cast %49 : vector<2x128x128xbf16> to vector<256x128xbf16>
    %c3 = arith.constant 3 : index
    %c0_53 = arith.constant 0 : index
    %c0_54 = arith.constant 0 : index
    %51 = vector.load %arg4[%c3, %c0_53, %c0_54] : memref<5x128x128xbf16, #tpu.memory_space<vmem>>, vector<1x128x128xbf16>
    %52 = vector.shape_cast %51 : vector<1x128x128xbf16> to vector<128x128xbf16>
    %cst_55 = arith.constant dense<0.000000e+00> : vector<256x128xf32>
    %53 = tpu.matmul %50, %52, %cst_55 {dimension_numbers = #tpu.dot_dimension_numbers<[1], [0], [0], [1], [0, 0, 1, 1], [], []>} : vector<256x128xbf16>, vector<128x128xbf16>, vector<256x128xf32> -> vector<256x128xf32>
    %54 = vector.shape_cast %53 : vector<256x128xf32> to vector<16x16x128xf32>
    %c0_56 = arith.constant 0 : index
    %c0_57 = arith.constant 0 : index
    %c0_58 = arith.constant 0 : index
    %55 = vector.load %arg13[%c0_56, %c0_57, %c0_58] : memref<16x16x128xf32, #tpu.memory_space<vmem>>, vector<16x16x128xf32>
    %56 = arith.addf %55, %54 : vector<16x16x128xf32>
    %c0_59 = arith.constant 0 : index
    %c0_60 = arith.constant 0 : index
    %c0_61 = arith.constant 0 : index
    %57 = vector.load %arg13[%c0_59, %c0_60, %c0_61] : memref<16x16x128xf32, #tpu.memory_space<vmem>>, vector<16x16x128xf32>
    tpu.vector_store %arg13[%c0_59, %c0_60, %c0_61], %56 {strides = array<i32>} : memref<16x16x128xf32, #tpu.memory_space<vmem>>, vector<16x16x128xf32>,
    %c0_62 = arith.constant 0 : index
    %c64 = arith.constant 64 : index
    %c0_63 = arith.constant 0 : index
    %58 = vector.load %arg12[%c0_62, %c64, %c0_63] : memref<2x192x128xbf16, #tpu.memory_space<vmem>>, vector<2x128x128xbf16>
    %59 = vector.shape_cast %58 : vector<2x128x128xbf16> to vector<256x128xbf16>
    %c4 = arith.constant 4 : index
    %c0_64 = arith.constant 0 : index
    %c0_65 = arith.constant 0 : index
    %60 = vector.load %arg4[%c4, %c0_64, %c0_65] : memref<5x128x128xbf16, #tpu.memory_space<vmem>>, vector<1x128x128xbf16>
    %61 = vector.shape_cast %60 : vector<1x128x128xbf16> to vector<128x128xbf16>
    %cst_66 = arith.constant dense<0.000000e+00> : vector<256x128xf32>
    %62 = tpu.matmul %59, %61, %cst_66 {dimension_numbers = #tpu.dot_dimension_numbers<[1], [0], [0], [1], [0, 0, 1, 1], [], []>} : vector<256x128xbf16>, vector<128x128xbf16>, vector<256x128xf32> -> vector<256x128xf32>
    %63 = vector.shape_cast %62 : vector<256x128xf32> to vector<16x16x128xf32>
    %c0_67 = arith.constant 0 : index
    %c0_68 = arith.constant 0 : index
    %c0_69 = arith.constant 0 : index
    %64 = vector.load %arg13[%c0_67, %c0_68, %c0_69] : memref<16x16x128xf32, #tpu.memory_space<vmem>>, vector<16x16x128xf32>
    %65 = arith.addf %64, %63 : vector<16x16x128xf32>
    %c0_70 = arith.constant 0 : index
    %c0_71 = arith.constant 0 : index
    %c0_72 = arith.constant 0 : index
    %66 = vector.load %arg13[%c0_70, %c0_71, %c0_72] : memref<16x16x128xf32, #tpu.memory_space<vmem>>, vector<16x16x128xf32>
    tpu.vector_store %arg13[%c0_70, %c0_71, %c0_72], %65 {strides = array<i32>} : memref<16x16x128xf32, #tpu.memory_space<vmem>>, vector<16x16x128xf32>,
    %c0_73 = arith.constant 0 : index
    %c0_74 = arith.constant 0 : index
    %c0_75 = arith.constant 0 : index
    %67 = vector.load %arg13[%c0_73, %c0_74, %c0_75] : memref<16x16x128xf32, #tpu.memory_space<vmem>>, vector<16x8x128xf32>
    %68 = vector.shape_cast %67 : vector<16x8x128xf32> to vector<128x128xf32>
    %69 = arith.truncf %68 : vector<128x128xf32> to vector<128x128xbf16>
    %c0_76 = arith.constant 0 : index
    %c0_77 = arith.constant 0 : index
    %c0_78 = arith.constant 0 : index
    %70 = vector.load %arg6[%c0_76, %c0_77, %c0_78] : memref<5x128x128xbf16, #tpu.memory_space<vmem>>, vector<1x128x128xbf16>
    %71 = vector.shape_cast %70 : vector<1x128x128xbf16> to vector<128x128xbf16>
    %cst_79 = arith.constant dense<0.000000e+00> : vector<128x128xf32>
    %72 = tpu.matmul %69, %71, %cst_79 {dimension_numbers = #tpu.dot_dimension_numbers<[1], [0], [0], [1], [0, 0, 1, 1], [], []>} : vector<128x128xbf16>, vector<128x128xbf16>, vector<128x128xf32> -> vector<128x128xf32>
    %c0_80 = arith.constant 0 : index
    %c1_81 = arith.constant 1 : index
    %c0_82 = arith.constant 0 : index
    %73 = vector.load %arg13[%c0_80, %c1_81, %c0_82] : memref<16x16x128xf32, #tpu.memory_space<vmem>>, vector<16x8x128xf32>
    %74 = vector.shape_cast %73 : vector<16x8x128xf32> to vector<128x128xf32>
    %75 = arith.truncf %74 : vector<128x128xf32> to vector<128x128xbf16>
    %c1_83 = arith.constant 1 : index
    %c0_84 = arith.constant 0 : index
    %c0_85 = arith.constant 0 : index
    %76 = vector.load %arg6[%c1_83, %c0_84, %c0_85] : memref<5x128x128xbf16, #tpu.memory_space<vmem>>, vector<1x128x128xbf16>
    %77 = vector.shape_cast %76 : vector<1x128x128xbf16> to vector<128x128xbf16>
    %cst_86 = arith.constant dense<0.000000e+00> : vector<128x128xf32>
    %78 = tpu.matmul %75, %77, %cst_86 {dimension_numbers = #tpu.dot_dimension_numbers<[1], [0], [0], [1], [0, 0, 1, 1], [], []>} : vector<128x128xbf16>, vector<128x128xbf16>, vector<128x128xf32> -> vector<128x128xf32>
    %79 = arith.addf %72, %78 : vector<128x128xf32>
    %c0_87 = arith.constant 0 : index
    %c2_88 = arith.constant 2 : index
    %c0_89 = arith.constant 0 : index
    %80 = vector.load %arg13[%c0_87, %c2_88, %c0_89] : memref<16x16x128xf32, #tpu.memory_space<vmem>>, vector<16x8x128xf32>
    %81 = vector.shape_cast %80 : vector<16x8x128xf32> to vector<128x128xf32>
    %82 = arith.truncf %81 : vector<128x128xf32> to vector<128x128xbf16>
    %c2_90 = arith.constant 2 : index
    %c0_91 = arith.constant 0 : index
    %c0_92 = arith.constant 0 : index
    %83 = vector.load %arg6[%c2_90, %c0_91, %c0_92] : memref<5x128x128xbf16, #tpu.memory_space<vmem>>, vector<1x128x128xbf16>
    %84 = vector.shape_cast %83 : vector<1x128x128xbf16> to vector<128x128xbf16>
    %cst_93 = arith.constant dense<0.000000e+00> : vector<128x128xf32>
    %85 = tpu.matmul %82, %84, %cst_93 {dimension_numbers = #tpu.dot_dimension_numbers<[1], [0], [0], [1], [0, 0, 1, 1], [], []>} : vector<128x128xbf16>, vector<128x128xbf16>, vector<128x128xf32> -> vector<128x128xf32>
    %86 = arith.addf %79, %85 : vector<128x128xf32>
    %c0_94 = arith.constant 0 : index
    %c3_95 = arith.constant 3 : index
    %c0_96 = arith.constant 0 : index
    %87 = vector.load %arg13[%c0_94, %c3_95, %c0_96] : memref<16x16x128xf32, #tpu.memory_space<vmem>>, vector<16x8x128xf32>
    %88 = vector.shape_cast %87 : vector<16x8x128xf32> to vector<128x128xf32>
    %89 = arith.truncf %88 : vector<128x128xf32> to vector<128x128xbf16>
    %c3_97 = arith.constant 3 : index
    %c0_98 = arith.constant 0 : index
    %c0_99 = arith.constant 0 : index
    %90 = vector.load %arg6[%c3_97, %c0_98, %c0_99] : memref<5x128x128xbf16, #tpu.memory_space<vmem>>, vector<1x128x128xbf16>
    %91 = vector.shape_cast %90 : vector<1x128x128xbf16> to vector<128x128xbf16>
    %cst_100 = arith.constant dense<0.000000e+00> : vector<128x128xf32>
    %92 = tpu.matmul %89, %91, %cst_100 {dimension_numbers = #tpu.dot_dimension_numbers<[1], [0], [0], [1], [0, 0, 1, 1], [], []>} : vector<128x128xbf16>, vector<128x128xbf16>, vector<128x128xf32> -> vector<128x128xf32>
    %93 = arith.addf %86, %92 : vector<128x128xf32>
    %c0_101 = arith.constant 0 : index
    %c4_102 = arith.constant 4 : index
    %c0_103 = arith.constant 0 : index
    %94 = vector.load %arg13[%c0_101, %c4_102, %c0_103] : memref<16x16x128xf32, #tpu.memory_space<vmem>>, vector<16x8x128xf32>
    %95 = vector.shape_cast %94 : vector<16x8x128xf32> to vector<128x128xf32>
    %96 = arith.truncf %95 : vector<128x128xf32> to vector<128x128xbf16>
    %c4_104 = arith.constant 4 : index
    %c0_105 = arith.constant 0 : index
    %c0_106 = arith.constant 0 : index
    %97 = vector.load %arg6[%c4_104, %c0_105, %c0_106] : memref<5x128x128xbf16, #tpu.memory_space<vmem>>, vector<1x128x128xbf16>
    %98 = vector.shape_cast %97 : vector<1x128x128xbf16> to vector<128x128xbf16>
    %cst_107 = arith.constant dense<0.000000e+00> : vector<128x128xf32>
    %99 = tpu.matmul %96, %98, %cst_107 {dimension_numbers = #tpu.dot_dimension_numbers<[1], [0], [0], [1], [0, 0, 1, 1], [], []>} : vector<128x128xbf16>, vector<128x128xbf16>, vector<128x128xf32> -> vector<128x128xf32>
    %100 = arith.addf %93, %99 : vector<128x128xf32>
    %c0_108 = arith.constant 0 : index
    %c0_109 = arith.constant 0 : index
    %101 = vector.load %arg5[%c0_108, %c0_109] : memref<1x128xf32, #tpu.memory_space<vmem>>, vector<1x128xf32>
    %102 = vector.broadcast %101 : vector<1x128xf32> to vector<128x128xf32>
    %103 = arith.addf %100, %102 : vector<128x128xf32>
    %cst_110 = arith.constant 0.000000e+00 : f32
    %104 = vector.broadcast %cst_110 : f32 to vector<128x128xf32>
    %105 = arith.maximumf %103, %104 : vector<128x128xf32>
    %106 = vector.shape_cast %105 : vector<128x128xf32> to vector<8x2x8x128xf32>
    %107 = vector.extract_strided_slice %106 {offsets = [0, 0, 0, 0], sizes = [8, 1, 8, 128], strides = [1, 1, 1, 1]} : vector<8x2x8x128xf32> to vector<8x1x8x128xf32>
    %108 = vector.shape_cast %107 : vector<8x1x8x128xf32> to vector<8x8x128xf32>
    %109 = vector.extract_strided_slice %106 {offsets = [0, 1, 0, 0], sizes = [8, 1, 8, 128], strides = [1, 1, 1, 1]} : vector<8x2x8x128xf32> to vector<8x1x8x128xf32>
    %110 = vector.shape_cast %109 : vector<8x1x8x128xf32> to vector<8x8x128xf32>
    %111 = arith.maximumf %108, %110 : vector<8x8x128xf32>
    %112 = vector.shape_cast %111 : vector<8x8x128xf32> to vector<2x32x128xf32>
    %c0_111 = arith.constant 0 : index
    %c0_112 = arith.constant 0 : index
    %c0_113 = arith.constant 0 : index
    %113 = vector.load %arg14[%c0_111, %c0_112, %c0_113] : memref<2x32x128xf32, #tpu.memory_space<vmem>>, vector<2x32x128xf32>
    tpu.vector_store %arg14[%c0_111, %c0_112, %c0_113], %112 {strides = array<i32>} : memref<2x32x128xf32, #tpu.memory_space<vmem>>, vector<2x32x128xf32>,
    %cst_114 = arith.constant 0.000000e+00 : f32
    %114 = vector.broadcast %cst_114 : f32 to vector<2x128xf32>
    %c0_115 = arith.constant 0 : index
    %c0_116 = arith.constant 0 : index
    %115 = vector.load %arg8[%c0_115, %c0_116] : memref<1x128xf32, #tpu.memory_space<vmem>>, vector<1x128xf32>
    %116 = vector.broadcast %115 : vector<1x128xf32> to vector<2x128xf32>
    %117 = arith.addf %114, %116 : vector<2x128xf32>
    %c0_117 = arith.constant 0 : index
    %c0_118 = arith.constant 0 : index
    %c0_119 = arith.constant 0 : index
    %118 = vector.load %arg14[%c0_117, %c0_118, %c0_119] : memref<2x32x128xf32, #tpu.memory_space<vmem>>, vector<2x1x128xf32>
    %119 = vector.shape_cast %118 : vector<2x1x128xf32> to vector<2x128xf32>
    %c0_120 = arith.constant 0 : index
    %c1_121 = arith.constant 1 : index
    %c0_122 = arith.constant 0 : index
    %120 = vector.load %arg14[%c0_120, %c1_121, %c0_122] : memref<2x32x128xf32, #tpu.memory_space<vmem>>, vector<2x1x128xf32>
    %121 = vector.shape_cast %120 : vector<2x1x128xf32> to vector<2x128xf32>
    %122 = arith.maximumf %119, %121 : vector<2x128xf32>
    %123 = arith.truncf %122 : vector<2x128xf32> to vector<2x128xbf16>
    %c0_123 = arith.constant 0 : index
    %c0_124 = arith.constant 0 : index
    %c0_125 = arith.constant 0 : index
    %124 = vector.load %arg7[%c0_123, %c0_124, %c0_125] : memref<16x128x128xbf16, #tpu.memory_space<vmem>>, vector<1x128x128xbf16>
    %125 = vector.shape_cast %124 : vector<1x128x128xbf16> to vector<128x128xbf16>
    %cst_126 = arith.constant dense<0.000000e+00> : vector<2x128xf32>
    %126 = tpu.matmul %123, %125, %cst_126 {dimension_numbers = #tpu.dot_dimension_numbers<[1], [0], [0], [1], [0, 0, 1, 1], [], []>} : vector<2x128xbf16>, vector<128x128xbf16>, vector<2x128xf32> -> vector<2x128xf32>
    %127 = arith.addf %117, %126 : vector<2x128xf32>
    %c0_127 = arith.constant 0 : index
    %c2_128 = arith.constant 2 : index
    %c0_129 = arith.constant 0 : index
    %128 = vector.load %arg14[%c0_127, %c2_128, %c0_129] : memref<2x32x128xf32, #tpu.memory_space<vmem>>, vector<2x1x128xf32>
    %129 = vector.shape_cast %128 : vector<2x1x128xf32> to vector<2x128xf32>
    %c0_130 = arith.constant 0 : index
    %c3_131 = arith.constant 3 : index
    %c0_132 = arith.constant 0 : index
    %130 = vector.load %arg14[%c0_130, %c3_131, %c0_132] : memref<2x32x128xf32, #tpu.memory_space<vmem>>, vector<2x1x128xf32>
    %131 = vector.shape_cast %130 : vector<2x1x128xf32> to vector<2x128xf32>
    %132 = arith.maximumf %129, %131 : vector<2x128xf32>
    %133 = arith.truncf %132 : vector<2x128xf32> to vector<2x128xbf16>
    %c1_133 = arith.constant 1 : index
    %c0_134 = arith.constant 0 : index
    %c0_135 = arith.constant 0 : index
    %134 = vector.load %arg7[%c1_133, %c0_134, %c0_135] : memref<16x128x128xbf16, #tpu.memory_space<vmem>>, vector<1x128x128xbf16>
    %135 = vector.shape_cast %134 : vector<1x128x128xbf16> to vector<128x128xbf16>
    %cst_136 = arith.constant dense<0.000000e+00> : vector<2x128xf32>
    %136 = tpu.matmul %133, %135, %cst_136 {dimension_numbers = #tpu.dot_dimension_numbers<[1], [0], [0], [1], [0, 0, 1, 1], [], []>} : vector<2x128xbf16>, vector<128x128xbf16>, vector<2x128xf32> -> vector<2x128xf32>
    %137 = arith.addf %127, %136 : vector<2x128xf32>
    %c0_137 = arith.constant 0 : index
    %c4_138 = arith.constant 4 : index
    %c0_139 = arith.constant 0 : index
    %138 = vector.load %arg14[%c0_137, %c4_138, %c0_139] : memref<2x32x128xf32, #tpu.memory_space<vmem>>, vector<2x1x128xf32>
    %139 = vector.shape_cast %138 : vector<2x1x128xf32> to vector<2x128xf32>
    %c0_140 = arith.constant 0 : index
    %c5 = arith.constant 5 : index
    %c0_141 = arith.constant 0 : index
    %140 = vector.load %arg14[%c0_140, %c5, %c0_141] : memref<2x32x128xf32, #tpu.memory_space<vmem>>, vector<2x1x128xf32>
    %141 = vector.shape_cast %140 : vector<2x1x128xf32> to vector<2x128xf32>
    %142 = arith.maximumf %139, %141 : vector<2x128xf32>
    %143 = arith.truncf %142 : vector<2x128xf32> to vector<2x128xbf16>
    %c2_142 = arith.constant 2 : index
    %c0_143 = arith.constant 0 : index
    %c0_144 = arith.constant 0 : index
    %144 = vector.load %arg7[%c2_142, %c0_143, %c0_144] : memref<16x128x128xbf16, #tpu.memory_space<vmem>>, vector<1x128x128xbf16>
    %145 = vector.shape_cast %144 : vector<1x128x128xbf16> to vector<128x128xbf16>
    %cst_145 = arith.constant dense<0.000000e+00> : vector<2x128xf32>
    %146 = tpu.matmul %143, %145, %cst_145 {dimension_numbers = #tpu.dot_dimension_numbers<[1], [0], [0], [1], [0, 0, 1, 1], [], []>} : vector<2x128xbf16>, vector<128x128xbf16>, vector<2x128xf32> -> vector<2x128xf32>
    %147 = arith.addf %137, %146 : vector<2x128xf32>
    %c0_146 = arith.constant 0 : index
    %c6 = arith.constant 6 : index
    %c0_147 = arith.constant 0 : index
    %148 = vector.load %arg14[%c0_146, %c6, %c0_147] : memref<2x32x128xf32, #tpu.memory_space<vmem>>, vector<2x1x128xf32>
    %149 = vector.shape_cast %148 : vector<2x1x128xf32> to vector<2x128xf32>
    %c0_148 = arith.constant 0 : index
    %c7 = arith.constant 7 : index
    %c0_149 = arith.constant 0 : index
    %150 = vector.load %arg14[%c0_148, %c7, %c0_149] : memref<2x32x128xf32, #tpu.memory_space<vmem>>, vector<2x1x128xf32>
    %151 = vector.shape_cast %150 : vector<2x1x128xf32> to vector<2x128xf32>
    %152 = arith.maximumf %149, %151 : vector<2x128xf32>
    %153 = arith.truncf %152 : vector<2x128xf32> to vector<2x128xbf16>
    %c3_150 = arith.constant 3 : index
    %c0_151 = arith.constant 0 : index
    %c0_152 = arith.constant 0 : index
    %154 = vector.load %arg7[%c3_150, %c0_151, %c0_152] : memref<16x128x128xbf16, #tpu.memory_space<vmem>>, vector<1x128x128xbf16>
    %155 = vector.shape_cast %154 : vector<1x128x128xbf16> to vector<128x128xbf16>
    %cst_153 = arith.constant dense<0.000000e+00> : vector<2x128xf32>
    %156 = tpu.matmul %153, %155, %cst_153 {dimension_numbers = #tpu.dot_dimension_numbers<[1], [0], [0], [1], [0, 0, 1, 1], [], []>} : vector<2x128xbf16>, vector<128x128xbf16>, vector<2x128xf32> -> vector<2x128xf32>
    %157 = arith.addf %147, %156 : vector<2x128xf32>
    %c0_154 = arith.constant 0 : index
    %c8 = arith.constant 8 : index
    %c0_155 = arith.constant 0 : index
    %158 = vector.load %arg14[%c0_154, %c8, %c0_155] : memref<2x32x128xf32, #tpu.memory_space<vmem>>, vector<2x1x128xf32>
    %159 = vector.shape_cast %158 : vector<2x1x128xf32> to vector<2x128xf32>
    %c0_156 = arith.constant 0 : index
    %c9 = arith.constant 9 : index
    %c0_157 = arith.constant 0 : index
    %160 = vector.load %arg14[%c0_156, %c9, %c0_157] : memref<2x32x128xf32, #tpu.memory_space<vmem>>, vector<2x1x128xf32>
    %161 = vector.shape_cast %160 : vector<2x1x128xf32> to vector<2x128xf32>
    %162 = arith.maximumf %159, %161 : vector<2x128xf32>
    %163 = arith.truncf %162 : vector<2x128xf32> to vector<2x128xbf16>
    %c4_158 = arith.constant 4 : index
    %c0_159 = arith.constant 0 : index
    %c0_160 = arith.constant 0 : index
    %164 = vector.load %arg7[%c4_158, %c0_159, %c0_160] : memref<16x128x128xbf16, #tpu.memory_space<vmem>>, vector<1x128x128xbf16>
    %165 = vector.shape_cast %164 : vector<1x128x128xbf16> to vector<128x128xbf16>
    %cst_161 = arith.constant dense<0.000000e+00> : vector<2x128xf32>
    %166 = tpu.matmul %163, %165, %cst_161 {dimension_numbers = #tpu.dot_dimension_numbers<[1], [0], [0], [1], [0, 0, 1, 1], [], []>} : vector<2x128xbf16>, vector<128x128xbf16>, vector<2x128xf32> -> vector<2x128xf32>
    %167 = arith.addf %157, %166 : vector<2x128xf32>
    %c0_162 = arith.constant 0 : index
    %c10 = arith.constant 10 : index
    %c0_163 = arith.constant 0 : index
    %168 = vector.load %arg14[%c0_162, %c10, %c0_163] : memref<2x32x128xf32, #tpu.memory_space<vmem>>, vector<2x1x128xf32>
    %169 = vector.shape_cast %168 : vector<2x1x128xf32> to vector<2x128xf32>
    %c0_164 = arith.constant 0 : index
    %c11 = arith.constant 11 : index
    %c0_165 = arith.constant 0 : index
    %170 = vector.load %arg14[%c0_164, %c11, %c0_165] : memref<2x32x128xf32, #tpu.memory_space<vmem>>, vector<2x1x128xf32>
    %171 = vector.shape_cast %170 : vector<2x1x128xf32> to vector<2x128xf32>
    %172 = arith.maximumf %169, %171 : vector<2x128xf32>
    %173 = arith.truncf %172 : vector<2x128xf32> to vector<2x128xbf16>
    %c5_166 = arith.constant 5 : index
    %c0_167 = arith.constant 0 : index
    %c0_168 = arith.constant 0 : index
    %174 = vector.load %arg7[%c5_166, %c0_167, %c0_168] : memref<16x128x128xbf16, #tpu.memory_space<vmem>>, vector<1x128x128xbf16>
    %175 = vector.shape_cast %174 : vector<1x128x128xbf16> to vector<128x128xbf16>
    %cst_169 = arith.constant dense<0.000000e+00> : vector<2x128xf32>
    %176 = tpu.matmul %173, %175, %cst_169 {dimension_numbers = #tpu.dot_dimension_numbers<[1], [0], [0], [1], [0, 0, 1, 1], [], []>} : vector<2x128xbf16>, vector<128x128xbf16>, vector<2x128xf32> -> vector<2x128xf32>
    %177 = arith.addf %167, %176 : vector<2x128xf32>
    %c0_170 = arith.constant 0 : index
    %c12 = arith.constant 12 : index
    %c0_171 = arith.constant 0 : index
    %178 = vector.load %arg14[%c0_170, %c12, %c0_171] : memref<2x32x128xf32, #tpu.memory_space<vmem>>, vector<2x1x128xf32>
    %179 = vector.shape_cast %178 : vector<2x1x128xf32> to vector<2x128xf32>
    %c0_172 = arith.constant 0 : index
    %c13 = arith.constant 13 : index
    %c0_173 = arith.constant 0 : index
    %180 = vector.load %arg14[%c0_172, %c13, %c0_173] : memref<2x32x128xf32, #tpu.memory_space<vmem>>, vector<2x1x128xf32>
    %181 = vector.shape_cast %180 : vector<2x1x128xf32> to vector<2x128xf32>
    %182 = arith.maximumf %179, %181 : vector<2x128xf32>
    %183 = arith.truncf %182 : vector<2x128xf32> to vector<2x128xbf16>
    %c6_174 = arith.constant 6 : index
    %c0_175 = arith.constant 0 : index
    %c0_176 = arith.constant 0 : index
    %184 = vector.load %arg7[%c6_174, %c0_175, %c0_176] : memref<16x128x128xbf16, #tpu.memory_space<vmem>>, vector<1x128x128xbf16>
    %185 = vector.shape_cast %184 : vector<1x128x128xbf16> to vector<128x128xbf16>
    %cst_177 = arith.constant dense<0.000000e+00> : vector<2x128xf32>
    %186 = tpu.matmul %183, %185, %cst_177 {dimension_numbers = #tpu.dot_dimension_numbers<[1], [0], [0], [1], [0, 0, 1, 1], [], []>} : vector<2x128xbf16>, vector<128x128xbf16>, vector<2x128xf32> -> vector<2x128xf32>
    %187 = arith.addf %177, %186 : vector<2x128xf32>
    %c0_178 = arith.constant 0 : index
    %c14 = arith.constant 14 : index
    %c0_179 = arith.constant 0 : index
    %188 = vector.load %arg14[%c0_178, %c14, %c0_179] : memref<2x32x128xf32, #tpu.memory_space<vmem>>, vector<2x1x128xf32>
    %189 = vector.shape_cast %188 : vector<2x1x128xf32> to vector<2x128xf32>
    %c0_180 = arith.constant 0 : index
    %c15 = arith.constant 15 : index
    %c0_181 = arith.constant 0 : index
    %190 = vector.load %arg14[%c0_180, %c15, %c0_181] : memref<2x32x128xf32, #tpu.memory_space<vmem>>, vector<2x1x128xf32>
    %191 = vector.shape_cast %190 : vector<2x1x128xf32> to vector<2x128xf32>
    %192 = arith.maximumf %189, %191 : vector<2x128xf32>
    %193 = arith.truncf %192 : vector<2x128xf32> to vector<2x128xbf16>
    %c7_182 = arith.constant 7 : index
    %c0_183 = arith.constant 0 : index
    %c0_184 = arith.constant 0 : index
    %194 = vector.load %arg7[%c7_182, %c0_183, %c0_184] : memref<16x128x128xbf16, #tpu.memory_space<vmem>>, vector<1x128x128xbf16>
    %195 = vector.shape_cast %194 : vector<1x128x128xbf16> to vector<128x128xbf16>
    %cst_185 = arith.constant dense<0.000000e+00> : vector<2x128xf32>
    %196 = tpu.matmul %193, %195, %cst_185 {dimension_numbers = #tpu.dot_dimension_numbers<[1], [0], [0], [1], [0, 0, 1, 1], [], []>} : vector<2x128xbf16>, vector<128x128xbf16>, vector<2x128xf32> -> vector<2x128xf32>
    %197 = arith.addf %187, %196 : vector<2x128xf32>
    %c0_186 = arith.constant 0 : index
    %c16_187 = arith.constant 16 : index
    %c0_188 = arith.constant 0 : index
    %198 = vector.load %arg14[%c0_186, %c16_187, %c0_188] : memref<2x32x128xf32, #tpu.memory_space<vmem>>, vector<2x1x128xf32>
    %199 = vector.shape_cast %198 : vector<2x1x128xf32> to vector<2x128xf32>
    %c0_189 = arith.constant 0 : index
    %c17 = arith.constant 17 : index
    %c0_190 = arith.constant 0 : index
    %200 = vector.load %arg14[%c0_189, %c17, %c0_190] : memref<2x32x128xf32, #tpu.memory_space<vmem>>, vector<2x1x128xf32>
    %201 = vector.shape_cast %200 : vector<2x1x128xf32> to vector<2x128xf32>
    %202 = arith.maximumf %199, %201 : vector<2x128xf32>
    %203 = arith.truncf %202 : vector<2x128xf32> to vector<2x128xbf16>
    %c8_191 = arith.constant 8 : index
    %c0_192 = arith.constant 0 : index
    %c0_193 = arith.constant 0 : index
    %204 = vector.load %arg7[%c8_191, %c0_192, %c0_193] : memref<16x128x128xbf16, #tpu.memory_space<vmem>>, vector<1x128x128xbf16>
    %205 = vector.shape_cast %204 : vector<1x128x128xbf16> to vector<128x128xbf16>
    %cst_194 = arith.constant dense<0.000000e+00> : vector<2x128xf32>
    %206 = tpu.matmul %203, %205, %cst_194 {dimension_numbers = #tpu.dot_dimension_numbers<[1], [0], [0], [1], [0, 0, 1, 1], [], []>} : vector<2x128xbf16>, vector<128x128xbf16>, vector<2x128xf32> -> vector<2x128xf32>
    %207 = arith.addf %197, %206 : vector<2x128xf32>
    %c0_195 = arith.constant 0 : index
    %c18 = arith.constant 18 : index
    %c0_196 = arith.constant 0 : index
    %208 = vector.load %arg14[%c0_195, %c18, %c0_196] : memref<2x32x128xf32, #tpu.memory_space<vmem>>, vector<2x1x128xf32>
    %209 = vector.shape_cast %208 : vector<2x1x128xf32> to vector<2x128xf32>
    %c0_197 = arith.constant 0 : index
    %c19 = arith.constant 19 : index
    %c0_198 = arith.constant 0 : index
    %210 = vector.load %arg14[%c0_197, %c19, %c0_198] : memref<2x32x128xf32, #tpu.memory_space<vmem>>, vector<2x1x128xf32>
    %211 = vector.shape_cast %210 : vector<2x1x128xf32> to vector<2x128xf32>
    %212 = arith.maximumf %209, %211 : vector<2x128xf32>
    %213 = arith.truncf %212 : vector<2x128xf32> to vector<2x128xbf16>
    %c9_199 = arith.constant 9 : index
    %c0_200 = arith.constant 0 : index
    %c0_201 = arith.constant 0 : index
    %214 = vector.load %arg7[%c9_199, %c0_200, %c0_201] : memref<16x128x128xbf16, #tpu.memory_space<vmem>>, vector<1x128x128xbf16>
    %215 = vector.shape_cast %214 : vector<1x128x128xbf16> to vector<128x128xbf16>
    %cst_202 = arith.constant dense<0.000000e+00> : vector<2x128xf32>
    %216 = tpu.matmul %213, %215, %cst_202 {dimension_numbers = #tpu.dot_dimension_numbers<[1], [0], [0], [1], [0, 0, 1, 1], [], []>} : vector<2x128xbf16>, vector<128x128xbf16>, vector<2x128xf32> -> vector<2x128xf32>
    %217 = arith.addf %207, %216 : vector<2x128xf32>
    %c0_203 = arith.constant 0 : index
    %c20 = arith.constant 20 : index
    %c0_204 = arith.constant 0 : index
    %218 = vector.load %arg14[%c0_203, %c20, %c0_204] : memref<2x32x128xf32, #tpu.memory_space<vmem>>, vector<2x1x128xf32>
    %219 = vector.shape_cast %218 : vector<2x1x128xf32> to vector<2x128xf32>
    %c0_205 = arith.constant 0 : index
    %c21 = arith.constant 21 : index
    %c0_206 = arith.constant 0 : index
    %220 = vector.load %arg14[%c0_205, %c21, %c0_206] : memref<2x32x128xf32, #tpu.memory_space<vmem>>, vector<2x1x128xf32>
    %221 = vector.shape_cast %220 : vector<2x1x128xf32> to vector<2x128xf32>
    %222 = arith.maximumf %219, %221 : vector<2x128xf32>
    %223 = arith.truncf %222 : vector<2x128xf32> to vector<2x128xbf16>
    %c10_207 = arith.constant 10 : index
    %c0_208 = arith.constant 0 : index
    %c0_209 = arith.constant 0 : index
    %224 = vector.load %arg7[%c10_207, %c0_208, %c0_209] : memref<16x128x128xbf16, #tpu.memory_space<vmem>>, vector<1x128x128xbf16>
    %225 = vector.shape_cast %224 : vector<1x128x128xbf16> to vector<128x128xbf16>
    %cst_210 = arith.constant dense<0.000000e+00> : vector<2x128xf32>
    %226 = tpu.matmul %223, %225, %cst_210 {dimension_numbers = #tpu.dot_dimension_numbers<[1], [0], [0], [1], [0, 0, 1, 1], [], []>} : vector<2x128xbf16>, vector<128x128xbf16>, vector<2x128xf32> -> vector<2x128xf32>
    %227 = arith.addf %217, %226 : vector<2x128xf32>
    %c0_211 = arith.constant 0 : index
    %c22 = arith.constant 22 : index
    %c0_212 = arith.constant 0 : index
    %228 = vector.load %arg14[%c0_211, %c22, %c0_212] : memref<2x32x128xf32, #tpu.memory_space<vmem>>, vector<2x1x128xf32>
    %229 = vector.shape_cast %228 : vector<2x1x128xf32> to vector<2x128xf32>
    %c0_213 = arith.constant 0 : index
    %c23 = arith.constant 23 : index
    %c0_214 = arith.constant 0 : index
    %230 = vector.load %arg14[%c0_213, %c23, %c0_214] : memref<2x32x128xf32, #tpu.memory_space<vmem>>, vector<2x1x128xf32>
    %231 = vector.shape_cast %230 : vector<2x1x128xf32> to vector<2x128xf32>
    %232 = arith.maximumf %229, %231 : vector<2x128xf32>
    %233 = arith.truncf %232 : vector<2x128xf32> to vector<2x128xbf16>
    %c11_215 = arith.constant 11 : index
    %c0_216 = arith.constant 0 : index
    %c0_217 = arith.constant 0 : index
    %234 = vector.load %arg7[%c11_215, %c0_216, %c0_217] : memref<16x128x128xbf16, #tpu.memory_space<vmem>>, vector<1x128x128xbf16>
    %235 = vector.shape_cast %234 : vector<1x128x128xbf16> to vector<128x128xbf16>
    %cst_218 = arith.constant dense<0.000000e+00> : vector<2x128xf32>
    %236 = tpu.matmul %233, %235, %cst_218 {dimension_numbers = #tpu.dot_dimension_numbers<[1], [0], [0], [1], [0, 0, 1, 1], [], []>} : vector<2x128xbf16>, vector<128x128xbf16>, vector<2x128xf32> -> vector<2x128xf32>
    %237 = arith.addf %227, %236 : vector<2x128xf32>
    %c0_219 = arith.constant 0 : index
    %c24 = arith.constant 24 : index
    %c0_220 = arith.constant 0 : index
    %238 = vector.load %arg14[%c0_219, %c24, %c0_220] : memref<2x32x128xf32, #tpu.memory_space<vmem>>, vector<2x1x128xf32>
    %239 = vector.shape_cast %238 : vector<2x1x128xf32> to vector<2x128xf32>
    %c0_221 = arith.constant 0 : index
    %c25 = arith.constant 25 : index
    %c0_222 = arith.constant 0 : index
    %240 = vector.load %arg14[%c0_221, %c25, %c0_222] : memref<2x32x128xf32, #tpu.memory_space<vmem>>, vector<2x1x128xf32>
    %241 = vector.shape_cast %240 : vector<2x1x128xf32> to vector<2x128xf32>
    %242 = arith.maximumf %239, %241 : vector<2x128xf32>
    %243 = arith.truncf %242 : vector<2x128xf32> to vector<2x128xbf16>
    %c12_223 = arith.constant 12 : index
    %c0_224 = arith.constant 0 : index
    %c0_225 = arith.constant 0 : index
    %244 = vector.load %arg7[%c12_223, %c0_224, %c0_225] : memref<16x128x128xbf16, #tpu.memory_space<vmem>>, vector<1x128x128xbf16>
    %245 = vector.shape_cast %244 : vector<1x128x128xbf16> to vector<128x128xbf16>
    %cst_226 = arith.constant dense<0.000000e+00> : vector<2x128xf32>
    %246 = tpu.matmul %243, %245, %cst_226 {dimension_numbers = #tpu.dot_dimension_numbers<[1], [0], [0], [1], [0, 0, 1, 1], [], []>} : vector<2x128xbf16>, vector<128x128xbf16>, vector<2x128xf32> -> vector<2x128xf32>
    %247 = arith.addf %237, %246 : vector<2x128xf32>
    %c0_227 = arith.constant 0 : index
    %c26 = arith.constant 26 : index
    %c0_228 = arith.constant 0 : index
    %248 = vector.load %arg14[%c0_227, %c26, %c0_228] : memref<2x32x128xf32, #tpu.memory_space<vmem>>, vector<2x1x128xf32>
    %249 = vector.shape_cast %248 : vector<2x1x128xf32> to vector<2x128xf32>
    %c0_229 = arith.constant 0 : index
    %c27 = arith.constant 27 : index
    %c0_230 = arith.constant 0 : index
    %250 = vector.load %arg14[%c0_229, %c27, %c0_230] : memref<2x32x128xf32, #tpu.memory_space<vmem>>, vector<2x1x128xf32>
    %251 = vector.shape_cast %250 : vector<2x1x128xf32> to vector<2x128xf32>
    %252 = arith.maximumf %249, %251 : vector<2x128xf32>
    %253 = arith.truncf %252 : vector<2x128xf32> to vector<2x128xbf16>
    %c13_231 = arith.constant 13 : index
    %c0_232 = arith.constant 0 : index
    %c0_233 = arith.constant 0 : index
    %254 = vector.load %arg7[%c13_231, %c0_232, %c0_233] : memref<16x128x128xbf16, #tpu.memory_space<vmem>>, vector<1x128x128xbf16>
    %255 = vector.shape_cast %254 : vector<1x128x128xbf16> to vector<128x128xbf16>
    %cst_234 = arith.constant dense<0.000000e+00> : vector<2x128xf32>
    %256 = tpu.matmul %253, %255, %cst_234 {dimension_numbers = #tpu.dot_dimension_numbers<[1], [0], [0], [1], [0, 0, 1, 1], [], []>} : vector<2x128xbf16>, vector<128x128xbf16>, vector<2x128xf32> -> vector<2x128xf32>
    %257 = arith.addf %247, %256 : vector<2x128xf32>
    %c0_235 = arith.constant 0 : index
    %c28 = arith.constant 28 : index
    %c0_236 = arith.constant 0 : index
    %258 = vector.load %arg14[%c0_235, %c28, %c0_236] : memref<2x32x128xf32, #tpu.memory_space<vmem>>, vector<2x1x128xf32>
    %259 = vector.shape_cast %258 : vector<2x1x128xf32> to vector<2x128xf32>
    %c0_237 = arith.constant 0 : index
    %c29 = arith.constant 29 : index
    %c0_238 = arith.constant 0 : index
    %260 = vector.load %arg14[%c0_237, %c29, %c0_238] : memref<2x32x128xf32, #tpu.memory_space<vmem>>, vector<2x1x128xf32>
    %261 = vector.shape_cast %260 : vector<2x1x128xf32> to vector<2x128xf32>
    %262 = arith.maximumf %259, %261 : vector<2x128xf32>
    %263 = arith.truncf %262 : vector<2x128xf32> to vector<2x128xbf16>
    %c14_239 = arith.constant 14 : index
    %c0_240 = arith.constant 0 : index
    %c0_241 = arith.constant 0 : index
    %264 = vector.load %arg7[%c14_239, %c0_240, %c0_241] : memref<16x128x128xbf16, #tpu.memory_space<vmem>>, vector<1x128x128xbf16>
    %265 = vector.shape_cast %264 : vector<1x128x128xbf16> to vector<128x128xbf16>
    %cst_242 = arith.constant dense<0.000000e+00> : vector<2x128xf32>
    %266 = tpu.matmul %263, %265, %cst_242 {dimension_numbers = #tpu.dot_dimension_numbers<[1], [0], [0], [1], [0, 0, 1, 1], [], []>} : vector<2x128xbf16>, vector<128x128xbf16>, vector<2x128xf32> -> vector<2x128xf32>
    %267 = arith.addf %257, %266 : vector<2x128xf32>
    %c0_243 = arith.constant 0 : index
    %c30 = arith.constant 30 : index
    %c0_244 = arith.constant 0 : index
    %268 = vector.load %arg14[%c0_243, %c30, %c0_244] : memref<2x32x128xf32, #tpu.memory_space<vmem>>, vector<2x1x128xf32>
    %269 = vector.shape_cast %268 : vector<2x1x128xf32> to vector<2x128xf32>
    %c0_245 = arith.constant 0 : index
    %c31 = arith.constant 31 : index
    %c0_246 = arith.constant 0 : index
    %270 = vector.load %arg14[%c0_245, %c31, %c0_246] : memref<2x32x128xf32, #tpu.memory_space<vmem>>, vector<2x1x128xf32>
    %271 = vector.shape_cast %270 : vector<2x1x128xf32> to vector<2x128xf32>
    %272 = arith.maximumf %269, %271 : vector<2x128xf32>
    %273 = arith.truncf %272 : vector<2x128xf32> to vector<2x128xbf16>
    %c15_247 = arith.constant 15 : index
    %c0_248 = arith.constant 0 : index
    %c0_249 = arith.constant 0 : index
    %274 = vector.load %arg7[%c15_247, %c0_248, %c0_249] : memref<16x128x128xbf16, #tpu.memory_space<vmem>>, vector<1x128x128xbf16>
    %275 = vector.shape_cast %274 : vector<1x128x128xbf16> to vector<128x128xbf16>
    %cst_250 = arith.constant dense<0.000000e+00> : vector<2x128xf32>
    %276 = tpu.matmul %273, %275, %cst_250 {dimension_numbers = #tpu.dot_dimension_numbers<[1], [0], [0], [1], [0, 0, 1, 1], [], []>} : vector<2x128xbf16>, vector<128x128xbf16>, vector<2x128xf32> -> vector<2x128xf32>
    %277 = arith.addf %267, %276 : vector<2x128xf32>
    %278 = arith.truncf %277 : vector<2x128xf32> to vector<2x128xbf16>
    %c0_251 = arith.constant 0 : index
    %c0_252 = arith.constant 0 : index
    %279 = vector.load %arg9[%c0_251, %c0_252] : memref<128x128xbf16, #tpu.memory_space<vmem>>, vector<128x128xbf16>
    %cst_253 = arith.constant dense<0.000000e+00> : vector<2x128xf32>
    %280 = tpu.matmul %278, %279, %cst_253 {dimension_numbers = #tpu.dot_dimension_numbers<[1], [0], [0], [1], [0, 0, 1, 1], [], []>} : vector<2x128xbf16>, vector<128x128xbf16>, vector<2x128xf32> -> vector<2x128xf32>
    %c0_254 = arith.constant 0 : index
    %c0_255 = arith.constant 0 : index
    %281 = vector.load %arg10[%c0_254, %c0_255] : memref<1x128xf32, #tpu.memory_space<vmem>>, vector<1x128xf32>
    %282 = vector.broadcast %281 : vector<1x128xf32> to vector<2x128xf32>
    %283 = arith.addf %280, %282 : vector<2x128xf32>
    %c0_256 = arith.constant 0 : index
    %c0_257 = arith.constant 0 : index
    %284 = vector.load %arg11[%c0_256, %c0_257] : memref<2x128xf32, #tpu.memory_space<vmem>>, vector<2x128xf32>
    tpu.vector_store %arg11[%c0_256, %c0_257], %283 {strides = array<i32>} : memref<2x128xf32, #tpu.memory_space<vmem>>, vector<2x128xf32>,
    return
  }
  func.func @transform_0(%arg0: i32) -> (i32, i32, i32) {
    %c0_i32 = arith.constant 0 : i32
    %c0_i32_0 = arith.constant 0 : i32
    %c0_i32_1 = arith.constant 0 : i32
    return %arg0, %c0_i32, %c0_i32_0 : i32, i32, i32
  }
  func.func @transform_1(%arg0: i32) -> (i32, i32) {
    %c0_i32 = arith.constant 0 : i32
    %c0_i32_0 = arith.constant 0 : i32
    %c0_i32_1 = arith.constant 0 : i32
    return %c0_i32, %c0_i32_0 : i32, i32
  }
  func.func @transform_2(%arg0: i32) -> (i32, i32) {
    %c0_i32 = arith.constant 0 : i32
    %c0_i32_0 = arith.constant 0 : i32
    %c0_i32_1 = arith.constant 0 : i32
    return %c0_i32, %c0_i32_0 : i32, i32
  }
  func.func @transform_3(%arg0: i32) -> (i32, i32, i32) {
    %c0_i32 = arith.constant 0 : i32
    %c0_i32_0 = arith.constant 0 : i32
    %c0_i32_1 = arith.constant 0 : i32
    %c0_i32_2 = arith.constant 0 : i32
    return %c0_i32, %c0_i32_0, %c0_i32_1 : i32, i32, i32
  }
  func.func @transform_4(%arg0: i32) -> (i32, i32) {
    %c0_i32 = arith.constant 0 : i32
    %c0_i32_0 = arith.constant 0 : i32
    %c0_i32_1 = arith.constant 0 : i32
    return %c0_i32, %c0_i32_0 : i32, i32
  }
  func.func @transform_5(%arg0: i32) -> (i32, i32, i32) {
    %c0_i32 = arith.constant 0 : i32
    %c0_i32_0 = arith.constant 0 : i32
    %c0_i32_1 = arith.constant 0 : i32
    %c0_i32_2 = arith.constant 0 : i32
    return %c0_i32, %c0_i32_0, %c0_i32_1 : i32, i32, i32
  }
  func.func @transform_6(%arg0: i32) -> (i32, i32, i32) {
    %c0_i32 = arith.constant 0 : i32
    %c0_i32_0 = arith.constant 0 : i32
    %c0_i32_1 = arith.constant 0 : i32
    %c0_i32_2 = arith.constant 0 : i32
    return %c0_i32, %c0_i32_0, %c0_i32_1 : i32, i32, i32
  }
  func.func @transform_7(%arg0: i32) -> (i32, i32) {
    %c0_i32 = arith.constant 0 : i32
    %c0_i32_0 = arith.constant 0 : i32
    %c0_i32_1 = arith.constant 0 : i32
    return %c0_i32, %c0_i32_0 : i32, i32
  }
  func.func @transform_8(%arg0: i32) -> (i32, i32) {
    %c0_i32 = arith.constant 0 : i32
    %c0_i32_0 = arith.constant 0 : i32
    %c0_i32_1 = arith.constant 0 : i32
    return %c0_i32, %c0_i32_0 : i32, i32
  }
  func.func @transform_9(%arg0: i32) -> (i32, i32) {
    %c0_i32 = arith.constant 0 : i32
    %c0_i32_0 = arith.constant 0 : i32
    %c0_i32_1 = arith.constant 0 : i32
    return %c0_i32, %c0_i32_0 : i32, i32
  }
  func.func @transform_10(%arg0: i32) -> (i32, i32) {
    %c0_i32 = arith.constant 0 : i32
    %c0_i32_0 = arith.constant 0 : i32
    return %arg0, %c0_i32 : i32, i32
  }
}

</mosaic_0001>

<llo_original>
// kernel: net_forward.1
$region0: #{net_forward.1}
  #allocation0 [shape = 'u32[]', space=smem, size = 0x4, offset = 0x4, fixed_abs, tag = 'smem constant byte address 0x4 - core index']
  #allocation1 [shape = 'u32[72,128]{1,0:T(1,128)}', space=vmem, size = 0x9000, scoped, tag = 'internal scratch']
  #allocation2 [shape = 'bf16[2,192,128]{2,1,0:T(8,128)(2,1)}', space=vmem, size = 0x18000, scoped, tag = 'scratch operand']
  #allocation3 [shape = 'f32[16,16,128]{2,1,0:T(8,128)}', space=vmem, size = 0x20000, scoped, tag = 'scratch operand']
  #allocation4 [shape = 'f32[2,32,128]{2,1,0:T(8,128)}', space=vmem, size = 0x8000, scoped, tag = 'scratch operand']
  %s0 = inlined_call_operand.vmem [shape: bf16[2,768,32], index: 0, kind: input, shape index: {}]
  %s1 = inlined_call_operand.vmem [shape: bf16[32,128], index: 1, kind: input, shape index: {}]
  %s2 = inlined_call_operand.vmem [shape: f32[1,128], index: 2, kind: input, shape index: {}]
  %s3 = inlined_call_operand.vmem [shape: bf16[5,128,128], index: 3, kind: input, shape index: {}]
  %s4 = inlined_call_operand.vmem [shape: f32[1,128], index: 4, kind: input, shape index: {}]
  %s5 = inlined_call_operand.vmem [shape: bf16[5,128,128], index: 5, kind: input, shape index: {}]
  %s6 = inlined_call_operand.vmem [shape: bf16[16,128,128], index: 6, kind: input, shape index: {}]
  %s7 = inlined_call_operand.vmem [shape: f32[1,128], index: 7, kind: input, shape index: {}]
  %s8 = inlined_call_operand.vmem [shape: bf16[128,128], index: 8, kind: input, shape index: {}]
  %s9 = inlined_call_operand.vmem [shape: f32[1,128], index: 9, kind: input, shape index: {}]
  %s10 = inlined_call_operand.hbm [shape: f32[2,128], index: 10, kind: output, shape index: {}]
  %s11 = sld [smem:[#allocation0]]
  $region50: #{net_forward.1} parent=0
    _
  %s13 = ssub.s32 1, %s11
  %s14 = scalar_select 0, %s13, %s11
  $region1: #{net_forward.1} parent=0
    #allocation5 [shape = 'u8[1024]{0}', space=vmem, size = 0x400, scoped, tag = 'output window, operand 0, single buffered']
    #allocation6 [shape = 's32[1]{0}', space=sflag, size = 0x4, scoped, tag = 'scoped memory for net_forward.1']
    %15 = vsyncpa [#allocation6], 0
    // Predicated region
    $region2: #{net_forward.1} parent=1 // pred_check
      _
    $region3: #{net_forward.1} parent=1 // pred_check_branch
      %17 = sbr.rel (0) target = $region5
    $region4: #{net_forward.1} parent=1 // pred_region
      _
    $region5: #{net_forward.1} parent=1 // pred_fallthru
      _
    // Predicated region
    $region6: #{net_forward.1} parent=1 // pred_check
      _
    $region7: #{net_forward.1} parent=1 // pred_check_branch
      %19 = sbr.rel (0) target = $region9
    $region8: #{net_forward.1} parent=1 // pred_region
      _
    $region9: #{net_forward.1} parent=1 // pred_fallthru
      _
    // Predicated region
    $region10: #{net_forward.1} parent=1 // pred_check
      _
    $region11: #{net_forward.1} parent=1 // pred_check_branch
      %21 = sbr.rel (0) target = $region13
    $region12: #{net_forward.1} parent=1 // pred_region
      _
    $region13: #{net_forward.1} parent=1 // pred_fallthru
      _
    // Predicated region
    $region14: #{net_forward.1} parent=1 // pred_check
      _
    $region15: #{net_forward.1} parent=1 // pred_check_branch
      %23 = sbr.rel (0) target = $region17
    $region16: #{net_forward.1} parent=1 // pred_region
      _
    $region17: #{net_forward.1} parent=1 // pred_fallthru
      _
    // Predicated region
    $region18: #{net_forward.1} parent=1 // pred_check
      _
    $region19: #{net_forward.1} parent=1 // pred_check_branch
      %25 = sbr.rel (0) target = $region21
    $region20: #{net_forward.1} parent=1 // pred_region
      _
    $region21: #{net_forward.1} parent=1 // pred_fallthru
      _
    // Predicated region
    $region22: #{net_forward.1} parent=1 // pred_check
      _
    $region23: #{net_forward.1} parent=1 // pred_check_branch
      %27 = sbr.rel (0) target = $region25
    $region24: #{net_forward.1} parent=1 // pred_region
      _
    $region25: #{net_forward.1} parent=1 // pred_fallthru
      _
    // Predicated region
    $region26: #{net_forward.1} parent=1 // pred_check
      _
    $region27: #{net_forward.1} parent=1 // pred_check_branch
      %29 = sbr.rel (0) target = $region29
    $region28: #{net_forward.1} parent=1 // pred_region
      _
    $region29: #{net_forward.1} parent=1 // pred_fallthru
      _
    // Predicated region
    $region30: #{net_forward.1} parent=1 // pred_check
      _
    $region31: #{net_forward.1} parent=1 // pred_check_branch
      %31 = sbr.rel (0) target = $region33
    $region32: #{net_forward.1} parent=1 // pred_region
      _
    $region33: #{net_forward.1} parent=1 // pred_fallthru
      _
    // Predicated region
    $region34: #{net_forward.1} parent=1 // pred_check
      _
    $region35: #{net_forward.1} parent=1 // pred_check_branch
      %33 = sbr.rel (0) target = $region37
    $region36: #{net_forward.1} parent=1 // pred_region
      _
    $region37: #{net_forward.1} parent=1 // pred_fallthru
      _
    // Predicated region
    $region38: #{net_forward.1} parent=1 // pred_check
      _
    $region39: #{net_forward.1} parent=1 // pred_check_branch
      %35 = sbr.rel (0) target = $region41
    $region40: #{net_forward.1} parent=1 // pred_region
      _
    $region41: #{net_forward.1} parent=1 // pred_fallthru
      _
    %v37 = vld [vmem:[%s1] sm:$0xf]
    %v38 = vld [vmem:[%s1 + $0x4] sm:$0xf]
    %v39 = vld [vmem:[%s1 + $0x8] sm:$0xf]
    %v40 = vld [vmem:[%s1 + $0xc] sm:$0xf]
    %v41 = vld [vmem:[%s0] sm:$0xf]
    %v42 = vld [vmem:[%s0 + $0x4] sm:$0xf]
    %v43 = vld [vmem:[%s0 + $0x8] sm:$0xf]
    %v44 = vld [vmem:[%s0 + $0xc] sm:$0xf]
    %v45 = vld [vmem:[%s0 + $0x10] sm:$0xf]
    %v46 = vld [vmem:[%s0 + $0x14] sm:$0xf]
    %v47 = vld [vmem:[%s0 + $0x18] sm:$0xf]
    %v48 = vld [vmem:[%s0 + $0x1c] sm:$0xf]
    %v49 = vld [vmem:[%s0 + $0x20] sm:$0xf]
    %v50 = vld [vmem:[%s0 + $0x24] sm:$0xf]
    %v51 = vld [vmem:[%s0 + $0x28] sm:$0xf]
    %v52 = vld [vmem:[%s0 + $0x2c] sm:$0xf]
    %v53 = vld [vmem:[%s0 + $0x30] sm:$0xf]
    %v54 = vld [vmem:[%s0 + $0x34] sm:$0xf]
    %v55 = vld [vmem:[%s0 + $0x38] sm:$0xf]
    %v56 = vld [vmem:[%s0 + $0x3c] sm:$0xf]
    %v57 = vld [vmem:[%s0 + $0x40] sm:$0xf]
    %v58 = vld [vmem:[%s0 + $0x44] sm:$0xf]
    %v59 = vld [vmem:[%s0 + $0x48] sm:$0xf]
    %v60 = vld [vmem:[%s0 + $0x4c] sm:$0xf]
    %v61 = vld [vmem:[%s0 + $0x50] sm:$0xf]
    %v62 = vld [vmem:[%s0 + $0x54] sm:$0xf]
    %v63 = vld [vmem:[%s0 + $0x58] sm:$0xf]
    %v64 = vld [vmem:[%s0 + $0x5c] sm:$0xf]
    %v65 = vld [vmem:[%s0 + $0x180] sm:$0xf]
    %v66 = vld [vmem:[%s0 + $0x184] sm:$0xf]
    %v67 = vld [vmem:[%s0 + $0x188] sm:$0xf]
    %v68 = vld [vmem:[%s0 + $0x18c] sm:$0xf]
    %v69 = vld [vmem:[%s0 + $0x190] sm:$0xf]
    %v70 = vld [vmem:[%s0 + $0x194] sm:$0xf]
    %v71 = vld [vmem:[%s0 + $0x198] sm:$0xf]
    %v72 = vld [vmem:[%s0 + $0x19c] sm:$0xf]
    %v73 = vld [vmem:[%s0 + $0x1a0] sm:$0xf]
    %v74 = vld [vmem:[%s0 + $0x1a4] sm:$0xf]
    %v75 = vld [vmem:[%s0 + $0x1a8] sm:$0xf]
    %v76 = vld [vmem:[%s0 + $0x1ac] sm:$0xf]
    %v77 = vld [vmem:[%s0 + $0x1b0] sm:$0xf]
    %v78 = vld [vmem:[%s0 + $0x1b4] sm:$0xf]
    %v79 = vld [vmem:[%s0 + $0x1b8] sm:$0xf]
    %v80 = vld [vmem:[%s0 + $0x1bc] sm:$0xf]
    %v81 = vld [vmem:[%s0 + $0x1c0] sm:$0xf]
    %v82 = vld [vmem:[%s0 + $0x1c4] sm:$0xf]
    %v83 = vld [vmem:[%s0 + $0x1c8] sm:$0xf]
    %v84 = vld [vmem:[%s0 + $0x1cc] sm:$0xf]
    %v85 = vld [vmem:[%s0 + $0x1d0] sm:$0xf]
    %v86 = vld [vmem:[%s0 + $0x1d4] sm:$0xf]
    %v87 = vld [vmem:[%s0 + $0x1d8] sm:$0xf]
    %v88 = vld [vmem:[%s0 + $0x1dc] sm:$0xf]
    %v137 = vunpack.c.l.b16 %v41
    %v138 = vunpack.c.l.b16 %v42
    %v139 = vunpack.c.l.b16 %v43
    %v140 = vunpack.c.l.b16 %v44
    %v141 = vunpack.c.l.b16 %v45
    %v142 = vunpack.c.l.b16 %v46
    %v143 = vunpack.c.l.b16 %v47
    %v144 = vunpack.c.l.b16 %v48
    %v145 = vunpack.c.l.b16 %v49
    %v146 = vunpack.c.l.b16 %v50
    %v147 = vunpack.c.l.b16 %v51
    %v148 = vunpack.c.l.b16 %v52
    %v149 = vunpack.c.l.b16 %v53
    %v150 = vunpack.c.l.b16 %v54
    %v151 = vunpack.c.l.b16 %v55
    %v152 = vunpack.c.l.b16 %v56
    %v153 = vunpack.c.l.b16 %v57
    %v154 = vunpack.c.l.b16 %v58
    %v155 = vunpack.c.l.b16 %v59
    %v156 = vunpack.c.l.b16 %v60
    %v157 = vunpack.c.l.b16 %v61
    %v158 = vunpack.c.l.b16 %v62
    %v159 = vunpack.c.l.b16 %v63
    %v160 = vunpack.c.l.b16 %v64
    %v161 = vunpack.c.l.b16 %v65
    %v162 = vunpack.c.l.b16 %v66
    %v163 = vunpack.c.l.b16 %v67
    %v164 = vunpack.c.l.b16 %v68
    %v165 = vunpack.c.l.b16 %v69
    %v166 = vunpack.c.l.b16 %v70
    %v167 = vunpack.c.l.b16 %v71
    %v168 = vunpack.c.l.b16 %v72
    %v169 = vunpack.c.l.b16 %v73
    %v170 = vunpack.c.l.b16 %v74
    %v171 = vunpack.c.l.b16 %v75
    %v172 = vunpack.c.l.b16 %v76
    %v173 = vunpack.c.l.b16 %v77
    %v174 = vunpack.c.l.b16 %v78
    %v175 = vunpack.c.l.b16 %v79
    %v176 = vunpack.c.l.b16 %v80
    %v177 = vunpack.c.l.b16 %v81
    %v178 = vunpack.c.l.b16 %v82
    %v179 = vunpack.c.l.b16 %v83
    %v180 = vunpack.c.l.b16 %v84
    %v181 = vunpack.c.l.b16 %v85
    %v182 = vunpack.c.l.b16 %v86
    %v183 = vunpack.c.l.b16 %v87
    %v184 = vunpack.c.l.b16 %v88
    %v185 = vpack.c.b16 %v138, %v137
    %v186 = vpack.c.b16 %v140, %v139
    %v187 = vpack.c.b16 %v142, %v141
    %v188 = vpack.c.b16 %v144, %v143
    %v189 = vpack.c.b16 %v146, %v145
    %v190 = vpack.c.b16 %v148, %v147
    %v191 = vpack.c.b16 %v150, %v149
    %v192 = vpack.c.b16 %v152, %v151
    %v193 = vpack.c.b16 %v154, %v153
    %v194 = vpack.c.b16 %v156, %v155
    %v195 = vpack.c.b16 %v158, %v157
    %v196 = vpack.c.b16 %v160, %v159
    %v197 = vpack.c.b16 %v162, %v161
    %v198 = vpack.c.b16 %v164, %v163
    %v199 = vpack.c.b16 %v166, %v165
    %v200 = vpack.c.b16 %v168, %v167
    %v201 = vpack.c.b16 %v170, %v169
    %v202 = vpack.c.b16 %v172, %v171
    %v203 = vpack.c.b16 %v174, %v173
    %v204 = vpack.c.b16 %v176, %v175
    %v205 = vpack.c.b16 %v178, %v177
    %v206 = vpack.c.b16 %v180, %v179
    %v207 = vpack.c.b16 %v182, %v181
    %v208 = vpack.c.b16 %v184, %v183
    %v213 = vunpack.c.l.b16 %v37
    %v214 = vunpack.c.l.b16 %v38
    %v215 = vunpack.c.l.b16 %v39
    %v216 = vunpack.c.l.b16 %v40
    %v217 = vpack.c.b16 %v214, %v213
    %v218 = vpack.c.b16 %v216, %v215
    %vm221 = vcmask 261120
    %v223 = vsel %vm221, %v185, 0
    %v226 = vsel %vm221, %v186, 0
    %v229 = vsel %vm221, %v187, 0
    %v232 = vsel %vm221, %v188, 0
    %v235 = vsel %vm221, %v189, 0
    %v238 = vsel %vm221, %v190, 0
    %v241 = vsel %vm221, %v191, 0
    %v244 = vsel %vm221, %v192, 0
    %v247 = vsel %vm221, %v193, 0
    %v250 = vsel %vm221, %v194, 0
    %v253 = vsel %vm221, %v195, 0
    %v256 = vsel %vm221, %v196, 0
    %v259 = vsel %vm221, %v197, 0
    %v262 = vsel %vm221, %v198, 0
    %v265 = vsel %vm221, %v199, 0
    %v268 = vsel %vm221, %v200, 0
    %v271 = vsel %vm221, %v201, 0
    %v274 = vsel %vm221, %v202, 0
    %v277 = vsel %vm221, %v203, 0
    %v280 = vsel %vm221, %v204, 0
    %v283 = vsel %vm221, %v205, 0
    %v286 = vsel %vm221, %v206, 0
    %v289 = vsel %vm221, %v207, 0
    %v292 = vsel %vm221, %v208, 0
    %294 = vmatpush.bf16.msra.mxu0 0
    %295 = vmatpush.bf16.msra.mxu0 0
    %296 = vmatpush.bf16.msra.mxu0 0
    %297 = vmatpush.bf16.msra.mxu0 0
    %298 = vmatpush.bf16.msra.mxu0 0
    %299 = vmatpush.bf16.msra.mxu0 0
    %300 = vmatpush.bf16.msra.mxu0 %v218
    %301 = vmatpush.bf16.msra.mxu0 %v217
    %302 = vmatmul.bf16.gmra.mxu0 %v223
    %v303 = vpop.f32.mrf.mxu0
    %v304 = vadd.f32 0.0, %v303
    %v305 = vpop.f32.mrf.mxu0
    %v306 = vadd.f32 0.0, %v305
    %307 = vmatmul.bf16.gmra.mxu0 %v226
    %v308 = vpop.f32.mrf.mxu0
    %v309 = vadd.f32 0.0, %v308
    %v310 = vpop.f32.mrf.mxu0
    %v311 = vadd.f32 0.0, %v310
    %312 = vmatmul.bf16.gmra.mxu0 %v229
    %v313 = vpop.f32.mrf.mxu0
    %v314 = vadd.f32 0.0, %v313
    %v315 = vpop.f32.mrf.mxu0
    %v316 = vadd.f32 0.0, %v315
    %317 = vmatmul.bf16.gmra.mxu0 %v232
    %v318 = vpop.f32.mrf.mxu0
    %v319 = vadd.f32 0.0, %v318
    %v320 = vpop.f32.mrf.mxu0
    %v321 = vadd.f32 0.0, %v320
    %322 = vmatmul.bf16.gmra.mxu0 %v235
    %v323 = vpop.f32.mrf.mxu0
    %v324 = vadd.f32 0.0, %v323
    %v325 = vpop.f32.mrf.mxu0
    %v326 = vadd.f32 0.0, %v325
    %327 = vmatmul.bf16.gmra.mxu0 %v238
    %v328 = vpop.f32.mrf.mxu0
    %v329 = vadd.f32 0.0, %v328
    %v330 = vpop.f32.mrf.mxu0
    %v331 = vadd.f32 0.0, %v330
    %332 = vmatmul.bf16.gmra.mxu0 %v241
    %v333 = vpop.f32.mrf.mxu0
    %v334 = vadd.f32 0.0, %v333
    %v335 = vpop.f32.mrf.mxu0
    %v336 = vadd.f32 0.0, %v335
    %337 = vmatmul.bf16.gmra.mxu0 %v244
    %v338 = vpop.f32.mrf.mxu0
    %v339 = vadd.f32 0.0, %v338
    %v340 = vpop.f32.mrf.mxu0
    %v341 = vadd.f32 0.0, %v340
    %342 = vmatmul.bf16.gmra.mxu0 %v247
    %v343 = vpop.f32.mrf.mxu0
    %v344 = vadd.f32 0.0, %v343
    %v345 = vpop.f32.mrf.mxu0
    %v346 = vadd.f32 0.0, %v345
    %347 = vmatmul.bf16.gmra.mxu0 %v250
    %v348 = vpop.f32.mrf.mxu0
    %v349 = vadd.f32 0.0, %v348
    %v350 = vpop.f32.mrf.mxu0
    %v351 = vadd.f32 0.0, %v350
    %352 = vmatmul.bf16.gmra.mxu0 %v253
    %v353 = vpop.f32.mrf.mxu0
    %v354 = vadd.f32 0.0, %v353
    %v355 = vpop.f32.mrf.mxu0
    %v356 = vadd.f32 0.0, %v355
    %357 = vmatmul.bf16.gmra.mxu0 %v256
    %v358 = vpop.f32.mrf.mxu0
    %v359 = vadd.f32 0.0, %v358
    %v360 = vpop.f32.mrf.mxu0
    %v361 = vadd.f32 0.0, %v360
    %362 = vmatmul.bf16.gmra.mxu0 %v259
    %v363 = vpop.f32.mrf.mxu0
    %v364 = vadd.f32 0.0, %v363
    %v365 = vpop.f32.mrf.mxu0
    %v366 = vadd.f32 0.0, %v365
    %367 = vmatmul.bf16.gmra.mxu0 %v262
    %v368 = vpop.f32.mrf.mxu0
    %v369 = vadd.f32 0.0, %v368
    %v370 = vpop.f32.mrf.mxu0
    %v371 = vadd.f32 0.0, %v370
    %372 = vmatmul.bf16.gmra.mxu0 %v265
    %v373 = vpop.f32.mrf.mxu0
    %v374 = vadd.f32 0.0, %v373
    %v375 = vpop.f32.mrf.mxu0
    %v376 = vadd.f32 0.0, %v375
    %377 = vmatmul.bf16.gmra.mxu0 %v268
    %v378 = vpop.f32.mrf.mxu0
    %v379 = vadd.f32 0.0, %v378
    %v380 = vpop.f32.mrf.mxu0
    %v381 = vadd.f32 0.0, %v380
    %382 = vmatmul.bf16.gmra.mxu0 %v271
    %v383 = vpop.f32.mrf.mxu0
    %v384 = vadd.f32 0.0, %v383
    %v385 = vpop.f32.mrf.mxu0
    %v386 = vadd.f32 0.0, %v385
    %387 = vmatmul.bf16.gmra.mxu0 %v274
    %v388 = vpop.f32.mrf.mxu0
    %v389 = vadd.f32 0.0, %v388
    %v390 = vpop.f32.mrf.mxu0
    %v391 = vadd.f32 0.0, %v390
    %392 = vmatmul.bf16.gmra.mxu0 %v277
    %v393 = vpop.f32.mrf.mxu0
    %v394 = vadd.f32 0.0, %v393
    %v395 = vpop.f32.mrf.mxu0
    %v396 = vadd.f32 0.0, %v395
    %397 = vmatmul.bf16.gmra.mxu0 %v280
    %v398 = vpop.f32.mrf.mxu0
    %v399 = vadd.f32 0.0, %v398
    %v400 = vpop.f32.mrf.mxu0
    %v401 = vadd.f32 0.0, %v400
    %402 = vmatmul.bf16.gmra.mxu0 %v283
    %v403 = vpop.f32.mrf.mxu0
    %v404 = vadd.f32 0.0, %v403
    %v405 = vpop.f32.mrf.mxu0
    %v406 = vadd.f32 0.0, %v405
    %407 = vmatmul.bf16.gmra.mxu0 %v286
    %v408 = vpop.f32.mrf.mxu0
    %v409 = vadd.f32 0.0, %v408
    %v410 = vpop.f32.mrf.mxu0
    %v411 = vadd.f32 0.0, %v410
    %412 = vmatmul.bf16.gmra.mxu0 %v289
    %v413 = vpop.f32.mrf.mxu0
    %v414 = vadd.f32 0.0, %v413
    %v415 = vpop.f32.mrf.mxu0
    %v416 = vadd.f32 0.0, %v415
    %417 = vmatmul.bf16.gmra.mxu0 %v292
    %v418 = vpop.f32.mrf.mxu0
    %v419 = vadd.f32 0.0, %v418
    %v420 = vpop.f32.mrf.mxu0
    %v421 = vadd.f32 0.0, %v420
    %422 = vdwg.mxu0
    %v423 = vld [vmem:[%s0 + $0x60] sm:$0xf]
    %v424 = vld [vmem:[%s0 + $0x64] sm:$0xf]
    %v425 = vld [vmem:[%s0 + $0x68] sm:$0xf]
    %v426 = vld [vmem:[%s0 + $0x6c] sm:$0xf]
    %v427 = vld [vmem:[%s0 + $0x70] sm:$0xf]
    %v428 = vld [vmem:[%s0 + $0x74] sm:$0xf]
    %v429 = vld [vmem:[%s0 + $0x78] sm:$0xf]
    %v430 = vld [vmem:[%s0 + $0x7c] sm:$0xf]
    %v431 = vld [vmem:[%s0 + $0x80] sm:$0xf]
    %v432 = vld [vmem:[%s0 + $0x84] sm:$0xf]
    %v433 = vld [vmem:[%s0 + $0x88] sm:$0xf]
    %v434 = vld [vmem:[%s0 + $0x8c] sm:$0xf]
    %v435 = vld [vmem:[%s0 + $0x90] sm:$0xf]
    %v436 = vld [vmem:[%s0 + $0x94] sm:$0xf]
    %v437 = vld [vmem:[%s0 + $0x98] sm:$0xf]
    %v438 = vld [vmem:[%s0 + $0x9c] sm:$0xf]
    %v439 = vld [vmem:[%s0 + $0xa0] sm:$0xf]
    %v440 = vld [vmem:[%s0 + $0xa4] sm:$0xf]
    %v441 = vld [vmem:[%s0 + $0xa8] sm:$0xf]
    %v442 = vld [vmem:[%s0 + $0xac] sm:$0xf]
    %v443 = vld [vmem:[%s0 + $0xb0] sm:$0xf]
    %v444 = vld [vmem:[%s0 + $0xb4] sm:$0xf]
    %v445 = vld [vmem:[%s0 + $0xb8] sm:$0xf]
    %v446 = vld [vmem:[%s0 + $0xbc] sm:$0xf]
    %v447 = vld [vmem:[%s0 + $0x1e0] sm:$0xf]
    %v448 = vld [vmem:[%s0 + $0x1e4] sm:$0xf]
    %v449 = vld [vmem:[%s0 + $0x1e8] sm:$0xf]
    %v450 = vld [vmem:[%s0 + $0x1ec] sm:$0xf]
    %v451 = vld [vmem:[%s0 + $0x1f0] sm:$0xf]
    %v452 = vld [vmem:[%s0 + $0x1f4] sm:$0xf]
    %v453 = vld [vmem:[%s0 + $0x1f8] sm:$0xf]
    %v454 = vld [vmem:[%s0 + $0x1fc] sm:$0xf]
    %v455 = vld [vmem:[%s0 + $0x200] sm:$0xf]
    %v456 = vld [vmem:[%s0 + $0x204] sm:$0xf]
    %v457 = vld [vmem:[%s0 + $0x208] sm:$0xf]
    %v458 = vld [vmem:[%s0 + $0x20c] sm:$0xf]
    %v459 = vld [vmem:[%s0 + $0x210] sm:$0xf]
    %v460 = vld [vmem:[%s0 + $0x214] sm:$0xf]
    %v461 = vld [vmem:[%s0 + $0x218] sm:$0xf]
    %v462 = vld [vmem:[%s0 + $0x21c] sm:$0xf]
    %v463 = vld [vmem:[%s0 + $0x220] sm:$0xf]
    %v464 = vld [vmem:[%s0 + $0x224] sm:$0xf]
    %v465 = vld [vmem:[%s0 + $0x228] sm:$0xf]
    %v466 = vld [vmem:[%s0 + $0x22c] sm:$0xf]
    %v467 = vld [vmem:[%s0 + $0x230] sm:$0xf]
    %v468 = vld [vmem:[%s0 + $0x234] sm:$0xf]
    %v469 = vld [vmem:[%s0 + $0x238] sm:$0xf]
    %v470 = vld [vmem:[%s0 + $0x23c] sm:$0xf]
    %v519 = vunpack.c.l.b16 %v423
    %v520 = vunpack.c.l.b16 %v424
    %v521 = vunpack.c.l.b16 %v425
    %v522 = vunpack.c.l.b16 %v426
    %v523 = vunpack.c.l.b16 %v427
    %v524 = vunpack.c.l.b16 %v428
    %v525 = vunpack.c.l.b16 %v429
    %v526 = vunpack.c.l.b16 %v430
    %v527 = vunpack.c.l.b16 %v431
    %v528 = vunpack.c.l.b16 %v432
    %v529 = vunpack.c.l.b16 %v433
    %v530 = vunpack.c.l.b16 %v434
    %v531 = vunpack.c.l.b16 %v435
    %v532 = vunpack.c.l.b16 %v436
    %v533 = vunpack.c.l.b16 %v437
    %v534 = vunpack.c.l.b16 %v438
    %v535 = vunpack.c.l.b16 %v439
    %v536 = vunpack.c.l.b16 %v440
    %v537 = vunpack.c.l.b16 %v441
    %v538 = vunpack.c.l.b16 %v442
    %v539 = vunpack.c.l.b16 %v443
    %v540 = vunpack.c.l.b16 %v444
    %v541 = vunpack.c.l.b16 %v445
    %v542 = vunpack.c.l.b16 %v446
    %v543 = vunpack.c.l.b16 %v447
    %v544 = vunpack.c.l.b16 %v448
    %v545 = vunpack.c.l.b16 %v449
    %v546 = vunpack.c.l.b16 %v450
    %v547 = vunpack.c.l.b16 %v451
    %v548 = vunpack.c.l.b16 %v452
    %v549 = vunpack.c.l.b16 %v453
    %v550 = vunpack.c.l.b16 %v454
    %v551 = vunpack.c.l.b16 %v455
    %v552 = vunpack.c.l.b16 %v456
    %v553 = vunpack.c.l.b16 %v457
    %v554 = vunpack.c.l.b16 %v458
    %v555 = vunpack.c.l.b16 %v459
    %v556 = vunpack.c.l.b16 %v460
    %v557 = vunpack.c.l.b16 %v461
    %v558 = vunpack.c.l.b16 %v462
    %v559 = vunpack.c.l.b16 %v463
    %v560 = vunpack.c.l.b16 %v464
    %v561 = vunpack.c.l.b16 %v465
    %v562 = vunpack.c.l.b16 %v466
    %v563 = vunpack.c.l.b16 %v467
    %v564 = vunpack.c.l.b16 %v468
    %v565 = vunpack.c.l.b16 %v469
    %v566 = vunpack.c.l.b16 %v470
    %v567 = vpack.c.b16 %v520, %v519
    %v568 = vpack.c.b16 %v522, %v521
    %v569 = vpack.c.b16 %v524, %v523
    %v570 = vpack.c.b16 %v526, %v525
    %v571 = vpack.c.b16 %v528, %v527
    %v572 = vpack.c.b16 %v530, %v529
    %v573 = vpack.c.b16 %v532, %v531
    %v574 = vpack.c.b16 %v534, %v533
    %v575 = vpack.c.b16 %v536, %v535
    %v576 = vpack.c.b16 %v538, %v537
    %v577 = vpack.c.b16 %v540, %v539
    %v578 = vpack.c.b16 %v542, %v541
    %v579 = vpack.c.b16 %v544, %v543
    %v580 = vpack.c.b16 %v546, %v545
    %v581 = vpack.c.b16 %v548, %v547
    %v582 = vpack.c.b16 %v550, %v549
    %v583 = vpack.c.b16 %v552, %v551
    %v584 = vpack.c.b16 %v554, %v553
    %v585 = vpack.c.b16 %v556, %v555
    %v586 = vpack.c.b16 %v558, %v557
    %v587 = vpack.c.b16 %v560, %v559
    %v588 = vpack.c.b16 %v562, %v561
    %v589 = vpack.c.b16 %v564, %v563
    %v590 = vpack.c.b16 %v566, %v565
    %v592 = vsel %vm221, %v567, 0
    %v595 = vsel %vm221, %v568, 0
    %v598 = vsel %vm221, %v569, 0
    %v601 = vsel %vm221, %v570, 0
    %v604 = vsel %vm221, %v571, 0
    %v607 = vsel %vm221, %v572, 0
    %v610 = vsel %vm221, %v573, 0
    %v613 = vsel %vm221, %v574, 0
    %v616 = vsel %vm221, %v575, 0
    %v619 = vsel %vm221, %v576, 0
    %v622 = vsel %vm221, %v577, 0
    %v625 = vsel %vm221, %v578, 0
    %v628 = vsel %vm221, %v579, 0
    %v631 = vsel %vm221, %v580, 0
    %v634 = vsel %vm221, %v581, 0
    %v637 = vsel %vm221, %v582, 0
    %v640 = vsel %vm221, %v583, 0
    %v643 = vsel %vm221, %v584, 0
    %v646 = vsel %vm221, %v585, 0
    %v649 = vsel %vm221, %v586, 0
    %v652 = vsel %vm221, %v587, 0
    %v655 = vsel %vm221, %v588, 0
    %v658 = vsel %vm221, %v589, 0
    %v661 = vsel %vm221, %v590, 0
    %663 = vmatpush.bf16.msra.mxu0 0
    %664 = vmatpush.bf16.msra.mxu0 0
    %665 = vmatpush.bf16.msra.mxu0 0
    %666 = vmatpush.bf16.msra.mxu0 0
    %667 = vmatpush.bf16.msra.mxu0 0
    %668 = vmatpush.bf16.msra.mxu0 0
    %669 = vmatpush.bf16.msra.mxu0 %v218
    %670 = vmatpush.bf16.msra.mxu0 %v217
    %671 = vmatmul.bf16.gmra.mxu0 %v592
    %v672 = vpop.f32.mrf.mxu0
    %v673 = vadd.f32 0.0, %v672
    %v674 = vpop.f32.mrf.mxu0
    %v675 = vadd.f32 0.0, %v674
    %676 = vmatmul.bf16.gmra.mxu0 %v595
    %v677 = vpop.f32.mrf.mxu0
    %v678 = vadd.f32 0.0, %v677
    %v679 = vpop.f32.mrf.mxu0
    %v680 = vadd.f32 0.0, %v679
    %681 = vmatmul.bf16.gmra.mxu0 %v598
    %v682 = vpop.f32.mrf.mxu0
    %v683 = vadd.f32 0.0, %v682
    %v684 = vpop.f32.mrf.mxu0
    %v685 = vadd.f32 0.0, %v684
    %686 = vmatmul.bf16.gmra.mxu0 %v601
    %v687 = vpop.f32.mrf.mxu0
    %v688 = vadd.f32 0.0, %v687
    %v689 = vpop.f32.mrf.mxu0
    %v690 = vadd.f32 0.0, %v689
    %691 = vmatmul.bf16.gmra.mxu0 %v604
    %v692 = vpop.f32.mrf.mxu0
    %v693 = vadd.f32 0.0, %v692
    %v694 = vpop.f32.mrf.mxu0
    %v695 = vadd.f32 0.0, %v694
    %696 = vmatmul.bf16.gmra.mxu0 %v607
    %v697 = vpop.f32.mrf.mxu0
    %v698 = vadd.f32 0.0, %v697
    %v699 = vpop.f32.mrf.mxu0
    %v700 = vadd.f32 0.0, %v699
    %701 = vmatmul.bf16.gmra.mxu0 %v610
    %v702 = vpop.f32.mrf.mxu0
    %v703 = vadd.f32 0.0, %v702
    %v704 = vpop.f32.mrf.mxu0
    %v705 = vadd.f32 0.0, %v704
    %706 = vmatmul.bf16.gmra.mxu0 %v613
    %v707 = vpop.f32.mrf.mxu0
    %v708 = vadd.f32 0.0, %v707
    %v709 = vpop.f32.mrf.mxu0
    %v710 = vadd.f32 0.0, %v709
    %711 = vmatmul.bf16.gmra.mxu0 %v616
    %v712 = vpop.f32.mrf.mxu0
    %v713 = vadd.f32 0.0, %v712
    %v714 = vpop.f32.mrf.mxu0
    %v715 = vadd.f32 0.0, %v714
    %716 = vmatmul.bf16.gmra.mxu0 %v619
    %v717 = vpop.f32.mrf.mxu0
    %v718 = vadd.f32 0.0, %v717
    %v719 = vpop.f32.mrf.mxu0
    %v720 = vadd.f32 0.0, %v719
    %721 = vmatmul.bf16.gmra.mxu0 %v622
    %v722 = vpop.f32.mrf.mxu0
    %v723 = vadd.f32 0.0, %v722
    %v724 = vpop.f32.mrf.mxu0
    %v725 = vadd.f32 0.0, %v724
    %726 = vmatmul.bf16.gmra.mxu0 %v625
    %v727 = vpop.f32.mrf.mxu0
    %v728 = vadd.f32 0.0, %v727
    %v729 = vpop.f32.mrf.mxu0
    %v730 = vadd.f32 0.0, %v729
    %731 = vmatmul.bf16.gmra.mxu0 %v628
    %v732 = vpop.f32.mrf.mxu0
    %v733 = vadd.f32 0.0, %v732
    %v734 = vpop.f32.mrf.mxu0
    %v735 = vadd.f32 0.0, %v734
    %736 = vmatmul.bf16.gmra.mxu0 %v631
    %v737 = vpop.f32.mrf.mxu0
    %v738 = vadd.f32 0.0, %v737
    %v739 = vpop.f32.mrf.mxu0
    %v740 = vadd.f32 0.0, %v739
    %741 = vmatmul.bf16.gmra.mxu0 %v634
    %v742 = vpop.f32.mrf.mxu0
    %v743 = vadd.f32 0.0, %v742
    %v744 = vpop.f32.mrf.mxu0
    %v745 = vadd.f32 0.0, %v744
    %746 = vmatmul.bf16.gmra.mxu0 %v637
    %v747 = vpop.f32.mrf.mxu0
    %v748 = vadd.f32 0.0, %v747
    %v749 = vpop.f32.mrf.mxu0
    %v750 = vadd.f32 0.0, %v749
    %751 = vmatmul.bf16.gmra.mxu0 %v640
    %v752 = vpop.f32.mrf.mxu0
    %v753 = vadd.f32 0.0, %v752
    %v754 = vpop.f32.mrf.mxu0
    %v755 = vadd.f32 0.0, %v754
    %756 = vmatmul.bf16.gmra.mxu0 %v643
    %v757 = vpop.f32.mrf.mxu0
    %v758 = vadd.f32 0.0, %v757
    %v759 = vpop.f32.mrf.mxu0
    %v760 = vadd.f32 0.0, %v759
    %761 = vmatmul.bf16.gmra.mxu0 %v646
    %v762 = vpop.f32.mrf.mxu0
    %v763 = vadd.f32 0.0, %v762
    %v764 = vpop.f32.mrf.mxu0
    %v765 = vadd.f32 0.0, %v764
    %766 = vmatmul.bf16.gmra.mxu0 %v649
    %v767 = vpop.f32.mrf.mxu0
    %v768 = vadd.f32 0.0, %v767
    %v769 = vpop.f32.mrf.mxu0
    %v770 = vadd.f32 0.0, %v769
    %771 = vmatmul.bf16.gmra.mxu0 %v652
    %v772 = vpop.f32.mrf.mxu0
    %v773 = vadd.f32 0.0, %v772
    %v774 = vpop.f32.mrf.mxu0
    %v775 = vadd.f32 0.0, %v774
    %776 = vmatmul.bf16.gmra.mxu0 %v655
    %v777 = vpop.f32.mrf.mxu0
    %v778 = vadd.f32 0.0, %v777
    %v779 = vpop.f32.mrf.mxu0
    %v780 = vadd.f32 0.0, %v779
    %781 = vmatmul.bf16.gmra.mxu0 %v658
    %v782 = vpop.f32.mrf.mxu0
    %v783 = vadd.f32 0.0, %v782
    %v784 = vpop.f32.mrf.mxu0
    %v785 = vadd.f32 0.0, %v784
    %786 = vmatmul.bf16.gmra.mxu0 %v661
    %v787 = vpop.f32.mrf.mxu0
    %v788 = vadd.f32 0.0, %v787
    %v789 = vpop.f32.mrf.mxu0
    %v790 = vadd.f32 0.0, %v789
    %791 = vdwg.mxu0
    %v792 = vmax.f32 %v304, %v673
    %v793 = vmax.f32 %v306, %v675
    %v794 = vmax.f32 %v309, %v678
    %v795 = vmax.f32 %v311, %v680
    %v796 = vmax.f32 %v314, %v683
    %v797 = vmax.f32 %v316, %v685
    %v798 = vmax.f32 %v319, %v688
    %v799 = vmax.f32 %v321, %v690
    %v800 = vmax.f32 %v324, %v693
    %v801 = vmax.f32 %v326, %v695
    %v802 = vmax.f32 %v329, %v698
    %v803 = vmax.f32 %v331, %v700
    %v804 = vmax.f32 %v334, %v703
    %v805 = vmax.f32 %v336, %v705
    %v806 = vmax.f32 %v339, %v708
    %v807 = vmax.f32 %v341, %v710
    %v808 = vmax.f32 %v344, %v713
    %v809 = vmax.f32 %v346, %v715
    %v810 = vmax.f32 %v349, %v718
    %v811 = vmax.f32 %v351, %v720
    %v812 = vmax.f32 %v354, %v723
    %v813 = vmax.f32 %v356, %v725
    %v814 = vmax.f32 %v359, %v728
    %v815 = vmax.f32 %v361, %v730
    %v816 = vmax.f32 %v364, %v733
    %v817 = vmax.f32 %v366, %v735
    %v818 = vmax.f32 %v369, %v738
    %v819 = vmax.f32 %v371, %v740
    %v820 = vmax.f32 %v374, %v743
    %v821 = vmax.f32 %v376, %v745
    %v822 = vmax.f32 %v379, %v748
    %v823 = vmax.f32 %v381, %v750
    %v824 = vmax.f32 %v384, %v753
    %v825 = vmax.f32 %v386, %v755
    %v826 = vmax.f32 %v389, %v758
    %v827 = vmax.f32 %v391, %v760
    %v828 = vmax.f32 %v394, %v763
    %v829 = vmax.f32 %v396, %v765
    %v830 = vmax.f32 %v399, %v768
    %v831 = vmax.f32 %v401, %v770
    %v832 = vmax.f32 %v404, %v773
    %v833 = vmax.f32 %v406, %v775
    %v834 = vmax.f32 %v409, %v778
    %v835 = vmax.f32 %v411, %v780
    %v836 = vmax.f32 %v414, %v783
    %v837 = vmax.f32 %v416, %v785
    %v838 = vmax.f32 %v419, %v788
    %v839 = vmax.f32 %v421, %v790
    %v840 = vld [vmem:[%s0 + $0xc0] sm:$0xf]
    %v841 = vld [vmem:[%s0 + $0xc4] sm:$0xf]
    %v842 = vld [vmem:[%s0 + $0xc8] sm:$0xf]
    %v843 = vld [vmem:[%s0 + $0xcc] sm:$0xf]
    %v844 = vld [vmem:[%s0 + $0xd0] sm:$0xf]
    %v845 = vld [vmem:[%s0 + $0xd4] sm:$0xf]
    %v846 = vld [vmem:[%s0 + $0xd8] sm:$0xf]
    %v847 = vld [vmem:[%s0 + $0xdc] sm:$0xf]
    %v848 = vld [vmem:[%s0 + $0xe0] sm:$0xf]
    %v849 = vld [vmem:[%s0 + $0xe4] sm:$0xf]
    %v850 = vld [vmem:[%s0 + $0xe8] sm:$0xf]
    %v851 = vld [vmem:[%s0 + $0xec] sm:$0xf]
    %v852 = vld [vmem:[%s0 + $0xf0] sm:$0xf]
    %v853 = vld [vmem:[%s0 + $0xf4] sm:$0xf]
    %v854 = vld [vmem:[%s0 + $0xf8] sm:$0xf]
    %v855 = vld [vmem:[%s0 + $0xfc] sm:$0xf]
    %v856 = vld [vmem:[%s0 + $0x100] sm:$0xf]
    %v857 = vld [vmem:[%s0 + $0x104] sm:$0xf]
    %v858 = vld [vmem:[%s0 + $0x108] sm:$0xf]
    %v859 = vld [vmem:[%s0 + $0x10c] sm:$0xf]
    %v860 = vld [vmem:[%s0 + $0x110] sm:$0xf]
    %v861 = vld [vmem:[%s0 + $0x114] sm:$0xf]
    %v862 = vld [vmem:[%s0 + $0x118] sm:$0xf]
    %v863 = vld [vmem:[%s0 + $0x11c] sm:$0xf]
    %v864 = vld [vmem:[%s0 + $0x240] sm:$0xf]
    %v865 = vld [vmem:[%s0 + $0x244] sm:$0xf]
    %v866 = vld [vmem:[%s0 + $0x248] sm:$0xf]
    %v867 = vld [vmem:[%s0 + $0x24c] sm:$0xf]
    %v868 = vld [vmem:[%s0 + $0x250] sm:$0xf]
    %v869 = vld [vmem:[%s0 + $0x254] sm:$0xf]
    %v870 = vld [vmem:[%s0 + $0x258] sm:$0xf]
    %v871 = vld [vmem:[%s0 + $0x25c] sm:$0xf]
    %v872 = vld [vmem:[%s0 + $0x260] sm:$0xf]
    %v873 = vld [vmem:[%s0 + $0x264] sm:$0xf]
    %v874 = vld [vmem:[%s0 + $0x268] sm:$0xf]
    %v875 = vld [vmem:[%s0 + $0x26c] sm:$0xf]
    %v876 = vld [vmem:[%s0 + $0x270] sm:$0xf]
    %v877 = vld [vmem:[%s0 + $0x274] sm:$0xf]
    %v878 = vld [vmem:[%s0 + $0x278] sm:$0xf]
    %v879 = vld [vmem:[%s0 + $0x27c] sm:$0xf]
    %v880 = vld [vmem:[%s0 + $0x280] sm:$0xf]
    %v881 = vld [vmem:[%s0 + $0x284] sm:$0xf]
    %v882 = vld [vmem:[%s0 + $0x288] sm:$0xf]
    %v883 = vld [vmem:[%s0 + $0x28c] sm:$0xf]
    %v884 = vld [vmem:[%s0 + $0x290] sm:$0xf]
    %v885 = vld [vmem:[%s0 + $0x294] sm:$0xf]
    %v886 = vld [vmem:[%s0 + $0x298] sm:$0xf]
    %v887 = vld [vmem:[%s0 + $0x29c] sm:$0xf]
    %v936 = vunpack.c.l.b16 %v840
    %v937 = vunpack.c.l.b16 %v841
    %v938 = vunpack.c.l.b16 %v842
    %v939 = vunpack.c.l.b16 %v843
    %v940 = vunpack.c.l.b16 %v844
    %v941 = vunpack.c.l.b16 %v845
    %v942 = vunpack.c.l.b16 %v846
    %v943 = vunpack.c.l.b16 %v847
    %v944 = vunpack.c.l.b16 %v848
    %v945 = vunpack.c.l.b16 %v849
    %v946 = vunpack.c.l.b16 %v850
    %v947 = vunpack.c.l.b16 %v851
    %v948 = vunpack.c.l.b16 %v852
    %v949 = vunpack.c.l.b16 %v853
    %v950 = vunpack.c.l.b16 %v854
    %v951 = vunpack.c.l.b16 %v855
    %v952 = vunpack.c.l.b16 %v856
    %v953 = vunpack.c.l.b16 %v857
    %v954 = vunpack.c.l.b16 %v858
    %v955 = vunpack.c.l.b16 %v859
    %v956 = vunpack.c.l.b16 %v860
    %v957 = vunpack.c.l.b16 %v861
    %v958 = vunpack.c.l.b16 %v862
    %v959 = vunpack.c.l.b16 %v863
    %v960 = vunpack.c.l.b16 %v864
    %v961 = vunpack.c.l.b16 %v865
    %v962 = vunpack.c.l.b16 %v866
    %v963 = vunpack.c.l.b16 %v867
    %v964 = vunpack.c.l.b16 %v868
    %v965 = vunpack.c.l.b16 %v869
    %v966 = vunpack.c.l.b16 %v870
    %v967 = vunpack.c.l.b16 %v871
    %v968 = vunpack.c.l.b16 %v872
    %v969 = vunpack.c.l.b16 %v873
    %v970 = vunpack.c.l.b16 %v874
    %v971 = vunpack.c.l.b16 %v875
    %v972 = vunpack.c.l.b16 %v876
    %v973 = vunpack.c.l.b16 %v877
    %v974 = vunpack.c.l.b16 %v878
    %v975 = vunpack.c.l.b16 %v879
    %v976 = vunpack.c.l.b16 %v880
    %v977 = vunpack.c.l.b16 %v881
    %v978 = vunpack.c.l.b16 %v882
    %v979 = vunpack.c.l.b16 %v883
    %v980 = vunpack.c.l.b16 %v884
    %v981 = vunpack.c.l.b16 %v885
    %v982 = vunpack.c.l.b16 %v886
    %v983 = vunpack.c.l.b16 %v887
    %v984 = vpack.c.b16 %v937, %v936
    %v985 = vpack.c.b16 %v939, %v938
    %v986 = vpack.c.b16 %v941, %v940
    %v987 = vpack.c.b16 %v943, %v942
    %v988 = vpack.c.b16 %v945, %v944
    %v989 = vpack.c.b16 %v947, %v946
    %v990 = vpack.c.b16 %v949, %v948
    %v991 = vpack.c.b16 %v951, %v950
    %v992 = vpack.c.b16 %v953, %v952
    %v993 = vpack.c.b16 %v955, %v954
    %v994 = vpack.c.b16 %v957, %v956
    %v995 = vpack.c.b16 %v959, %v958
    %v996 = vpack.c.b16 %v961, %v960
    %v997 = vpack.c.b16 %v963, %v962
    %v998 = vpack.c.b16 %v965, %v964
    %v999 = vpack.c.b16 %v967, %v966
    %v1000 = vpack.c.b16 %v969, %v968
    %v1001 = vpack.c.b16 %v971, %v970
    %v1002 = vpack.c.b16 %v973, %v972
    %v1003 = vpack.c.b16 %v975, %v974
    %v1004 = vpack.c.b16 %v977, %v976
    %v1005 = vpack.c.b16 %v979, %v978
    %v1006 = vpack.c.b16 %v981, %v980
    %v1007 = vpack.c.b16 %v983, %v982
    %v1009 = vsel %vm221, %v984, 0
    %v1012 = vsel %vm221, %v985, 0
    %v1015 = vsel %vm221, %v986, 0
    %v1018 = vsel %vm221, %v987, 0
    %v1021 = vsel %vm221, %v988, 0
    %v1024 = vsel %vm221, %v989, 0
    %v1027 = vsel %vm221, %v990, 0
    %v1030 = vsel %vm221, %v991, 0
    %v1033 = vsel %vm221, %v992, 0
    %v1036 = vsel %vm221, %v993, 0
    %v1039 = vsel %vm221, %v994, 0
    %v1042 = vsel %vm221, %v995, 0
    %v1045 = vsel %vm221, %v996, 0
    %v1048 = vsel %vm221, %v997, 0
    %v1051 = vsel %vm221, %v998, 0
    %v1054 = vsel %vm221, %v999, 0
    %v1057 = vsel %vm221, %v1000, 0
    %v1060 = vsel %vm221, %v1001, 0
    %v1063 = vsel %vm221, %v1002, 0
    %v1066 = vsel %vm221, %v1003, 0
    %v1069 = vsel %vm221, %v1004, 0
    %v1072 = vsel %vm221, %v1005, 0
    %v1075 = vsel %vm221, %v1006, 0
    %v1078 = vsel %vm221, %v1007, 0
    %1080 = vmatpush.bf16.msra.mxu0 0
    %1081 = vmatpush.bf16.msra.mxu0 0
    %1082 = vmatpush.bf16.msra.mxu0 0
    %1083 = vmatpush.bf16.msra.mxu0 0
    %1084 = vmatpush.bf16.msra.mxu0 0
    %1085 = vmatpush.bf16.msra.mxu0 0
    %1086 = vmatpush.bf16.msra.mxu0 %v218
    %1087 = vmatpush.bf16.msra.mxu0 %v217
    %1088 = vmatmul.bf16.gmra.mxu0 %v1009
    %v1089 = vpop.f32.mrf.mxu0
    %v1090 = vadd.f32 0.0, %v1089
    %v1091 = vpop.f32.mrf.mxu0
    %v1092 = vadd.f32 0.0, %v1091
    %1093 = vmatmul.bf16.gmra.mxu0 %v1012
    %v1094 = vpop.f32.mrf.mxu0
    %v1095 = vadd.f32 0.0, %v1094
    %v1096 = vpop.f32.mrf.mxu0
    %v1097 = vadd.f32 0.0, %v1096
    %1098 = vmatmul.bf16.gmra.mxu0 %v1015
    %v1099 = vpop.f32.mrf.mxu0
    %v1100 = vadd.f32 0.0, %v1099
    %v1101 = vpop.f32.mrf.mxu0
    %v1102 = vadd.f32 0.0, %v1101
    %1103 = vmatmul.bf16.gmra.mxu0 %v1018
    %v1104 = vpop.f32.mrf.mxu0
    %v1105 = vadd.f32 0.0, %v1104
    %v1106 = vpop.f32.mrf.mxu0
    %v1107 = vadd.f32 0.0, %v1106
    %1108 = vmatmul.bf16.gmra.mxu0 %v1021
    %v1109 = vpop.f32.mrf.mxu0
    %v1110 = vadd.f32 0.0, %v1109
    %v1111 = vpop.f32.mrf.mxu0
    %v1112 = vadd.f32 0.0, %v1111
    %1113 = vmatmul.bf16.gmra.mxu0 %v1024
    %v1114 = vpop.f32.mrf.mxu0
    %v1115 = vadd.f32 0.0, %v1114
    %v1116 = vpop.f32.mrf.mxu0
    %v1117 = vadd.f32 0.0, %v1116
    %1118 = vmatmul.bf16.gmra.mxu0 %v1027
    %v1119 = vpop.f32.mrf.mxu0
    %v1120 = vadd.f32 0.0, %v1119
    %v1121 = vpop.f32.mrf.mxu0
    %v1122 = vadd.f32 0.0, %v1121
    %1123 = vmatmul.bf16.gmra.mxu0 %v1030
    %v1124 = vpop.f32.mrf.mxu0
    %v1125 = vadd.f32 0.0, %v1124
    %v1126 = vpop.f32.mrf.mxu0
    %v1127 = vadd.f32 0.0, %v1126
    %1128 = vmatmul.bf16.gmra.mxu0 %v1033
    %v1129 = vpop.f32.mrf.mxu0
    %v1130 = vadd.f32 0.0, %v1129
    %v1131 = vpop.f32.mrf.mxu0
    %v1132 = vadd.f32 0.0, %v1131
    %1133 = vmatmul.bf16.gmra.mxu0 %v1036
    %v1134 = vpop.f32.mrf.mxu0
    %v1135 = vadd.f32 0.0, %v1134
    %v1136 = vpop.f32.mrf.mxu0
    %v1137 = vadd.f32 0.0, %v1136
    %1138 = vmatmul.bf16.gmra.mxu0 %v1039
    %v1139 = vpop.f32.mrf.mxu0
    %v1140 = vadd.f32 0.0, %v1139
    %v1141 = vpop.f32.mrf.mxu0
    %v1142 = vadd.f32 0.0, %v1141
    %1143 = vmatmul.bf16.gmra.mxu0 %v1042
    %v1144 = vpop.f32.mrf.mxu0
    %v1145 = vadd.f32 0.0, %v1144
    %v1146 = vpop.f32.mrf.mxu0
    %v1147 = vadd.f32 0.0, %v1146
    %1148 = vmatmul.bf16.gmra.mxu0 %v1045
    %v1149 = vpop.f32.mrf.mxu0
    %v1150 = vadd.f32 0.0, %v1149
    %v1151 = vpop.f32.mrf.mxu0
    %v1152 = vadd.f32 0.0, %v1151
    %1153 = vmatmul.bf16.gmra.mxu0 %v1048
    %v1154 = vpop.f32.mrf.mxu0
    %v1155 = vadd.f32 0.0, %v1154
    %v1156 = vpop.f32.mrf.mxu0
    %v1157 = vadd.f32 0.0, %v1156
    %1158 = vmatmul.bf16.gmra.mxu0 %v1051
    %v1159 = vpop.f32.mrf.mxu0
    %v1160 = vadd.f32 0.0, %v1159
    %v1161 = vpop.f32.mrf.mxu0
    %v1162 = vadd.f32 0.0, %v1161
    %1163 = vmatmul.bf16.gmra.mxu0 %v1054
    %v1164 = vpop.f32.mrf.mxu0
    %v1165 = vadd.f32 0.0, %v1164
    %v1166 = vpop.f32.mrf.mxu0
    %v1167 = vadd.f32 0.0, %v1166
    %1168 = vmatmul.bf16.gmra.mxu0 %v1057
    %v1169 = vpop.f32.mrf.mxu0
    %v1170 = vadd.f32 0.0, %v1169
    %v1171 = vpop.f32.mrf.mxu0
    %v1172 = vadd.f32 0.0, %v1171
    %1173 = vmatmul.bf16.gmra.mxu0 %v1060
    %v1174 = vpop.f32.mrf.mxu0
    %v1175 = vadd.f32 0.0, %v1174
    %v1176 = vpop.f32.mrf.mxu0
    %v1177 = vadd.f32 0.0, %v1176
    %1178 = vmatmul.bf16.gmra.mxu0 %v1063
    %v1179 = vpop.f32.mrf.mxu0
    %v1180 = vadd.f32 0.0, %v1179
    %v1181 = vpop.f32.mrf.mxu0
    %v1182 = vadd.f32 0.0, %v1181
    %1183 = vmatmul.bf16.gmra.mxu0 %v1066
    %v1184 = vpop.f32.mrf.mxu0
    %v1185 = vadd.f32 0.0, %v1184
    %v1186 = vpop.f32.mrf.mxu0
    %v1187 = vadd.f32 0.0, %v1186
    %1188 = vmatmul.bf16.gmra.mxu0 %v1069
    %v1189 = vpop.f32.mrf.mxu0
    %v1190 = vadd.f32 0.0, %v1189
    %v1191 = vpop.f32.mrf.mxu0
    %v1192 = vadd.f32 0.0, %v1191
    %1193 = vmatmul.bf16.gmra.mxu0 %v1072
    %v1194 = vpop.f32.mrf.mxu0
    %v1195 = vadd.f32 0.0, %v1194
    %v1196 = vpop.f32.mrf.mxu0
    %v1197 = vadd.f32 0.0, %v1196
    %1198 = vmatmul.bf16.gmra.mxu0 %v1075
    %v1199 = vpop.f32.mrf.mxu0
    %v1200 = vadd.f32 0.0, %v1199
    %v1201 = vpop.f32.mrf.mxu0
    %v1202 = vadd.f32 0.0, %v1201
    %1203 = vmatmul.bf16.gmra.mxu0 %v1078
    %v1204 = vpop.f32.mrf.mxu0
    %v1205 = vadd.f32 0.0, %v1204
    %v1206 = vpop.f32.mrf.mxu0
    %v1207 = vadd.f32 0.0, %v1206
    %1208 = vdwg.mxu0
    %v1209 = vld [vmem:[%s0 + $0x120] sm:$0xf]
    %v1210 = vld [vmem:[%s0 + $0x124] sm:$0xf]
    %v1211 = vld [vmem:[%s0 + $0x128] sm:$0xf]
    %v1212 = vld [vmem:[%s0 + $0x12c] sm:$0xf]
    %v1213 = vld [vmem:[%s0 + $0x130] sm:$0xf]
    %v1214 = vld [vmem:[%s0 + $0x134] sm:$0xf]
    %v1215 = vld [vmem:[%s0 + $0x138] sm:$0xf]
    %v1216 = vld [vmem:[%s0 + $0x13c] sm:$0xf]
    %v1217 = vld [vmem:[%s0 + $0x140] sm:$0xf]
    %v1218 = vld [vmem:[%s0 + $0x144] sm:$0xf]
    %v1219 = vld [vmem:[%s0 + $0x148] sm:$0xf]
    %v1220 = vld [vmem:[%s0 + $0x14c] sm:$0xf]
    %v1221 = vld [vmem:[%s0 + $0x150] sm:$0xf]
    %v1222 = vld [vmem:[%s0 + $0x154] sm:$0xf]
    %v1223 = vld [vmem:[%s0 + $0x158] sm:$0xf]
    %v1224 = vld [vmem:[%s0 + $0x15c] sm:$0xf]
    %v1225 = vld [vmem:[%s0 + $0x160] sm:$0xf]
    %v1226 = vld [vmem:[%s0 + $0x164] sm:$0xf]
    %v1227 = vld [vmem:[%s0 + $0x168] sm:$0xf]
    %v1228 = vld [vmem:[%s0 + $0x16c] sm:$0xf]
    %v1229 = vld [vmem:[%s0 + $0x170] sm:$0xf]
    %v1230 = vld [vmem:[%s0 + $0x174] sm:$0xf]
    %v1231 = vld [vmem:[%s0 + $0x178] sm:$0xf]
    %v1232 = vld [vmem:[%s0 + $0x17c] sm:$0xf]
    %v1233 = vld [vmem:[%s0 + $0x2a0] sm:$0xf]
    %v1234 = vld [vmem:[%s0 + $0x2a4] sm:$0xf]
    %v1235 = vld [vmem:[%s0 + $0x2a8] sm:$0xf]
    %v1236 = vld [vmem:[%s0 + $0x2ac] sm:$0xf]
    %v1237 = vld [vmem:[%s0 + $0x2b0] sm:$0xf]
    %v1238 = vld [vmem:[%s0 + $0x2b4] sm:$0xf]
    %v1239 = vld [vmem:[%s0 + $0x2b8] sm:$0xf]
    %v1240 = vld [vmem:[%s0 + $0x2bc] sm:$0xf]
    %v1241 = vld [vmem:[%s0 + $0x2c0] sm:$0xf]
    %v1242 = vld [vmem:[%s0 + $0x2c4] sm:$0xf]
    %v1243 = vld [vmem:[%s0 + $0x2c8] sm:$0xf]
    %v1244 = vld [vmem:[%s0 + $0x2cc] sm:$0xf]
    %v1245 = vld [vmem:[%s0 + $0x2d0] sm:$0xf]
    %v1246 = vld [vmem:[%s0 + $0x2d4] sm:$0xf]
    %v1247 = vld [vmem:[%s0 + $0x2d8] sm:$0xf]
    %v1248 = vld [vmem:[%s0 + $0x2dc] sm:$0xf]
    %v1249 = vld [vmem:[%s0 + $0x2e0] sm:$0xf]
    %v1250 = vld [vmem:[%s0 + $0x2e4] sm:$0xf]
    %v1251 = vld [vmem:[%s0 + $0x2e8] sm:$0xf]
    %v1252 = vld [vmem:[%s0 + $0x2ec] sm:$0xf]
    %v1253 = vld [vmem:[%s0 + $0x2f0] sm:$0xf]
    %v1254 = vld [vmem:[%s0 + $0x2f4] sm:$0xf]
    %v1255 = vld [vmem:[%s0 + $0x2f8] sm:$0xf]
    %v1256 = vld [vmem:[%s0 + $0x2fc] sm:$0xf]
    %v1305 = vunpack.c.l.b16 %v1209
    %v1306 = vunpack.c.l.b16 %v1210
    %v1307 = vunpack.c.l.b16 %v1211
    %v1308 = vunpack.c.l.b16 %v1212
    %v1309 = vunpack.c.l.b16 %v1213
    %v1310 = vunpack.c.l.b16 %v1214
    %v1311 = vunpack.c.l.b16 %v1215
    %v1312 = vunpack.c.l.b16 %v1216
    %v1313 = vunpack.c.l.b16 %v1217
    %v1314 = vunpack.c.l.b16 %v1218
    %v1315 = vunpack.c.l.b16 %v1219
    %v1316 = vunpack.c.l.b16 %v1220
    %v1317 = vunpack.c.l.b16 %v1221
    %v1318 = vunpack.c.l.b16 %v1222
    %v1319 = vunpack.c.l.b16 %v1223
    %v1320 = vunpack.c.l.b16 %v1224
    %v1321 = vunpack.c.l.b16 %v1225
    %v1322 = vunpack.c.l.b16 %v1226
    %v1323 = vunpack.c.l.b16 %v1227
    %v1324 = vunpack.c.l.b16 %v1228
    %v1325 = vunpack.c.l.b16 %v1229
    %v1326 = vunpack.c.l.b16 %v1230
    %v1327 = vunpack.c.l.b16 %v1231
    %v1328 = vunpack.c.l.b16 %v1232
    %v1329 = vunpack.c.l.b16 %v1233
    %v1330 = vunpack.c.l.b16 %v1234
    %v1331 = vunpack.c.l.b16 %v1235
    %v1332 = vunpack.c.l.b16 %v1236
    %v1333 = vunpack.c.l.b16 %v1237
    %v1334 = vunpack.c.l.b16 %v1238
    %v1335 = vunpack.c.l.b16 %v1239
    %v1336 = vunpack.c.l.b16 %v1240
    %v1337 = vunpack.c.l.b16 %v1241
    %v1338 = vunpack.c.l.b16 %v1242
    %v1339 = vunpack.c.l.b16 %v1243
    %v1340 = vunpack.c.l.b16 %v1244
    %v1341 = vunpack.c.l.b16 %v1245
    %v1342 = vunpack.c.l.b16 %v1246
    %v1343 = vunpack.c.l.b16 %v1247
    %v1344 = vunpack.c.l.b16 %v1248
    %v1345 = vunpack.c.l.b16 %v1249
    %v1346 = vunpack.c.l.b16 %v1250
    %v1347 = vunpack.c.l.b16 %v1251
    %v1348 = vunpack.c.l.b16 %v1252
    %v1349 = vunpack.c.l.b16 %v1253
    %v1350 = vunpack.c.l.b16 %v1254
    %v1351 = vunpack.c.l.b16 %v1255
    %v1352 = vunpack.c.l.b16 %v1256
    %v1353 = vpack.c.b16 %v1306, %v1305
    %v1354 = vpack.c.b16 %v1308, %v1307
    %v1355 = vpack.c.b16 %v1310, %v1309
    %v1356 = vpack.c.b16 %v1312, %v1311
    %v1357 = vpack.c.b16 %v1314, %v1313
    %v1358 = vpack.c.b16 %v1316, %v1315
    %v1359 = vpack.c.b16 %v1318, %v1317
    %v1360 = vpack.c.b16 %v1320, %v1319
    %v1361 = vpack.c.b16 %v1322, %v1321
    %v1362 = vpack.c.b16 %v1324, %v1323
    %v1363 = vpack.c.b16 %v1326, %v1325
    %v1364 = vpack.c.b16 %v1328, %v1327
    %v1365 = vpack.c.b16 %v1330, %v1329
    %v1366 = vpack.c.b16 %v1332, %v1331
    %v1367 = vpack.c.b16 %v1334, %v1333
    %v1368 = vpack.c.b16 %v1336, %v1335
    %v1369 = vpack.c.b16 %v1338, %v1337
    %v1370 = vpack.c.b16 %v1340, %v1339
    %v1371 = vpack.c.b16 %v1342, %v1341
    %v1372 = vpack.c.b16 %v1344, %v1343
    %v1373 = vpack.c.b16 %v1346, %v1345
    %v1374 = vpack.c.b16 %v1348, %v1347
    %v1375 = vpack.c.b16 %v1350, %v1349
    %v1376 = vpack.c.b16 %v1352, %v1351
    %v1378 = vsel %vm221, %v1353, 0
    %v1381 = vsel %vm221, %v1354, 0
    %v1384 = vsel %vm221, %v1355, 0
    %v1387 = vsel %vm221, %v1356, 0
    %v1390 = vsel %vm221, %v1357, 0
    %v1393 = vsel %vm221, %v1358, 0
    %v1396 = vsel %vm221, %v1359, 0
    %v1399 = vsel %vm221, %v1360, 0
    %v1402 = vsel %vm221, %v1361, 0
    %v1405 = vsel %vm221, %v1362, 0
    %v1408 = vsel %vm221, %v1363, 0
    %v1411 = vsel %vm221, %v1364, 0
    %v1414 = vsel %vm221, %v1365, 0
    %v1417 = vsel %vm221, %v1366, 0
    %v1420 = vsel %vm221, %v1367, 0
    %v1423 = vsel %vm221, %v1368, 0
    %v1426 = vsel %vm221, %v1369, 0
    %v1429 = vsel %vm221, %v1370, 0
    %v1432 = vsel %vm221, %v1371, 0
    %v1435 = vsel %vm221, %v1372, 0
    %v1438 = vsel %vm221, %v1373, 0
    %v1441 = vsel %vm221, %v1374, 0
    %v1444 = vsel %vm221, %v1375, 0
    %v1447 = vsel %vm221, %v1376, 0
    %1449 = vmatpush.bf16.msra.mxu0 0
    %1450 = vmatpush.bf16.msra.mxu0 0
    %1451 = vmatpush.bf16.msra.mxu0 0
    %1452 = vmatpush.bf16.msra.mxu0 0
    %1453 = vmatpush.bf16.msra.mxu0 0
    %1454 = vmatpush.bf16.msra.mxu0 0
    %1455 = vmatpush.bf16.msra.mxu0 %v218
    %1456 = vmatpush.bf16.msra.mxu0 %v217
    %1457 = vmatmul.bf16.gmra.mxu0 %v1378
    %v1458 = vpop.f32.mrf.mxu0
    %v1459 = vadd.f32 0.0, %v1458
    %v1460 = vpop.f32.mrf.mxu0
    %v1461 = vadd.f32 0.0, %v1460
    %1462 = vmatmul.bf16.gmra.mxu0 %v1381
    %v1463 = vpop.f32.mrf.mxu0
    %v1464 = vadd.f32 0.0, %v1463
    %v1465 = vpop.f32.mrf.mxu0
    %v1466 = vadd.f32 0.0, %v1465
    %1467 = vmatmul.bf16.gmra.mxu0 %v1384
    %v1468 = vpop.f32.mrf.mxu0
    %v1469 = vadd.f32 0.0, %v1468
    %v1470 = vpop.f32.mrf.mxu0
    %v1471 = vadd.f32 0.0, %v1470
    %1472 = vmatmul.bf16.gmra.mxu0 %v1387
    %v1473 = vpop.f32.mrf.mxu0
    %v1474 = vadd.f32 0.0, %v1473
    %v1475 = vpop.f32.mrf.mxu0
    %v1476 = vadd.f32 0.0, %v1475
    %1477 = vmatmul.bf16.gmra.mxu0 %v1390
    %v1478 = vpop.f32.mrf.mxu0
    %v1479 = vadd.f32 0.0, %v1478
    %v1480 = vpop.f32.mrf.mxu0
    %v1481 = vadd.f32 0.0, %v1480
    %1482 = vmatmul.bf16.gmra.mxu0 %v1393
    %v1483 = vpop.f32.mrf.mxu0
    %v1484 = vadd.f32 0.0, %v1483
    %v1485 = vpop.f32.mrf.mxu0
    %v1486 = vadd.f32 0.0, %v1485
    %1487 = vmatmul.bf16.gmra.mxu0 %v1396
    %v1488 = vpop.f32.mrf.mxu0
    %v1489 = vadd.f32 0.0, %v1488
    %v1490 = vpop.f32.mrf.mxu0
    %v1491 = vadd.f32 0.0, %v1490
    %1492 = vmatmul.bf16.gmra.mxu0 %v1399
    %v1493 = vpop.f32.mrf.mxu0
    %v1494 = vadd.f32 0.0, %v1493
    %v1495 = vpop.f32.mrf.mxu0
    %v1496 = vadd.f32 0.0, %v1495
    %1497 = vmatmul.bf16.gmra.mxu0 %v1402
    %v1498 = vpop.f32.mrf.mxu0
    %v1499 = vadd.f32 0.0, %v1498
    %v1500 = vpop.f32.mrf.mxu0
    %v1501 = vadd.f32 0.0, %v1500
    %1502 = vmatmul.bf16.gmra.mxu0 %v1405
    %v1503 = vpop.f32.mrf.mxu0
    %v1504 = vadd.f32 0.0, %v1503
    %v1505 = vpop.f32.mrf.mxu0
    %v1506 = vadd.f32 0.0, %v1505
    %1507 = vmatmul.bf16.gmra.mxu0 %v1408
    %v1508 = vpop.f32.mrf.mxu0
    %v1509 = vadd.f32 0.0, %v1508
    %v1510 = vpop.f32.mrf.mxu0
    %v1511 = vadd.f32 0.0, %v1510
    %1512 = vmatmul.bf16.gmra.mxu0 %v1411
    %v1513 = vpop.f32.mrf.mxu0
    %v1514 = vadd.f32 0.0, %v1513
    %v1515 = vpop.f32.mrf.mxu0
    %v1516 = vadd.f32 0.0, %v1515
    %1517 = vmatmul.bf16.gmra.mxu0 %v1414
    %v1518 = vpop.f32.mrf.mxu0
    %v1519 = vadd.f32 0.0, %v1518
    %v1520 = vpop.f32.mrf.mxu0
    %v1521 = vadd.f32 0.0, %v1520
    %1522 = vmatmul.bf16.gmra.mxu0 %v1417
    %v1523 = vpop.f32.mrf.mxu0
    %v1524 = vadd.f32 0.0, %v1523
    %v1525 = vpop.f32.mrf.mxu0
    %v1526 = vadd.f32 0.0, %v1525
    %1527 = vmatmul.bf16.gmra.mxu0 %v1420
    %v1528 = vpop.f32.mrf.mxu0
    %v1529 = vadd.f32 0.0, %v1528
    %v1530 = vpop.f32.mrf.mxu0
    %v1531 = vadd.f32 0.0, %v1530
    %1532 = vmatmul.bf16.gmra.mxu0 %v1423
    %v1533 = vpop.f32.mrf.mxu0
    %v1534 = vadd.f32 0.0, %v1533
    %v1535 = vpop.f32.mrf.mxu0
    %v1536 = vadd.f32 0.0, %v1535
    %1537 = vmatmul.bf16.gmra.mxu0 %v1426
    %v1538 = vpop.f32.mrf.mxu0
    %v1539 = vadd.f32 0.0, %v1538
    %v1540 = vpop.f32.mrf.mxu0
    %v1541 = vadd.f32 0.0, %v1540
    %1542 = vmatmul.bf16.gmra.mxu0 %v1429
    %v1543 = vpop.f32.mrf.mxu0
    %v1544 = vadd.f32 0.0, %v1543
    %v1545 = vpop.f32.mrf.mxu0
    %v1546 = vadd.f32 0.0, %v1545
    %1547 = vmatmul.bf16.gmra.mxu0 %v1432
    %v1548 = vpop.f32.mrf.mxu0
    %v1549 = vadd.f32 0.0, %v1548
    %v1550 = vpop.f32.mrf.mxu0
    %v1551 = vadd.f32 0.0, %v1550
    %1552 = vmatmul.bf16.gmra.mxu0 %v1435
    %v1553 = vpop.f32.mrf.mxu0
    %v1554 = vadd.f32 0.0, %v1553
    %v1555 = vpop.f32.mrf.mxu0
    %v1556 = vadd.f32 0.0, %v1555
    %1557 = vmatmul.bf16.gmra.mxu0 %v1438
    %v1558 = vpop.f32.mrf.mxu0
    %v1559 = vadd.f32 0.0, %v1558
    %v1560 = vpop.f32.mrf.mxu0
    %v1561 = vadd.f32 0.0, %v1560
    %1562 = vmatmul.bf16.gmra.mxu0 %v1441
    %v1563 = vpop.f32.mrf.mxu0
    %v1564 = vadd.f32 0.0, %v1563
    %v1565 = vpop.f32.mrf.mxu0
    %v1566 = vadd.f32 0.0, %v1565
    %1567 = vmatmul.bf16.gmra.mxu0 %v1444
    %v1568 = vpop.f32.mrf.mxu0
    %v1569 = vadd.f32 0.0, %v1568
    %v1570 = vpop.f32.mrf.mxu0
    %v1571 = vadd.f32 0.0, %v1570
    %1572 = vmatmul.bf16.gmra.mxu0 %v1447
    %v1573 = vpop.f32.mrf.mxu0
    %v1574 = vadd.f32 0.0, %v1573
    %v1575 = vpop.f32.mrf.mxu0
    %v1576 = vadd.f32 0.0, %v1575
    %1577 = vdwg.mxu0
    %v1578 = vmax.f32 %v1090, %v1459
    %v1579 = vmax.f32 %v1092, %v1461
    %v1580 = vmax.f32 %v1095, %v1464
    %v1581 = vmax.f32 %v1097, %v1466
    %v1582 = vmax.f32 %v1100, %v1469
    %v1583 = vmax.f32 %v1102, %v1471
    %v1584 = vmax.f32 %v1105, %v1474
    %v1585 = vmax.f32 %v1107, %v1476
    %v1586 = vmax.f32 %v1110, %v1479
    %v1587 = vmax.f32 %v1112, %v1481
    %v1588 = vmax.f32 %v1115, %v1484
    %v1589 = vmax.f32 %v1117, %v1486
    %v1590 = vmax.f32 %v1120, %v1489
    %v1591 = vmax.f32 %v1122, %v1491
    %v1592 = vmax.f32 %v1125, %v1494
    %v1593 = vmax.f32 %v1127, %v1496
    %v1594 = vmax.f32 %v1130, %v1499
    %v1595 = vmax.f32 %v1132, %v1501
    %v1596 = vmax.f32 %v1135, %v1504
    %v1597 = vmax.f32 %v1137, %v1506
    %v1598 = vmax.f32 %v1140, %v1509
    %v1599 = vmax.f32 %v1142, %v1511
    %v1600 = vmax.f32 %v1145, %v1514
    %v1601 = vmax.f32 %v1147, %v1516
    %v1602 = vmax.f32 %v1150, %v1519
    %v1603 = vmax.f32 %v1152, %v1521
    %v1604 = vmax.f32 %v1155, %v1524
    %v1605 = vmax.f32 %v1157, %v1526
    %v1606 = vmax.f32 %v1160, %v1529
    %v1607 = vmax.f32 %v1162, %v1531
    %v1608 = vmax.f32 %v1165, %v1534
    %v1609 = vmax.f32 %v1167, %v1536
    %v1610 = vmax.f32 %v1170, %v1539
    %v1611 = vmax.f32 %v1172, %v1541
    %v1612 = vmax.f32 %v1175, %v1544
    %v1613 = vmax.f32 %v1177, %v1546
    %v1614 = vmax.f32 %v1180, %v1549
    %v1615 = vmax.f32 %v1182, %v1551
    %v1616 = vmax.f32 %v1185, %v1554
    %v1617 = vmax.f32 %v1187, %v1556
    %v1618 = vmax.f32 %v1190, %v1559
    %v1619 = vmax.f32 %v1192, %v1561
    %v1620 = vmax.f32 %v1195, %v1564
    %v1621 = vmax.f32 %v1197, %v1566
    %v1622 = vmax.f32 %v1200, %v1569
    %v1623 = vmax.f32 %v1202, %v1571
    %v1624 = vmax.f32 %v1205, %v1574
    %v1625 = vmax.f32 %v1207, %v1576
    %v1626 = vmax.f32 %v792, %v1578
    %v1627 = vmax.f32 %v793, %v1579
    %v1628 = vmax.f32 %v794, %v1580
    %v1629 = vmax.f32 %v795, %v1581
    %v1630 = vmax.f32 %v796, %v1582
    %v1631 = vmax.f32 %v797, %v1583
    %v1632 = vmax.f32 %v798, %v1584
    %v1633 = vmax.f32 %v799, %v1585
    %v1634 = vmax.f32 %v800, %v1586
    %v1635 = vmax.f32 %v801, %v1587
    %v1636 = vmax.f32 %v802, %v1588
    %v1637 = vmax.f32 %v803, %v1589
    %v1638 = vmax.f32 %v804, %v1590
    %v1639 = vmax.f32 %v805, %v1591
    %v1640 = vmax.f32 %v806, %v1592
    %v1641 = vmax.f32 %v807, %v1593
    %v1642 = vmax.f32 %v808, %v1594
    %v1643 = vmax.f32 %v809, %v1595
    %v1644 = vmax.f32 %v810, %v1596
    %v1645 = vmax.f32 %v811, %v1597
    %v1646 = vmax.f32 %v812, %v1598
    %v1647 = vmax.f32 %v813, %v1599
    %v1648 = vmax.f32 %v814, %v1600
    %v1649 = vmax.f32 %v815, %v1601
    %v1650 = vmax.f32 %v816, %v1602
    %v1651 = vmax.f32 %v817, %v1603
    %v1652 = vmax.f32 %v818, %v1604
    %v1653 = vmax.f32 %v819, %v1605
    %v1654 = vmax.f32 %v820, %v1606
    %v1655 = vmax.f32 %v821, %v1607
    %v1656 = vmax.f32 %v822, %v1608
    %v1657 = vmax.f32 %v823, %v1609
    %v1658 = vmax.f32 %v824, %v1610
    %v1659 = vmax.f32 %v825, %v1611
    %v1660 = vmax.f32 %v826, %v1612
    %v1661 = vmax.f32 %v827, %v1613
    %v1662 = vmax.f32 %v828, %v1614
    %v1663 = vmax.f32 %v829, %v1615
    %v1664 = vmax.f32 %v830, %v1616
    %v1665 = vmax.f32 %v831, %v1617
    %v1666 = vmax.f32 %v832, %v1618
    %v1667 = vmax.f32 %v833, %v1619
    %v1668 = vmax.f32 %v834, %v1620
    %v1669 = vmax.f32 %v835, %v1621
    %v1670 = vmax.f32 %v836, %v1622
    %v1671 = vmax.f32 %v837, %v1623
    %v1672 = vmax.f32 %v838, %v1624
    %v1673 = vmax.f32 %v839, %v1625
    %v1674 = vld [vmem:[%s2] sm:$0x1]
    %v1676 = vperm.slane %v1674, 0
    %v1678 = vadd.f32 %v1626, %v1676
    %v1679 = vadd.f32 %v1627, %v1676
    %v1680 = vadd.f32 %v1628, %v1676
    %v1681 = vadd.f32 %v1629, %v1676
    %v1682 = vadd.f32 %v1630, %v1676
    %v1683 = vadd.f32 %v1631, %v1676
    %v1684 = vadd.f32 %v1632, %v1676
    %v1685 = vadd.f32 %v1633, %v1676
    %v1686 = vadd.f32 %v1634, %v1676
    %v1687 = vadd.f32 %v1635, %v1676
    %v1688 = vadd.f32 %v1636, %v1676
    %v1689 = vadd.f32 %v1637, %v1676
    %v1690 = vadd.f32 %v1638, %v1676
    %v1691 = vadd.f32 %v1639, %v1676
    %v1692 = vadd.f32 %v1640, %v1676
    %v1693 = vadd.f32 %v1641, %v1676
    %v1694 = vadd.f32 %v1642, %v1676
    %v1695 = vadd.f32 %v1643, %v1676
    %v1696 = vadd.f32 %v1644, %v1676
    %v1697 = vadd.f32 %v1645, %v1676
    %v1698 = vadd.f32 %v1646, %v1676
    %v1699 = vadd.f32 %v1647, %v1676
    %v1700 = vadd.f32 %v1648, %v1676
    %v1701 = vadd.f32 %v1649, %v1676
    %v1702 = vadd.f32 %v1650, %v1676
    %v1703 = vadd.f32 %v1651, %v1676
    %v1704 = vadd.f32 %v1652, %v1676
    %v1705 = vadd.f32 %v1653, %v1676
    %v1706 = vadd.f32 %v1654, %v1676
    %v1707 = vadd.f32 %v1655, %v1676
    %v1708 = vadd.f32 %v1656, %v1676
    %v1709 = vadd.f32 %v1657, %v1676
    %v1710 = vadd.f32 %v1658, %v1676
    %v1711 = vadd.f32 %v1659, %v1676
    %v1712 = vadd.f32 %v1660, %v1676
    %v1713 = vadd.f32 %v1661, %v1676
    %v1714 = vadd.f32 %v1662, %v1676
    %v1715 = vadd.f32 %v1663, %v1676
    %v1716 = vadd.f32 %v1664, %v1676
    %v1717 = vadd.f32 %v1665, %v1676
    %v1718 = vadd.f32 %v1666, %v1676
    %v1719 = vadd.f32 %v1667, %v1676
    %v1720 = vadd.f32 %v1668, %v1676
    %v1721 = vadd.f32 %v1669, %v1676
    %v1722 = vadd.f32 %v1670, %v1676
    %v1723 = vadd.f32 %v1671, %v1676
    %v1724 = vadd.f32 %v1672, %v1676
    %v1725 = vadd.f32 %v1673, %v1676
    %v1726 = vmax.f32 %v1678, 0.0
    %v1727 = vmax.f32 %v1679, 0.0
    %v1728 = vmax.f32 %v1680, 0.0
    %v1729 = vmax.f32 %v1681, 0.0
    %v1730 = vmax.f32 %v1682, 0.0
    %v1731 = vmax.f32 %v1683, 0.0
    %v1732 = vmax.f32 %v1684, 0.0
    %v1733 = vmax.f32 %v1685, 0.0
    %v1734 = vmax.f32 %v1686, 0.0
    %v1735 = vmax.f32 %v1687, 0.0
    %v1736 = vmax.f32 %v1688, 0.0
    %v1737 = vmax.f32 %v1689, 0.0
    %v1738 = vmax.f32 %v1690, 0.0
    %v1739 = vmax.f32 %v1691, 0.0
    %v1740 = vmax.f32 %v1692, 0.0
    %v1741 = vmax.f32 %v1693, 0.0
    %v1742 = vmax.f32 %v1694, 0.0
    %v1743 = vmax.f32 %v1695, 0.0
    %v1744 = vmax.f32 %v1696, 0.0
    %v1745 = vmax.f32 %v1697, 0.0
    %v1746 = vmax.f32 %v1698, 0.0
    %v1747 = vmax.f32 %v1699, 0.0
    %v1748 = vmax.f32 %v1700, 0.0
    %v1749 = vmax.f32 %v1701, 0.0
    %v1750 = vmax.f32 %v1702, 0.0
    %v1751 = vmax.f32 %v1703, 0.0
    %v1752 = vmax.f32 %v1704, 0.0
    %v1753 = vmax.f32 %v1705, 0.0
    %v1754 = vmax.f32 %v1706, 0.0
    %v1755 = vmax.f32 %v1707, 0.0
    %v1756 = vmax.f32 %v1708, 0.0
    %v1757 = vmax.f32 %v1709, 0.0
    %v1758 = vmax.f32 %v1710, 0.0
    %v1759 = vmax.f32 %v1711, 0.0
    %v1760 = vmax.f32 %v1712, 0.0
    %v1761 = vmax.f32 %v1713, 0.0
    %v1762 = vmax.f32 %v1714, 0.0
    %v1763 = vmax.f32 %v1715, 0.0
    %v1764 = vmax.f32 %v1716, 0.0
    %v1765 = vmax.f32 %v1717, 0.0
    %v1766 = vmax.f32 %v1718, 0.0
    %v1767 = vmax.f32 %v1719, 0.0
    %v1768 = vmax.f32 %v1720, 0.0
    %v1769 = vmax.f32 %v1721, 0.0
    %v1770 = vmax.f32 %v1722, 0.0
    %v1771 = vmax.f32 %v1723, 0.0
    %v1772 = vmax.f32 %v1724, 0.0
    %v1773 = vmax.f32 %v1725, 0.0
    %v1774 = vpack.c.bf16 %v1726, %v1726
    %v1775 = vpack.c.bf16 %v1727, %v1727
    %v1776 = vpack.c.bf16 %v1728, %v1728
    %v1777 = vpack.c.bf16 %v1729, %v1729
    %v1778 = vpack.c.bf16 %v1730, %v1730
    %v1779 = vpack.c.bf16 %v1731, %v1731
    %v1780 = vpack.c.bf16 %v1732, %v1732
    %v1781 = vpack.c.bf16 %v1733, %v1733
    %v1782 = vpack.c.bf16 %v1734, %v1734
    %v1783 = vpack.c.bf16 %v1735, %v1735
    %v1784 = vpack.c.bf16 %v1736, %v1736
    %v1785 = vpack.c.bf16 %v1737, %v1737
    %v1786 = vpack.c.bf16 %v1738, %v1738
    %v1787 = vpack.c.bf16 %v1739, %v1739
    %v1788 = vpack.c.bf16 %v1740, %v1740
    %v1789 = vpack.c.bf16 %v1741, %v1741
    %v1790 = vpack.c.bf16 %v1742, %v1742
    %v1791 = vpack.c.bf16 %v1743, %v1743
    %v1792 = vpack.c.bf16 %v1744, %v1744
    %v1793 = vpack.c.bf16 %v1745, %v1745
    %v1794 = vpack.c.bf16 %v1746, %v1746
    %v1795 = vpack.c.bf16 %v1747, %v1747
    %v1796 = vpack.c.bf16 %v1748, %v1748
    %v1797 = vpack.c.bf16 %v1749, %v1749
    %v1798 = vpack.c.bf16 %v1750, %v1750
    %v1799 = vpack.c.bf16 %v1751, %v1751
    %v1800 = vpack.c.bf16 %v1752, %v1752
    %v1801 = vpack.c.bf16 %v1753, %v1753
    %v1802 = vpack.c.bf16 %v1754, %v1754
    %v1803 = vpack.c.bf16 %v1755, %v1755
    %v1804 = vpack.c.bf16 %v1756, %v1756
    %v1805 = vpack.c.bf16 %v1757, %v1757
    %v1806 = vpack.c.bf16 %v1758, %v1758
    %v1807 = vpack.c.bf16 %v1759, %v1759
    %v1808 = vpack.c.bf16 %v1760, %v1760
    %v1809 = vpack.c.bf16 %v1761, %v1761
    %v1810 = vpack.c.bf16 %v1762, %v1762
    %v1811 = vpack.c.bf16 %v1763, %v1763
    %v1812 = vpack.c.bf16 %v1764, %v1764
    %v1813 = vpack.c.bf16 %v1765, %v1765
    %v1814 = vpack.c.bf16 %v1766, %v1766
    %v1815 = vpack.c.bf16 %v1767, %v1767
    %v1816 = vpack.c.bf16 %v1768, %v1768
    %v1817 = vpack.c.bf16 %v1769, %v1769
    %v1818 = vpack.c.bf16 %v1770, %v1770
    %v1819 = vpack.c.bf16 %v1771, %v1771
    %v1820 = vpack.c.bf16 %v1772, %v1772
    %v1821 = vpack.c.bf16 %v1773, %v1773
    %1822 = vst [vmem:[#allocation2] sm:$0xf] %v1774
    %1823 = vst [vmem:[#allocation2 + $0x4] sm:$0xf] %v1775
    %1824 = vst [vmem:[#allocation2 + $0x8] sm:$0xf] %v1776
    %1825 = vst [vmem:[#allocation2 + $0xc] sm:$0xf] %v1777
    %1826 = vst [vmem:[#allocation2 + $0x10] sm:$0xf] %v1778
    %1827 = vst [vmem:[#allocation2 + $0x14] sm:$0xf] %v1779
    %1828 = vst [vmem:[#allocation2 + $0x18] sm:$0xf] %v1780
    %1829 = vst [vmem:[#allocation2 + $0x1c] sm:$0xf] %v1781
    %1830 = vst [vmem:[#allocation2 + $0x20] sm:$0xf] %v1782
    %1831 = vst [vmem:[#allocation2 + $0x24] sm:$0xf] %v1783
    %1832 = vst [vmem:[#allocation2 + $0x28] sm:$0xf] %v1784
    %1833 = vst [vmem:[#allocation2 + $0x2c] sm:$0xf] %v1785
    %1834 = vst [vmem:[#allocation2 + $0x30] sm:$0xf] %v1786
    %1835 = vst [vmem:[#allocation2 + $0x34] sm:$0xf] %v1787
    %1836 = vst [vmem:[#allocation2 + $0x38] sm:$0xf] %v1788
    %1837 = vst [vmem:[#allocation2 + $0x3c] sm:$0xf] %v1789
    %1838 = vst [vmem:[#allocation2 + $0x40] sm:$0xf] %v1790
    %1839 = vst [vmem:[#allocation2 + $0x44] sm:$0xf] %v1791
    %1840 = vst [vmem:[#allocation2 + $0x48] sm:$0xf] %v1792
    %1841 = vst [vmem:[#allocation2 + $0x4c] sm:$0xf] %v1793
    %1842 = vst [vmem:[#allocation2 + $0x50] sm:$0xf] %v1794
    %1843 = vst [vmem:[#allocation2 + $0x54] sm:$0xf] %v1795
    %1844 = vst [vmem:[#allocation2 + $0x58] sm:$0xf] %v1796
    %1845 = vst [vmem:[#allocation2 + $0x5c] sm:$0xf] %v1797
    %1846 = vst [vmem:[#allocation2 + $0x60] sm:$0xf] %v1798
    %1847 = vst [vmem:[#allocation2 + $0x64] sm:$0xf] %v1799
    %1848 = vst [vmem:[#allocation2 + $0x68] sm:$0xf] %v1800
    %1849 = vst [vmem:[#allocation2 + $0x6c] sm:$0xf] %v1801
    %1850 = vst [vmem:[#allocation2 + $0x70] sm:$0xf] %v1802
    %1851 = vst [vmem:[#allocation2 + $0x74] sm:$0xf] %v1803
    %1852 = vst [vmem:[#allocation2 + $0x78] sm:$0xf] %v1804
    %1853 = vst [vmem:[#allocation2 + $0x7c] sm:$0xf] %v1805
    %1854 = vst [vmem:[#allocation2 + $0x80] sm:$0xf] %v1806
    %1855 = vst [vmem:[#allocation2 + $0x84] sm:$0xf] %v1807
    %1856 = vst [vmem:[#allocation2 + $0x88] sm:$0xf] %v1808
    %1857 = vst [vmem:[#allocation2 + $0x8c] sm:$0xf] %v1809
    %1858 = vst [vmem:[#allocation2 + $0x90] sm:$0xf] %v1810
    %1859 = vst [vmem:[#allocation2 + $0x94] sm:$0xf] %v1811
    %1860 = vst [vmem:[#allocation2 + $0x98] sm:$0xf] %v1812
    %1861 = vst [vmem:[#allocation2 + $0x9c] sm:$0xf] %v1813
    %1862 = vst [vmem:[#allocation2 + $0xa0] sm:$0xf] %v1814
    %1863 = vst [vmem:[#allocation2 + $0xa4] sm:$0xf] %v1815
    %1864 = vst [vmem:[#allocation2 + $0xa8] sm:$0xf] %v1816
    %1865 = vst [vmem:[#allocation2 + $0xac] sm:$0xf] %v1817
    %1866 = vst [vmem:[#allocation2 + $0xb0] sm:$0xf] %v1818
    %1867 = vst [vmem:[#allocation2 + $0xb4] sm:$0xf] %v1819
    %1868 = vst [vmem:[#allocation2 + $0xb8] sm:$0xf] %v1820
    %1869 = vst [vmem:[#allocation2 + $0xbc] sm:$0xf] %v1821
    %v1870 = vld [vmem:[#allocation2] sm:$0xf]
    %v1871 = vld [vmem:[#allocation2 + $0x4] sm:$0xf]
    %v1872 = vld [vmem:[#allocation2 + $0x8] sm:$0xf]
    %v1873 = vld [vmem:[#allocation2 + $0xc] sm:$0xf]
    %v1874 = vld [vmem:[#allocation2 + $0x10] sm:$0xf]
    %v1875 = vld [vmem:[#allocation2 + $0x14] sm:$0xf]
    %v1876 = vld [vmem:[#allocation2 + $0x18] sm:$0xf]
    %v1877 = vld [vmem:[#allocation2 + $0x1c] sm:$0xf]
    %v1878 = vld [vmem:[#allocation2 + $0x20] sm:$0xf]
    %v1879 = vld [vmem:[#allocation2 + $0x24] sm:$0xf]
    %v1880 = vld [vmem:[#allocation2 + $0x28] sm:$0xf]
    %v1881 = vld [vmem:[#allocation2 + $0x2c] sm:$0xf]
    %v1882 = vld [vmem:[#allocation2 + $0x30] sm:$0xf]
    %v1883 = vld [vmem:[#allocation2 + $0x34] sm:$0xf]
    %v1884 = vld [vmem:[#allocation2 + $0x38] sm:$0xf]
    %v1885 = vld [vmem:[#allocation2 + $0x3c] sm:$0xf]
    %v1886 = vld [vmem:[#allocation2 + $0x60] sm:$0xf]
    %v1887 = vld [vmem:[#allocation2 + $0x64] sm:$0xf]
    %v1888 = vld [vmem:[#allocation2 + $0x68] sm:$0xf]
    %v1889 = vld [vmem:[#allocation2 + $0x6c] sm:$0xf]
    %v1890 = vld [vmem:[#allocation2 + $0x70] sm:$0xf]
    %v1891 = vld [vmem:[#allocation2 + $0x74] sm:$0xf]
    %v1892 = vld [vmem:[#allocation2 + $0x78] sm:$0xf]
    %v1893 = vld [vmem:[#allocation2 + $0x7c] sm:$0xf]
    %v1894 = vld [vmem:[#allocation2 + $0x80] sm:$0xf]
    %v1895 = vld [vmem:[#allocation2 + $0x84] sm:$0xf]
    %v1896 = vld [vmem:[#allocation2 + $0x88] sm:$0xf]
    %v1897 = vld [vmem:[#allocation2 + $0x8c] sm:$0xf]
    %v1898 = vld [vmem:[#allocation2 + $0x90] sm:$0xf]
    %v1899 = vld [vmem:[#allocation2 + $0x94] sm:$0xf]
    %v1900 = vld [vmem:[#allocation2 + $0x98] sm:$0xf]
    %v1901 = vld [vmem:[#allocation2 + $0x9c] sm:$0xf]
    %v1902 = vld [vmem:[%s3] sm:$0xf]
    %v1903 = vld [vmem:[%s3 + $0x4] sm:$0xf]
    %v1904 = vld [vmem:[%s3 + $0x8] sm:$0xf]
    %v1905 = vld [vmem:[%s3 + $0xc] sm:$0xf]
    %v1906 = vld [vmem:[%s3 + $0x10] sm:$0xf]
    %v1907 = vld [vmem:[%s3 + $0x14] sm:$0xf]
    %v1908 = vld [vmem:[%s3 + $0x18] sm:$0xf]
    %v1909 = vld [vmem:[%s3 + $0x1c] sm:$0xf]
    %v1910 = vld [vmem:[%s3 + $0x20] sm:$0xf]
    %v1911 = vld [vmem:[%s3 + $0x24] sm:$0xf]
    %v1912 = vld [vmem:[%s3 + $0x28] sm:$0xf]
    %v1913 = vld [vmem:[%s3 + $0x2c] sm:$0xf]
    %v1914 = vld [vmem:[%s3 + $0x30] sm:$0xf]
    %v1915 = vld [vmem:[%s3 + $0x34] sm:$0xf]
    %v1916 = vld [vmem:[%s3 + $0x38] sm:$0xf]
    %v1917 = vld [vmem:[%s3 + $0x3c] sm:$0xf]
    %v1950 = vunpack.c.l.b16 %v1870
    %v1951 = vunpack.c.l.b16 %v1871
    %v1952 = vunpack.c.l.b16 %v1872
    %v1953 = vunpack.c.l.b16 %v1873
    %v1954 = vunpack.c.l.b16 %v1874
    %v1955 = vunpack.c.l.b16 %v1875
    %v1956 = vunpack.c.l.b16 %v1876
    %v1957 = vunpack.c.l.b16 %v1877
    %v1958 = vunpack.c.l.b16 %v1878
    %v1959 = vunpack.c.l.b16 %v1879
    %v1960 = vunpack.c.l.b16 %v1880
    %v1961 = vunpack.c.l.b16 %v1881
    %v1962 = vunpack.c.l.b16 %v1882
    %v1963 = vunpack.c.l.b16 %v1883
    %v1964 = vunpack.c.l.b16 %v1884
    %v1965 = vunpack.c.l.b16 %v1885
    %v1966 = vunpack.c.l.b16 %v1886
    %v1967 = vunpack.c.l.b16 %v1887
    %v1968 = vunpack.c.l.b16 %v1888
    %v1969 = vunpack.c.l.b16 %v1889
    %v1970 = vunpack.c.l.b16 %v1890
    %v1971 = vunpack.c.l.b16 %v1891
    %v1972 = vunpack.c.l.b16 %v1892
    %v1973 = vunpack.c.l.b16 %v1893
    %v1974 = vunpack.c.l.b16 %v1894
    %v1975 = vunpack.c.l.b16 %v1895
    %v1976 = vunpack.c.l.b16 %v1896
    %v1977 = vunpack.c.l.b16 %v1897
    %v1978 = vunpack.c.l.b16 %v1898
    %v1979 = vunpack.c.l.b16 %v1899
    %v1980 = vunpack.c.l.b16 %v1900
    %v1981 = vunpack.c.l.b16 %v1901
    %v1982 = vpack.c.b16 %v1951, %v1950
    %v1983 = vpack.c.b16 %v1953, %v1952
    %v1984 = vpack.c.b16 %v1955, %v1954
    %v1985 = vpack.c.b16 %v1957, %v1956
    %v1986 = vpack.c.b16 %v1959, %v1958
    %v1987 = vpack.c.b16 %v1961, %v1960
    %v1988 = vpack.c.b16 %v1963, %v1962
    %v1989 = vpack.c.b16 %v1965, %v1964
    %v1990 = vpack.c.b16 %v1967, %v1966
    %v1991 = vpack.c.b16 %v1969, %v1968
    %v1992 = vpack.c.b16 %v1971, %v1970
    %v1993 = vpack.c.b16 %v1973, %v1972
    %v1994 = vpack.c.b16 %v1975, %v1974
    %v1995 = vpack.c.b16 %v1977, %v1976
    %v1996 = vpack.c.b16 %v1979, %v1978
    %v1997 = vpack.c.b16 %v1981, %v1980
    %v2030 = vunpack.c.l.b16 %v1902
    %v2031 = vunpack.c.l.b16 %v1903
    %v2032 = vunpack.c.l.b16 %v1904
    %v2033 = vunpack.c.l.b16 %v1905
    %v2034 = vunpack.c.l.b16 %v1906
    %v2035 = vunpack.c.l.b16 %v1907
    %v2036 = vunpack.c.l.b16 %v1908
    %v2037 = vunpack.c.l.b16 %v1909
    %v2038 = vunpack.c.l.b16 %v1910
    %v2039 = vunpack.c.l.b16 %v1911
    %v2040 = vunpack.c.l.b16 %v1912
    %v2041 = vunpack.c.l.b16 %v1913
    %v2042 = vunpack.c.l.b16 %v1914
    %v2043 = vunpack.c.l.b16 %v1915
    %v2044 = vunpack.c.l.b16 %v1916
    %v2045 = vunpack.c.l.b16 %v1917
    %v2046 = vpack.c.b16 %v2031, %v2030
    %v2047 = vpack.c.b16 %v2033, %v2032
    %v2048 = vpack.c.b16 %v2035, %v2034
    %v2049 = vpack.c.b16 %v2037, %v2036
    %v2050 = vpack.c.b16 %v2039, %v2038
    %v2051 = vpack.c.b16 %v2041, %v2040
    %v2052 = vpack.c.b16 %v2043, %v2042
    %v2053 = vpack.c.b16 %v2045, %v2044
    %2062 = vmatpush.bf16.msra.mxu0 %v2053
    %2063 = vmatpush.bf16.msra.mxu0 %v2052
    %2064 = vmatpush.bf16.msra.mxu0 %v2051
    %2065 = vmatpush.bf16.msra.mxu0 %v2050
    %2066 = vmatpush.bf16.msra.mxu0 %v2049
    %2067 = vmatpush.bf16.msra.mxu0 %v2048
    %2068 = vmatpush.bf16.msra.mxu0 %v2047
    %2069 = vmatpush.bf16.msra.mxu0 %v2046
    %2070 = vmatmul.bf16.gmra.mxu0 %v1982
    %v2071 = vpop.f32.mrf.mxu0
    %v2072 = vadd.f32 0.0, %v2071
    %v2073 = vpop.f32.mrf.mxu0
    %v2074 = vadd.f32 0.0, %v2073
    %2075 = vmatmul.bf16.gmra.mxu0 %v1983
    %v2076 = vpop.f32.mrf.mxu0
    %v2077 = vadd.f32 0.0, %v2076
    %v2078 = vpop.f32.mrf.mxu0
    %v2079 = vadd.f32 0.0, %v2078
    %2080 = vmatmul.bf16.gmra.mxu0 %v1984
    %v2081 = vpop.f32.mrf.mxu0
    %v2082 = vadd.f32 0.0, %v2081
    %v2083 = vpop.f32.mrf.mxu0
    %v2084 = vadd.f32 0.0, %v2083
    %2085 = vmatmul.bf16.gmra.mxu0 %v1985
    %v2086 = vpop.f32.mrf.mxu0
    %v2087 = vadd.f32 0.0, %v2086
    %v2088 = vpop.f32.mrf.mxu0
    %v2089 = vadd.f32 0.0, %v2088
    %2090 = vmatmul.bf16.gmra.mxu0 %v1986
    %v2091 = vpop.f32.mrf.mxu0
    %v2092 = vadd.f32 0.0, %v2091
    %v2093 = vpop.f32.mrf.mxu0
    %v2094 = vadd.f32 0.0, %v2093
    %2095 = vmatmul.bf16.gmra.mxu0 %v1987
    %v2096 = vpop.f32.mrf.mxu0
    %v2097 = vadd.f32 0.0, %v2096
    %v2098 = vpop.f32.mrf.mxu0
    %v2099 = vadd.f32 0.0, %v2098
    %2100 = vmatmul.bf16.gmra.mxu0 %v1988
    %v2101 = vpop.f32.mrf.mxu0
    %v2102 = vadd.f32 0.0, %v2101
    %v2103 = vpop.f32.mrf.mxu0
    %v2104 = vadd.f32 0.0, %v2103
    %2105 = vmatmul.bf16.gmra.mxu0 %v1989
    %v2106 = vpop.f32.mrf.mxu0
    %v2107 = vadd.f32 0.0, %v2106
    %v2108 = vpop.f32.mrf.mxu0
    %v2109 = vadd.f32 0.0, %v2108
    %2110 = vmatmul.bf16.gmra.mxu0 %v1990
    %v2111 = vpop.f32.mrf.mxu0
    %v2112 = vadd.f32 0.0, %v2111
    %v2113 = vpop.f32.mrf.mxu0
    %v2114 = vadd.f32 0.0, %v2113
    %2115 = vmatmul.bf16.gmra.mxu0 %v1991
    %v2116 = vpop.f32.mrf.mxu0
    %v2117 = vadd.f32 0.0, %v2116
    %v2118 = vpop.f32.mrf.mxu0
    %v2119 = vadd.f32 0.0, %v2118
    %2120 = vmatmul.bf16.gmra.mxu0 %v1992
    %v2121 = vpop.f32.mrf.mxu0
    %v2122 = vadd.f32 0.0, %v2121
    %v2123 = vpop.f32.mrf.mxu0
    %v2124 = vadd.f32 0.0, %v2123
    %2125 = vmatmul.bf16.gmra.mxu0 %v1993
    %v2126 = vpop.f32.mrf.mxu0
    %v2127 = vadd.f32 0.0, %v2126
    %v2128 = vpop.f32.mrf.mxu0
    %v2129 = vadd.f32 0.0, %v2128
    %2130 = vmatmul.bf16.gmra.mxu0 %v1994
    %v2131 = vpop.f32.mrf.mxu0
    %v2132 = vadd.f32 0.0, %v2131
    %v2133 = vpop.f32.mrf.mxu0
    %v2134 = vadd.f32 0.0, %v2133
    %2135 = vmatmul.bf16.gmra.mxu0 %v1995
    %v2136 = vpop.f32.mrf.mxu0
    %v2137 = vadd.f32 0.0, %v2136
    %v2138 = vpop.f32.mrf.mxu0
    %v2139 = vadd.f32 0.0, %v2138
    %2140 = vmatmul.bf16.gmra.mxu0 %v1996
    %v2141 = vpop.f32.mrf.mxu0
    %v2142 = vadd.f32 0.0, %v2141
    %v2143 = vpop.f32.mrf.mxu0
    %v2144 = vadd.f32 0.0, %v2143
    %2145 = vmatmul.bf16.gmra.mxu0 %v1997
    %v2146 = vpop.f32.mrf.mxu0
    %v2147 = vadd.f32 0.0, %v2146
    %v2148 = vpop.f32.mrf.mxu0
    %v2149 = vadd.f32 0.0, %v2148
    %2150 = vdwg.mxu0
    %2151 = vst [vmem:[#allocation3] sm:$0xff] %v2072
    %2152 = vst [vmem:[#allocation3 + $0x8] sm:$0xff] %v2074
    %2153 = vst [vmem:[#allocation3 + $0x10] sm:$0xff] %v2077
    %2154 = vst [vmem:[#allocation3 + $0x18] sm:$0xff] %v2079
    %2155 = vst [vmem:[#allocation3 + $0x20] sm:$0xff] %v2082
    %2156 = vst [vmem:[#allocation3 + $0x28] sm:$0xff] %v2084
    %2157 = vst [vmem:[#allocation3 + $0x30] sm:$0xff] %v2087
    %2158 = vst [vmem:[#allocation3 + $0x38] sm:$0xff] %v2089
    %2159 = vst [vmem:[#allocation3 + $0x40] sm:$0xff] %v2092
    %2160 = vst [vmem:[#allocation3 + $0x48] sm:$0xff] %v2094
    %2161 = vst [vmem:[#allocation3 + $0x50] sm:$0xff] %v2097
    %2162 = vst [vmem:[#allocation3 + $0x58] sm:$0xff] %v2099
    %2163 = vst [vmem:[#allocation3 + $0x60] sm:$0xff] %v2102
    %2164 = vst [vmem:[#allocation3 + $0x68] sm:$0xff] %v2104
    %2165 = vst [vmem:[#allocation3 + $0x70] sm:$0xff] %v2107
    %2166 = vst [vmem:[#allocation3 + $0x78] sm:$0xff] %v2109
    %2167 = vst [vmem:[#allocation3 + $0x80] sm:$0xff] %v2112
    %2168 = vst [vmem:[#allocation3 + $0x88] sm:$0xff] %v2114
    %2169 = vst [vmem:[#allocation3 + $0x90] sm:$0xff] %v2117
    %2170 = vst [vmem:[#allocation3 + $0x98] sm:$0xff] %v2119
    %2171 = vst [vmem:[#allocation3 + $0xa0] sm:$0xff] %v2122
    %2172 = vst [vmem:[#allocation3 + $0xa8] sm:$0xff] %v2124
    %2173 = vst [vmem:[#allocation3 + $0xb0] sm:$0xff] %v2127
    %2174 = vst [vmem:[#allocation3 + $0xb8] sm:$0xff] %v2129
    %2175 = vst [vmem:[#allocation3 + $0xc0] sm:$0xff] %v2132
    %2176 = vst [vmem:[#allocation3 + $0xc8] sm:$0xff] %v2134
    %2177 = vst [vmem:[#allocation3 + $0xd0] sm:$0xff] %v2137
    %2178 = vst [vmem:[#allocation3 + $0xd8] sm:$0xff] %v2139
    %2179 = vst [vmem:[#allocation3 + $0xe0] sm:$0xff] %v2142
    %2180 = vst [vmem:[#allocation3 + $0xe8] sm:$0xff] %v2144
    %2181 = vst [vmem:[#allocation3 + $0xf0] sm:$0xff] %v2147
    %2182 = vst [vmem:[#allocation3 + $0xf8] sm:$0xff] %v2149
    %v2183 = vld [vmem:[#allocation2 + $0x8] sm:$0xf]
    %v2184 = vld [vmem:[#allocation2 + $0xc] sm:$0xf]
    %v2185 = vld [vmem:[#allocation2 + $0x10] sm:$0xf]
    %v2186 = vld [vmem:[#allocation2 + $0x14] sm:$0xf]
    %v2187 = vld [vmem:[#allocation2 + $0x18] sm:$0xf]
    %v2188 = vld [vmem:[#allocation2 + $0x1c] sm:$0xf]
    %v2189 = vld [vmem:[#allocation2 + $0x20] sm:$0xf]
    %v2190 = vld [vmem:[#allocation2 + $0x24] sm:$0xf]
    %v2191 = vld [vmem:[#allocation2 + $0x28] sm:$0xf]
    %v2192 = vld [vmem:[#allocation2 + $0x2c] sm:$0xf]
    %v2193 = vld [vmem:[#allocation2 + $0x30] sm:$0xf]
    %v2194 = vld [vmem:[#allocation2 + $0x34] sm:$0xf]
    %v2195 = vld [vmem:[#allocation2 + $0x38] sm:$0xf]
    %v2196 = vld [vmem:[#allocation2 + $0x3c] sm:$0xf]
    %v2197 = vld [vmem:[#allocation2 + $0x40] sm:$0xf]
    %v2198 = vld [vmem:[#allocation2 + $0x44] sm:$0xf]
    %v2199 = vld [vmem:[#allocation2 + $0x68] sm:$0xf]
    %v2200 = vld [vmem:[#allocation2 + $0x6c] sm:$0xf]
    %v2201 = vld [vmem:[#allocation2 + $0x70] sm:$0xf]
    %v2202 = vld [vmem:[#allocation2 + $0x74] sm:$0xf]
    %v2203 = vld [vmem:[#allocation2 + $0x78] sm:$0xf]
    %v2204 = vld [vmem:[#allocation2 + $0x7c] sm:$0xf]
    %v2205 = vld [vmem:[#allocation2 + $0x80] sm:$0xf]
    %v2206 = vld [vmem:[#allocation2 + $0x84] sm:$0xf]
    %v2207 = vld [vmem:[#allocation2 + $0x88] sm:$0xf]
    %v2208 = vld [vmem:[#allocation2 + $0x8c] sm:$0xf]
    %v2209 = vld [vmem:[#allocation2 + $0x90] sm:$0xf]
    %v2210 = vld [vmem:[#allocation2 + $0x94] sm:$0xf]
    %v2211 = vld [vmem:[#allocation2 + $0x98] sm:$0xf]
    %v2212 = vld [vmem:[#allocation2 + $0x9c] sm:$0xf]
    %v2213 = vld [vmem:[#allocation2 + $0xa0] sm:$0xf]
    %v2214 = vld [vmem:[#allocation2 + $0xa4] sm:$0xf]
    %s2215 = scalar_lea.vmem %s3, 64
    %v2216 = vld [vmem:[%s2215] sm:$0xf]
    %v2217 = vld [vmem:[%s2215 + $0x4] sm:$0xf]
    %v2218 = vld [vmem:[%s2215 + $0x8] sm:$0xf]
    %v2219 = vld [vmem:[%s2215 + $0xc] sm:$0xf]
    %v2220 = vld [vmem:[%s2215 + $0x10] sm:$0xf]
    %v2221 = vld [vmem:[%s2215 + $0x14] sm:$0xf]
    %v2222 = vld [vmem:[%s2215 + $0x18] sm:$0xf]
    %v2223 = vld [vmem:[%s2215 + $0x1c] sm:$0xf]
    %v2224 = vld [vmem:[%s2215 + $0x20] sm:$0xf]
    %v2225 = vld [vmem:[%s2215 + $0x24] sm:$0xf]
    %v2226 = vld [vmem:[%s2215 + $0x28] sm:$0xf]
    %v2227 = vld [vmem:[%s2215 + $0x2c] sm:$0xf]
    %v2228 = vld [vmem:[%s2215 + $0x30] sm:$0xf]
    %v2229 = vld [vmem:[%s2215 + $0x34] sm:$0xf]
    %v2230 = vld [vmem:[%s2215 + $0x38] sm:$0xf]
    %v2231 = vld [vmem:[%s2215 + $0x3c] sm:$0xf]
    %v2264 = vunpack.c.l.b16 %v2183
    %v2265 = vunpack.c.l.b16 %v2184
    %v2266 = vunpack.c.l.b16 %v2185
    %v2267 = vunpack.c.l.b16 %v2186
    %v2268 = vunpack.c.l.b16 %v2187
    %v2269 = vunpack.c.l.b16 %v2188
    %v2270 = vunpack.c.l.b16 %v2189
    %v2271 = vunpack.c.l.b16 %v2190
    %v2272 = vunpack.c.l.b16 %v2191
    %v2273 = vunpack.c.l.b16 %v2192
    %v2274 = vunpack.c.l.b16 %v2193
    %v2275 = vunpack.c.l.b16 %v2194
    %v2276 = vunpack.c.l.b16 %v2195
    %v2277 = vunpack.c.l.b16 %v2196
    %v2278 = vunpack.c.l.b16 %v2197
    %v2279 = vunpack.c.l.b16 %v2198
    %v2280 = vunpack.c.l.b16 %v2199
    %v2281 = vunpack.c.l.b16 %v2200
    %v2282 = vunpack.c.l.b16 %v2201
    %v2283 = vunpack.c.l.b16 %v2202
    %v2284 = vunpack.c.l.b16 %v2203
    %v2285 = vunpack.c.l.b16 %v2204
    %v2286 = vunpack.c.l.b16 %v2205
    %v2287 = vunpack.c.l.b16 %v2206
    %v2288 = vunpack.c.l.b16 %v2207
    %v2289 = vunpack.c.l.b16 %v2208
    %v2290 = vunpack.c.l.b16 %v2209
    %v2291 = vunpack.c.l.b16 %v2210
    %v2292 = vunpack.c.l.b16 %v2211
    %v2293 = vunpack.c.l.b16 %v2212
    %v2294 = vunpack.c.l.b16 %v2213
    %v2295 = vunpack.c.l.b16 %v2214
    %v2296 = vpack.c.b16 %v2265, %v2264
    %v2297 = vpack.c.b16 %v2267, %v2266
    %v2298 = vpack.c.b16 %v2269, %v2268
    %v2299 = vpack.c.b16 %v2271, %v2270
    %v2300 = vpack.c.b16 %v2273, %v2272
    %v2301 = vpack.c.b16 %v2275, %v2274
    %v2302 = vpack.c.b16 %v2277, %v2276
    %v2303 = vpack.c.b16 %v2279, %v2278
    %v2304 = vpack.c.b16 %v2281, %v2280
    %v2305 = vpack.c.b16 %v2283, %v2282
    %v2306 = vpack.c.b16 %v2285, %v2284
    %v2307 = vpack.c.b16 %v2287, %v2286
    %v2308 = vpack.c.b16 %v2289, %v2288
    %v2309 = vpack.c.b16 %v2291, %v2290
    %v2310 = vpack.c.b16 %v2293, %v2292
    %v2311 = vpack.c.b16 %v2295, %v2294
    %v2344 = vunpack.c.l.b16 %v2216
    %v2345 = vunpack.c.l.b16 %v2217
    %v2346 = vunpack.c.l.b16 %v2218
    %v2347 = vunpack.c.l.b16 %v2219
    %v2348 = vunpack.c.l.b16 %v2220
    %v2349 = vunpack.c.l.b16 %v2221
    %v2350 = vunpack.c.l.b16 %v2222
    %v2351 = vunpack.c.l.b16 %v2223
    %v2352 = vunpack.c.l.b16 %v2224
    %v2353 = vunpack.c.l.b16 %v2225
    %v2354 = vunpack.c.l.b16 %v2226
    %v2355 = vunpack.c.l.b16 %v2227
    %v2356 = vunpack.c.l.b16 %v2228
    %v2357 = vunpack.c.l.b16 %v2229
    %v2358 = vunpack.c.l.b16 %v2230
    %v2359 = vunpack.c.l.b16 %v2231
    %v2360 = vpack.c.b16 %v2345, %v2344
    %v2361 = vpack.c.b16 %v2347, %v2346
    %v2362 = vpack.c.b16 %v2349, %v2348
    %v2363 = vpack.c.b16 %v2351, %v2350
    %v2364 = vpack.c.b16 %v2353, %v2352
    %v2365 = vpack.c.b16 %v2355, %v2354
    %v2366 = vpack.c.b16 %v2357, %v2356
    %v2367 = vpack.c.b16 %v2359, %v2358
    %2376 = vmatpush.bf16.msra.mxu0 %v2367
    %2377 = vmatpush.bf16.msra.mxu0 %v2366
    %2378 = vmatpush.bf16.msra.mxu0 %v2365
    %2379 = vmatpush.bf16.msra.mxu0 %v2364
    %2380 = vmatpush.bf16.msra.mxu0 %v2363
    %2381 = vmatpush.bf16.msra.mxu0 %v2362
    %2382 = vmatpush.bf16.msra.mxu0 %v2361
    %2383 = vmatpush.bf16.msra.mxu0 %v2360
    %2384 = vmatmul.bf16.gmra.mxu0 %v2296
    %v2385 = vpop.f32.mrf.mxu0
    %v2386 = vadd.f32 0.0, %v2385
    %v2387 = vpop.f32.mrf.mxu0
    %v2388 = vadd.f32 0.0, %v2387
    %2389 = vmatmul.bf16.gmra.mxu0 %v2297
    %v2390 = vpop.f32.mrf.mxu0
    %v2391 = vadd.f32 0.0, %v2390
    %v2392 = vpop.f32.mrf.mxu0
    %v2393 = vadd.f32 0.0, %v2392
    %2394 = vmatmul.bf16.gmra.mxu0 %v2298
    %v2395 = vpop.f32.mrf.mxu0
    %v2396 = vadd.f32 0.0, %v2395
    %v2397 = vpop.f32.mrf.mxu0
    %v2398 = vadd.f32 0.0, %v2397
    %2399 = vmatmul.bf16.gmra.mxu0 %v2299
    %v2400 = vpop.f32.mrf.mxu0
    %v2401 = vadd.f32 0.0, %v2400
    %v2402 = vpop.f32.mrf.mxu0
    %v2403 = vadd.f32 0.0, %v2402
    %2404 = vmatmul.bf16.gmra.mxu0 %v2300
    %v2405 = vpop.f32.mrf.mxu0
    %v2406 = vadd.f32 0.0, %v2405
    %v2407 = vpop.f32.mrf.mxu0
    %v2408 = vadd.f32 0.0, %v2407
    %2409 = vmatmul.bf16.gmra.mxu0 %v2301
    %v2410 = vpop.f32.mrf.mxu0
    %v2411 = vadd.f32 0.0, %v2410
    %v2412 = vpop.f32.mrf.mxu0
    %v2413 = vadd.f32 0.0, %v2412
    %2414 = vmatmul.bf16.gmra.mxu0 %v2302
    %v2415 = vpop.f32.mrf.mxu0
    %v2416 = vadd.f32 0.0, %v2415
    %v2417 = vpop.f32.mrf.mxu0
    %v2418 = vadd.f32 0.0, %v2417
    %2419 = vmatmul.bf16.gmra.mxu0 %v2303
    %v2420 = vpop.f32.mrf.mxu0
    %v2421 = vadd.f32 0.0, %v2420
    %v2422 = vpop.f32.mrf.mxu0
    %v2423 = vadd.f32 0.0, %v2422
    %2424 = vmatmul.bf16.gmra.mxu0 %v2304
    %v2425 = vpop.f32.mrf.mxu0
    %v2426 = vadd.f32 0.0, %v2425
    %v2427 = vpop.f32.mrf.mxu0
    %v2428 = vadd.f32 0.0, %v2427
    %2429 = vmatmul.bf16.gmra.mxu0 %v2305
    %v2430 = vpop.f32.mrf.mxu0
    %v2431 = vadd.f32 0.0, %v2430
    %v2432 = vpop.f32.mrf.mxu0
    %v2433 = vadd.f32 0.0, %v2432
    %2434 = vmatmul.bf16.gmra.mxu0 %v2306
    %v2435 = vpop.f32.mrf.mxu0
    %v2436 = vadd.f32 0.0, %v2435
    %v2437 = vpop.f32.mrf.mxu0
    %v2438 = vadd.f32 0.0, %v2437
    %2439 = vmatmul.bf16.gmra.mxu0 %v2307
    %v2440 = vpop.f32.mrf.mxu0
    %v2441 = vadd.f32 0.0, %v2440
    %v2442 = vpop.f32.mrf.mxu0
    %v2443 = vadd.f32 0.0, %v2442
    %2444 = vmatmul.bf16.gmra.mxu0 %v2308
    %v2445 = vpop.f32.mrf.mxu0
    %v2446 = vadd.f32 0.0, %v2445
    %v2447 = vpop.f32.mrf.mxu0
    %v2448 = vadd.f32 0.0, %v2447
    %2449 = vmatmul.bf16.gmra.mxu0 %v2309
    %v2450 = vpop.f32.mrf.mxu0
    %v2451 = vadd.f32 0.0, %v2450
    %v2452 = vpop.f32.mrf.mxu0
    %v2453 = vadd.f32 0.0, %v2452
    %2454 = vmatmul.bf16.gmra.mxu0 %v2310
    %v2455 = vpop.f32.mrf.mxu0
    %v2456 = vadd.f32 0.0, %v2455
    %v2457 = vpop.f32.mrf.mxu0
    %v2458 = vadd.f32 0.0, %v2457
    %2459 = vmatmul.bf16.gmra.mxu0 %v2311
    %v2460 = vpop.f32.mrf.mxu0
    %v2461 = vadd.f32 0.0, %v2460
    %v2462 = vpop.f32.mrf.mxu0
    %v2463 = vadd.f32 0.0, %v2462
    %2464 = vdwg.mxu0
    %v2465 = vld [vmem:[#allocation3] sm:$0xff]
    %v2466 = vld [vmem:[#allocation3 + $0x8] sm:$0xff]
    %v2467 = vld [vmem:[#allocation3 + $0x10] sm:$0xff]
    %v2468 = vld [vmem:[#allocation3 + $0x18] sm:$0xff]
    %v2469 = vld [vmem:[#allocation3 + $0x20] sm:$0xff]
    %v2470 = vld [vmem:[#allocation3 + $0x28] sm:$0xff]
    %v2471 = vld [vmem:[#allocation3 + $0x30] sm:$0xff]
    %v2472 = vld [vmem:[#allocation3 + $0x38] sm:$0xff]
    %v2473 = vld [vmem:[#allocation3 + $0x40] sm:$0xff]
    %v2474 = vld [vmem:[#allocation3 + $0x48] sm:$0xff]
    %v2475 = vld [vmem:[#allocation3 + $0x50] sm:$0xff]
    %v2476 = vld [vmem:[#allocation3 + $0x58] sm:$0xff]
    %v2477 = vld [vmem:[#allocation3 + $0x60] sm:$0xff]
    %v2478 = vld [vmem:[#allocation3 + $0x68] sm:$0xff]
    %v2479 = vld [vmem:[#allocation3 + $0x70] sm:$0xff]
    %v2480 = vld [vmem:[#allocation3 + $0x78] sm:$0xff]
    %v2481 = vld [vmem:[#allocation3 + $0x80] sm:$0xff]
    %v2482 = vld [vmem:[#allocation3 + $0x88] sm:$0xff]
    %v2483 = vld [vmem:[#allocation3 + $0x90] sm:$0xff]
    %v2484 = vld [vmem:[#allocation3 + $0x98] sm:$0xff]
    %v2485 = vld [vmem:[#allocation3 + $0xa0] sm:$0xff]
    %v2486 = vld [vmem:[#allocation3 + $0xa8] sm:$0xff]
    %v2487 = vld [vmem:[#allocation3 + $0xb0] sm:$0xff]
    %v2488 = vld [vmem:[#allocation3 + $0xb8] sm:$0xff]
    %v2489 = vld [vmem:[#allocation3 + $0xc0] sm:$0xff]
    %v2490 = vld [vmem:[#allocation3 + $0xc8] sm:$0xff]
    %v2491 = vld [vmem:[#allocation3 + $0xd0] sm:$0xff]
    %v2492 = vld [vmem:[#allocation3 + $0xd8] sm:$0xff]
    %v2493 = vld [vmem:[#allocation3 + $0xe0] sm:$0xff]
    %v2494 = vld [vmem:[#allocation3 + $0xe8] sm:$0xff]
    %v2495 = vld [vmem:[#allocation3 + $0xf0] sm:$0xff]
    %v2496 = vld [vmem:[#allocation3 + $0xf8] sm:$0xff]
    %v2497 = vadd.f32 %v2465, %v2386
    %v2498 = vadd.f32 %v2466, %v2388
    %v2499 = vadd.f32 %v2467, %v2391
    %v2500 = vadd.f32 %v2468, %v2393
    %v2501 = vadd.f32 %v2469, %v2396
    %v2502 = vadd.f32 %v2470, %v2398
    %v2503 = vadd.f32 %v2471, %v2401
    %v2504 = vadd.f32 %v2472, %v2403
    %v2505 = vadd.f32 %v2473, %v2406
    %v2506 = vadd.f32 %v2474, %v2408
    %v2507 = vadd.f32 %v2475, %v2411
    %v2508 = vadd.f32 %v2476, %v2413
    %v2509 = vadd.f32 %v2477, %v2416
    %v2510 = vadd.f32 %v2478, %v2418
    %v2511 = vadd.f32 %v2479, %v2421
    %v2512 = vadd.f32 %v2480, %v2423
    %v2513 = vadd.f32 %v2481, %v2426
    %v2514 = vadd.f32 %v2482, %v2428
    %v2515 = vadd.f32 %v2483, %v2431
    %v2516 = vadd.f32 %v2484, %v2433
    %v2517 = vadd.f32 %v2485, %v2436
    %v2518 = vadd.f32 %v2486, %v2438
    %v2519 = vadd.f32 %v2487, %v2441
    %v2520 = vadd.f32 %v2488, %v2443
    %v2521 = vadd.f32 %v2489, %v2446
    %v2522 = vadd.f32 %v2490, %v2448
    %v2523 = vadd.f32 %v2491, %v2451
    %v2524 = vadd.f32 %v2492, %v2453
    %v2525 = vadd.f32 %v2493, %v2456
    %v2526 = vadd.f32 %v2494, %v2458
    %v2527 = vadd.f32 %v2495, %v2461
    %v2528 = vadd.f32 %v2496, %v2463
    %2529 = vst [vmem:[#allocation3] sm:$0xff] %v2497
    %2530 = vst [vmem:[#allocation3 + $0x8] sm:$0xff] %v2498
    %2531 = vst [vmem:[#allocation3 + $0x10] sm:$0xff] %v2499
    %2532 = vst [vmem:[#allocation3 + $0x18] sm:$0xff] %v2500
    %2533 = vst [vmem:[#allocation3 + $0x20] sm:$0xff] %v2501
    %2534 = vst [vmem:[#allocation3 + $0x28] sm:$0xff] %v2502
    %2535 = vst [vmem:[#allocation3 + $0x30] sm:$0xff] %v2503
    %2536 = vst [vmem:[#allocation3 + $0x38] sm:$0xff] %v2504
    %2537 = vst [vmem:[#allocation3 + $0x40] sm:$0xff] %v2505
    %2538 = vst [vmem:[#allocation3 + $0x48] sm:$0xff] %v2506
    %2539 = vst [vmem:[#allocation3 + $0x50] sm:$0xff] %v2507
    %2540 = vst [vmem:[#allocation3 + $0x58] sm:$0xff] %v2508
    %2541 = vst [vmem:[#allocation3 + $0x60] sm:$0xff] %v2509
    %2542 = vst [vmem:[#allocation3 + $0x68] sm:$0xff] %v2510
    %2543 = vst [vmem:[#allocation3 + $0x70] sm:$0xff] %v2511
    %2544 = vst [vmem:[#allocation3 + $0x78] sm:$0xff] %v2512
    %2545 = vst [vmem:[#allocation3 + $0x80] sm:$0xff] %v2513
    %2546 = vst [vmem:[#allocation3 + $0x88] sm:$0xff] %v2514
    %2547 = vst [vmem:[#allocation3 + $0x90] sm:$0xff] %v2515
    %2548 = vst [vmem:[#allocation3 + $0x98] sm:$0xff] %v2516
    %2549 = vst [vmem:[#allocation3 + $0xa0] sm:$0xff] %v2517
    %2550 = vst [vmem:[#allocation3 + $0xa8] sm:$0xff] %v2518
    %2551 = vst [vmem:[#allocation3 + $0xb0] sm:$0xff] %v2519
    %2552 = vst [vmem:[#allocation3 + $0xb8] sm:$0xff] %v2520
    %2553 = vst [vmem:[#allocation3 + $0xc0] sm:$0xff] %v2521
    %2554 = vst [vmem:[#allocation3 + $0xc8] sm:$0xff] %v2522
    %2555 = vst [vmem:[#allocation3 + $0xd0] sm:$0xff] %v2523
    %2556 = vst [vmem:[#allocation3 + $0xd8] sm:$0xff] %v2524
    %2557 = vst [vmem:[#allocation3 + $0xe0] sm:$0xff] %v2525
    %2558 = vst [vmem:[#allocation3 + $0xe8] sm:$0xff] %v2526
    %2559 = vst [vmem:[#allocation3 + $0xf0] sm:$0xff] %v2527
    %2560 = vst [vmem:[#allocation3 + $0xf8] sm:$0xff] %v2528
    %v2561 = vld [vmem:[#allocation2 + $0x10] sm:$0xf]
    %v2562 = vld [vmem:[#allocation2 + $0x14] sm:$0xf]
    %v2563 = vld [vmem:[#allocation2 + $0x18] sm:$0xf]
    %v2564 = vld [vmem:[#allocation2 + $0x1c] sm:$0xf]
    %v2565 = vld [vmem:[#allocation2 + $0x20] sm:$0xf]
    %v2566 = vld [vmem:[#allocation2 + $0x24] sm:$0xf]
    %v2567 = vld [vmem:[#allocation2 + $0x28] sm:$0xf]
    %v2568 = vld [vmem:[#allocation2 + $0x2c] sm:$0xf]
    %v2569 = vld [vmem:[#allocation2 + $0x30] sm:$0xf]
    %v2570 = vld [vmem:[#allocation2 + $0x34] sm:$0xf]
    %v2571 = vld [vmem:[#allocation2 + $0x38] sm:$0xf]
    %v2572 = vld [vmem:[#allocation2 + $0x3c] sm:$0xf]
    %v2573 = vld [vmem:[#allocation2 + $0x40] sm:$0xf]
    %v2574 = vld [vmem:[#allocation2 + $0x44] sm:$0xf]
    %v2575 = vld [vmem:[#allocation2 + $0x48] sm:$0xf]
    %v2576 = vld [vmem:[#allocation2 + $0x4c] sm:$0xf]
    %v2577 = vld [vmem:[#allocation2 + $0x70] sm:$0xf]
    %v2578 = vld [vmem:[#allocation2 + $0x74] sm:$0xf]
    %v2579 = vld [vmem:[#allocation2 + $0x78] sm:$0xf]
    %v2580 = vld [vmem:[#allocation2 + $0x7c] sm:$0xf]
    %v2581 = vld [vmem:[#allocation2 + $0x80] sm:$0xf]
    %v2582 = vld [vmem:[#allocation2 + $0x84] sm:$0xf]
    %v2583 = vld [vmem:[#allocation2 + $0x88] sm:$0xf]
    %v2584 = vld [vmem:[#allocation2 + $0x8c] sm:$0xf]
    %v2585 = vld [vmem:[#allocation2 + $0x90] sm:$0xf]
    %v2586 = vld [vmem:[#allocation2 + $0x94] sm:$0xf]
    %v2587 = vld [vmem:[#allocation2 + $0x98] sm:$0xf]
    %v2588 = vld [vmem:[#allocation2 + $0x9c] sm:$0xf]
    %v2589 = vld [vmem:[#allocation2 + $0xa0] sm:$0xf]
    %v2590 = vld [vmem:[#allocation2 + $0xa4] sm:$0xf]
    %v2591 = vld [vmem:[#allocation2 + $0xa8] sm:$0xf]
    %v2592 = vld [vmem:[#allocation2 + $0xac] sm:$0xf]
    %s2593 = scalar_lea.vmem %s3, 128
    %v2594 = vld [vmem:[%s2593] sm:$0xf]
    %v2595 = vld [vmem:[%s2593 + $0x4] sm:$0xf]
    %v2596 = vld [vmem:[%s2593 + $0x8] sm:$0xf]
    %v2597 = vld [vmem:[%s2593 + $0xc] sm:$0xf]
    %v2598 = vld [vmem:[%s2593 + $0x10] sm:$0xf]
    %v2599 = vld [vmem:[%s2593 + $0x14] sm:$0xf]
    %v2600 = vld [vmem:[%s2593 + $0x18] sm:$0xf]
    %v2601 = vld [vmem:[%s2593 + $0x1c] sm:$0xf]
    %v2602 = vld [vmem:[%s2593 + $0x20] sm:$0xf]
    %v2603 = vld [vmem:[%s2593 + $0x24] sm:$0xf]
    %v2604 = vld [vmem:[%s2593 + $0x28] sm:$0xf]
    %v2605 = vld [vmem:[%s2593 + $0x2c] sm:$0xf]
    %v2606 = vld [vmem:[%s2593 + $0x30] sm:$0xf]
    %v2607 = vld [vmem:[%s2593 + $0x34] sm:$0xf]
    %v2608 = vld [vmem:[%s2593 + $0x38] sm:$0xf]
    %v2609 = vld [vmem:[%s2593 + $0x3c] sm:$0xf]
    %v2642 = vunpack.c.l.b16 %v2561
    %v2643 = vunpack.c.l.b16 %v2562
    %v2644 = vunpack.c.l.b16 %v2563
    %v2645 = vunpack.c.l.b16 %v2564
    %v2646 = vunpack.c.l.b16 %v2565
    %v2647 = vunpack.c.l.b16 %v2566
    %v2648 = vunpack.c.l.b16 %v2567
    %v2649 = vunpack.c.l.b16 %v2568
    %v2650 = vunpack.c.l.b16 %v2569
    %v2651 = vunpack.c.l.b16 %v2570
    %v2652 = vunpack.c.l.b16 %v2571
    %v2653 = vunpack.c.l.b16 %v2572
    %v2654 = vunpack.c.l.b16 %v2573
    %v2655 = vunpack.c.l.b16 %v2574
    %v2656 = vunpack.c.l.b16 %v2575
    %v2657 = vunpack.c.l.b16 %v2576
    %v2658 = vunpack.c.l.b16 %v2577
    %v2659 = vunpack.c.l.b16 %v2578
    %v2660 = vunpack.c.l.b16 %v2579
    %v2661 = vunpack.c.l.b16 %v2580
    %v2662 = vunpack.c.l.b16 %v2581
    %v2663 = vunpack.c.l.b16 %v2582
    %v2664 = vunpack.c.l.b16 %v2583
    %v2665 = vunpack.c.l.b16 %v2584
    %v2666 = vunpack.c.l.b16 %v2585
    %v2667 = vunpack.c.l.b16 %v2586
    %v2668 = vunpack.c.l.b16 %v2587
    %v2669 = vunpack.c.l.b16 %v2588
    %v2670 = vunpack.c.l.b16 %v2589
    %v2671 = vunpack.c.l.b16 %v2590
    %v2672 = vunpack.c.l.b16 %v2591
    %v2673 = vunpack.c.l.b16 %v2592
    %v2674 = vpack.c.b16 %v2643, %v2642
    %v2675 = vpack.c.b16 %v2645, %v2644
    %v2676 = vpack.c.b16 %v2647, %v2646
    %v2677 = vpack.c.b16 %v2649, %v2648
    %v2678 = vpack.c.b16 %v2651, %v2650
    %v2679 = vpack.c.b16 %v2653, %v2652
    %v2680 = vpack.c.b16 %v2655, %v2654
    %v2681 = vpack.c.b16 %v2657, %v2656
    %v2682 = vpack.c.b16 %v2659, %v2658
    %v2683 = vpack.c.b16 %v2661, %v2660
    %v2684 = vpack.c.b16 %v2663, %v2662
    %v2685 = vpack.c.b16 %v2665, %v2664
    %v2686 = vpack.c.b16 %v2667, %v2666
    %v2687 = vpack.c.b16 %v2669, %v2668
    %v2688 = vpack.c.b16 %v2671, %v2670
    %v2689 = vpack.c.b16 %v2673, %v2672
    %v2722 = vunpack.c.l.b16 %v2594
    %v2723 = vunpack.c.l.b16 %v2595
    %v2724 = vunpack.c.l.b16 %v2596
    %v2725 = vunpack.c.l.b16 %v2597
    %v2726 = vunpack.c.l.b16 %v2598
    %v2727 = vunpack.c.l.b16 %v2599
    %v2728 = vunpack.c.l.b16 %v2600
    %v2729 = vunpack.c.l.b16 %v2601
    %v2730 = vunpack.c.l.b16 %v2602
    %v2731 = vunpack.c.l.b16 %v2603
    %v2732 = vunpack.c.l.b16 %v2604
    %v2733 = vunpack.c.l.b16 %v2605
    %v2734 = vunpack.c.l.b16 %v2606
    %v2735 = vunpack.c.l.b16 %v2607
    %v2736 = vunpack.c.l.b16 %v2608
    %v2737 = vunpack.c.l.b16 %v2609
    %v2738 = vpack.c.b16 %v2723, %v2722
    %v2739 = vpack.c.b16 %v2725, %v2724
    %v2740 = vpack.c.b16 %v2727, %v2726
    %v2741 = vpack.c.b16 %v2729, %v2728
    %v2742 = vpack.c.b16 %v2731, %v2730
    %v2743 = vpack.c.b16 %v2733, %v2732
    %v2744 = vpack.c.b16 %v2735, %v2734
    %v2745 = vpack.c.b16 %v2737, %v2736
    %2754 = vmatpush.bf16.msra.mxu0 %v2745
    %2755 = vmatpush.bf16.msra.mxu0 %v2744
    %2756 = vmatpush.bf16.msra.mxu0 %v2743
    %2757 = vmatpush.bf16.msra.mxu0 %v2742
    %2758 = vmatpush.bf16.msra.mxu0 %v2741
    %2759 = vmatpush.bf16.msra.mxu0 %v2740
    %2760 = vmatpush.bf16.msra.mxu0 %v2739
    %2761 = vmatpush.bf16.msra.mxu0 %v2738
    %2762 = vmatmul.bf16.gmra.mxu0 %v2674
    %v2763 = vpop.f32.mrf.mxu0
    %v2764 = vadd.f32 0.0, %v2763
    %v2765 = vpop.f32.mrf.mxu0
    %v2766 = vadd.f32 0.0, %v2765
    %2767 = vmatmul.bf16.gmra.mxu0 %v2675
    %v2768 = vpop.f32.mrf.mxu0
    %v2769 = vadd.f32 0.0, %v2768
    %v2770 = vpop.f32.mrf.mxu0
    %v2771 = vadd.f32 0.0, %v2770
    %2772 = vmatmul.bf16.gmra.mxu0 %v2676
    %v2773 = vpop.f32.mrf.mxu0
    %v2774 = vadd.f32 0.0, %v2773
    %v2775 = vpop.f32.mrf.mxu0
    %v2776 = vadd.f32 0.0, %v2775
    %2777 = vmatmul.bf16.gmra.mxu0 %v2677
    %v2778 = vpop.f32.mrf.mxu0
    %v2779 = vadd.f32 0.0, %v2778
    %v2780 = vpop.f32.mrf.mxu0
    %v2781 = vadd.f32 0.0, %v2780
    %2782 = vmatmul.bf16.gmra.mxu0 %v2678
    %v2783 = vpop.f32.mrf.mxu0
    %v2784 = vadd.f32 0.0, %v2783
    %v2785 = vpop.f32.mrf.mxu0
    %v2786 = vadd.f32 0.0, %v2785
    %2787 = vmatmul.bf16.gmra.mxu0 %v2679
    %v2788 = vpop.f32.mrf.mxu0
    %v2789 = vadd.f32 0.0, %v2788
    %v2790 = vpop.f32.mrf.mxu0
    %v2791 = vadd.f32 0.0, %v2790
    %2792 = vmatmul.bf16.gmra.mxu0 %v2680
    %v2793 = vpop.f32.mrf.mxu0
    %v2794 = vadd.f32 0.0, %v2793
    %v2795 = vpop.f32.mrf.mxu0
    %v2796 = vadd.f32 0.0, %v2795
    %2797 = vmatmul.bf16.gmra.mxu0 %v2681
    %v2798 = vpop.f32.mrf.mxu0
    %v2799 = vadd.f32 0.0, %v2798
    %v2800 = vpop.f32.mrf.mxu0
    %v2801 = vadd.f32 0.0, %v2800
    %2802 = vmatmul.bf16.gmra.mxu0 %v2682
    %v2803 = vpop.f32.mrf.mxu0
    %v2804 = vadd.f32 0.0, %v2803
    %v2805 = vpop.f32.mrf.mxu0
    %v2806 = vadd.f32 0.0, %v2805
    %2807 = vmatmul.bf16.gmra.mxu0 %v2683
    %v2808 = vpop.f32.mrf.mxu0
    %v2809 = vadd.f32 0.0, %v2808
    %v2810 = vpop.f32.mrf.mxu0
    %v2811 = vadd.f32 0.0, %v2810
    %2812 = vmatmul.bf16.gmra.mxu0 %v2684
    %v2813 = vpop.f32.mrf.mxu0
    %v2814 = vadd.f32 0.0, %v2813
    %v2815 = vpop.f32.mrf.mxu0
    %v2816 = vadd.f32 0.0, %v2815
    %2817 = vmatmul.bf16.gmra.mxu0 %v2685
    %v2818 = vpop.f32.mrf.mxu0
    %v2819 = vadd.f32 0.0, %v2818
    %v2820 = vpop.f32.mrf.mxu0
    %v2821 = vadd.f32 0.0, %v2820
    %2822 = vmatmul.bf16.gmra.mxu0 %v2686
    %v2823 = vpop.f32.mrf.mxu0
    %v2824 = vadd.f32 0.0, %v2823
    %v2825 = vpop.f32.mrf.mxu0
    %v2826 = vadd.f32 0.0, %v2825
    %2827 = vmatmul.bf16.gmra.mxu0 %v2687
    %v2828 = vpop.f32.mrf.mxu0
    %v2829 = vadd.f32 0.0, %v2828
    %v2830 = vpop.f32.mrf.mxu0
    %v2831 = vadd.f32 0.0, %v2830
    %2832 = vmatmul.bf16.gmra.mxu0 %v2688
    %v2833 = vpop.f32.mrf.mxu0
    %v2834 = vadd.f32 0.0, %v2833
    %v2835 = vpop.f32.mrf.mxu0
    %v2836 = vadd.f32 0.0, %v2835
    %2837 = vmatmul.bf16.gmra.mxu0 %v2689
    %v2838 = vpop.f32.mrf.mxu0
    %v2839 = vadd.f32 0.0, %v2838
    %v2840 = vpop.f32.mrf.mxu0
    %v2841 = vadd.f32 0.0, %v2840
    %2842 = vdwg.mxu0
    %v2843 = vld [vmem:[#allocation3] sm:$0xff]
    %v2844 = vld [vmem:[#allocation3 + $0x8] sm:$0xff]
    %v2845 = vld [vmem:[#allocation3 + $0x10] sm:$0xff]
    %v2846 = vld [vmem:[#allocation3 + $0x18] sm:$0xff]
    %v2847 = vld [vmem:[#allocation3 + $0x20] sm:$0xff]
    %v2848 = vld [vmem:[#allocation3 + $0x28] sm:$0xff]
    %v2849 = vld [vmem:[#allocation3 + $0x30] sm:$0xff]
    %v2850 = vld [vmem:[#allocation3 + $0x38] sm:$0xff]
    %v2851 = vld [vmem:[#allocation3 + $0x40] sm:$0xff]
    %v2852 = vld [vmem:[#allocation3 + $0x48] sm:$0xff]
    %v2853 = vld [vmem:[#allocation3 + $0x50] sm:$0xff]
    %v2854 = vld [vmem:[#allocation3 + $0x58] sm:$0xff]
    %v2855 = vld [vmem:[#allocation3 + $0x60] sm:$0xff]
    %v2856 = vld [vmem:[#allocation3 + $0x68] sm:$0xff]
    %v2857 = vld [vmem:[#allocation3 + $0x70] sm:$0xff]
    %v2858 = vld [vmem:[#allocation3 + $0x78] sm:$0xff]
    %v2859 = vld [vmem:[#allocation3 + $0x80] sm:$0xff]
    %v2860 = vld [vmem:[#allocation3 + $0x88] sm:$0xff]
    %v2861 = vld [vmem:[#allocation3 + $0x90] sm:$0xff]
    %v2862 = vld [vmem:[#allocation3 + $0x98] sm:$0xff]
    %v2863 = vld [vmem:[#allocation3 + $0xa0] sm:$0xff]
    %v2864 = vld [vmem:[#allocation3 + $0xa8] sm:$0xff]
    %v2865 = vld [vmem:[#allocation3 + $0xb0] sm:$0xff]
    %v2866 = vld [vmem:[#allocation3 + $0xb8] sm:$0xff]
    %v2867 = vld [vmem:[#allocation3 + $0xc0] sm:$0xff]
    %v2868 = vld [vmem:[#allocation3 + $0xc8] sm:$0xff]
    %v2869 = vld [vmem:[#allocation3 + $0xd0] sm:$0xff]
    %v2870 = vld [vmem:[#allocation3 + $0xd8] sm:$0xff]
    %v2871 = vld [vmem:[#allocation3 + $0xe0] sm:$0xff]
    %v2872 = vld [vmem:[#allocation3 + $0xe8] sm:$0xff]
    %v2873 = vld [vmem:[#allocation3 + $0xf0] sm:$0xff]
    %v2874 = vld [vmem:[#allocation3 + $0xf8] sm:$0xff]
    %v2875 = vadd.f32 %v2843, %v2764
    %v2876 = vadd.f32 %v2844, %v2766
    %v2877 = vadd.f32 %v2845, %v2769
    %v2878 = vadd.f32 %v2846, %v2771
    %v2879 = vadd.f32 %v2847, %v2774
    %v2880 = vadd.f32 %v2848, %v2776
    %v2881 = vadd.f32 %v2849, %v2779
    %v2882 = vadd.f32 %v2850, %v2781
    %v2883 = vadd.f32 %v2851, %v2784
    %v2884 = vadd.f32 %v2852, %v2786
    %v2885 = vadd.f32 %v2853, %v2789
    %v2886 = vadd.f32 %v2854, %v2791
    %v2887 = vadd.f32 %v2855, %v2794
    %v2888 = vadd.f32 %v2856, %v2796
    %v2889 = vadd.f32 %v2857, %v2799
    %v2890 = vadd.f32 %v2858, %v2801
    %v2891 = vadd.f32 %v2859, %v2804
    %v2892 = vadd.f32 %v2860, %v2806
    %v2893 = vadd.f32 %v2861, %v2809
    %v2894 = vadd.f32 %v2862, %v2811
    %v2895 = vadd.f32 %v2863, %v2814
    %v2896 = vadd.f32 %v2864, %v2816
    %v2897 = vadd.f32 %v2865, %v2819
    %v2898 = vadd.f32 %v2866, %v2821
    %v2899 = vadd.f32 %v2867, %v2824
    %v2900 = vadd.f32 %v2868, %v2826
    %v2901 = vadd.f32 %v2869, %v2829
    %v2902 = vadd.f32 %v2870, %v2831
    %v2903 = vadd.f32 %v2871, %v2834
    %v2904 = vadd.f32 %v2872, %v2836
    %v2905 = vadd.f32 %v2873, %v2839
    %v2906 = vadd.f32 %v2874, %v2841
    %2907 = vst [vmem:[#allocation3] sm:$0xff] %v2875
    %2908 = vst [vmem:[#allocation3 + $0x8] sm:$0xff] %v2876
    %2909 = vst [vmem:[#allocation3 + $0x10] sm:$0xff] %v2877
    %2910 = vst [vmem:[#allocation3 + $0x18] sm:$0xff] %v2878
    %2911 = vst [vmem:[#allocation3 + $0x20] sm:$0xff] %v2879
    %2912 = vst [vmem:[#allocation3 + $0x28] sm:$0xff] %v2880
    %2913 = vst [vmem:[#allocation3 + $0x30] sm:$0xff] %v2881
    %2914 = vst [vmem:[#allocation3 + $0x38] sm:$0xff] %v2882
    %2915 = vst [vmem:[#allocation3 + $0x40] sm:$0xff] %v2883
    %2916 = vst [vmem:[#allocation3 + $0x48] sm:$0xff] %v2884
    %2917 = vst [vmem:[#allocation3 + $0x50] sm:$0xff] %v2885
    %2918 = vst [vmem:[#allocation3 + $0x58] sm:$0xff] %v2886
    %2919 = vst [vmem:[#allocation3 + $0x60] sm:$0xff] %v2887
    %2920 = vst [vmem:[#allocation3 + $0x68] sm:$0xff] %v2888
    %2921 = vst [vmem:[#allocation3 + $0x70] sm:$0xff] %v2889
    %2922 = vst [vmem:[#allocation3 + $0x78] sm:$0xff] %v2890
    %2923 = vst [vmem:[#allocation3 + $0x80] sm:$0xff] %v2891
    %2924 = vst [vmem:[#allocation3 + $0x88] sm:$0xff] %v2892
    %2925 = vst [vmem:[#allocation3 + $0x90] sm:$0xff] %v2893
    %2926 = vst [vmem:[#allocation3 + $0x98] sm:$0xff] %v2894
    %2927 = vst [vmem:[#allocation3 + $0xa0] sm:$0xff] %v2895
    %2928 = vst [vmem:[#allocation3 + $0xa8] sm:$0xff] %v2896
    %2929 = vst [vmem:[#allocation3 + $0xb0] sm:$0xff] %v2897
    %2930 = vst [vmem:[#allocation3 + $0xb8] sm:$0xff] %v2898
    %2931 = vst [vmem:[#allocation3 + $0xc0] sm:$0xff] %v2899
    %2932 = vst [vmem:[#allocation3 + $0xc8] sm:$0xff] %v2900
    %2933 = vst [vmem:[#allocation3 + $0xd0] sm:$0xff] %v2901
    %2934 = vst [vmem:[#allocation3 + $0xd8] sm:$0xff] %v2902
    %2935 = vst [vmem:[#allocation3 + $0xe0] sm:$0xff] %v2903
    %2936 = vst [vmem:[#allocation3 + $0xe8] sm:$0xff] %v2904
    %2937 = vst [vmem:[#allocation3 + $0xf0] sm:$0xff] %v2905
    %2938 = vst [vmem:[#allocation3 + $0xf8] sm:$0xff] %v2906
    %v2939 = vld [vmem:[#allocation2 + $0x18] sm:$0xf]
    %v2940 = vld [vmem:[#allocation2 + $0x1c] sm:$0xf]
    %v2941 = vld [vmem:[#allocation2 + $0x20] sm:$0xf]
    %v2942 = vld [vmem:[#allocation2 + $0x24] sm:$0xf]
    %v2943 = vld [vmem:[#allocation2 + $0x28] sm:$0xf]
    %v2944 = vld [vmem:[#allocation2 + $0x2c] sm:$0xf]
    %v2945 = vld [vmem:[#allocation2 + $0x30] sm:$0xf]
    %v2946 = vld [vmem:[#allocation2 + $0x34] sm:$0xf]
    %v2947 = vld [vmem:[#allocation2 + $0x38] sm:$0xf]
    %v2948 = vld [vmem:[#allocation2 + $0x3c] sm:$0xf]
    %v2949 = vld [vmem:[#allocation2 + $0x40] sm:$0xf]
    %v2950 = vld [vmem:[#allocation2 + $0x44] sm:$0xf]
    %v2951 = vld [vmem:[#allocation2 + $0x48] sm:$0xf]
    %v2952 = vld [vmem:[#allocation2 + $0x4c] sm:$0xf]
    %v2953 = vld [vmem:[#allocation2 + $0x50] sm:$0xf]
    %v2954 = vld [vmem:[#allocation2 + $0x54] sm:$0xf]
    %v2955 = vld [vmem:[#allocation2 + $0x78] sm:$0xf]
    %v2956 = vld [vmem:[#allocation2 + $0x7c] sm:$0xf]
    %v2957 = vld [vmem:[#allocation2 + $0x80] sm:$0xf]
    %v2958 = vld [vmem:[#allocation2 + $0x84] sm:$0xf]
    %v2959 = vld [vmem:[#allocation2 + $0x88] sm:$0xf]
    %v2960 = vld [vmem:[#allocation2 + $0x8c] sm:$0xf]
    %v2961 = vld [vmem:[#allocation2 + $0x90] sm:$0xf]
    %v2962 = vld [vmem:[#allocation2 + $0x94] sm:$0xf]
    %v2963 = vld [vmem:[#allocation2 + $0x98] sm:$0xf]
    %v2964 = vld [vmem:[#allocation2 + $0x9c] sm:$0xf]
    %v2965 = vld [vmem:[#allocation2 + $0xa0] sm:$0xf]
    %v2966 = vld [vmem:[#allocation2 + $0xa4] sm:$0xf]
    %v2967 = vld [vmem:[#allocation2 + $0xa8] sm:$0xf]
    %v2968 = vld [vmem:[#allocation2 + $0xac] sm:$0xf]
    %v2969 = vld [vmem:[#allocation2 + $0xb0] sm:$0xf]
    %v2970 = vld [vmem:[#allocation2 + $0xb4] sm:$0xf]
    %s2971 = scalar_lea.vmem %s3, 192
    %v2972 = vld [vmem:[%s2971] sm:$0xf]
    %v2973 = vld [vmem:[%s2971 + $0x4] sm:$0xf]
    %v2974 = vld [vmem:[%s2971 + $0x8] sm:$0xf]
    %v2975 = vld [vmem:[%s2971 + $0xc] sm:$0xf]
    %v2976 = vld [vmem:[%s2971 + $0x10] sm:$0xf]
    %v2977 = vld [vmem:[%s2971 + $0x14] sm:$0xf]
    %v2978 = vld [vmem:[%s2971 + $0x18] sm:$0xf]
    %v2979 = vld [vmem:[%s2971 + $0x1c] sm:$0xf]
    %v2980 = vld [vmem:[%s2971 + $0x20] sm:$0xf]
    %v2981 = vld [vmem:[%s2971 + $0x24] sm:$0xf]
    %v2982 = vld [vmem:[%s2971 + $0x28] sm:$0xf]
    %v2983 = vld [vmem:[%s2971 + $0x2c] sm:$0xf]
    %v2984 = vld [vmem:[%s2971 + $0x30] sm:$0xf]
    %v2985 = vld [vmem:[%s2971 + $0x34] sm:$0xf]
    %v2986 = vld [vmem:[%s2971 + $0x38] sm:$0xf]
    %v2987 = vld [vmem:[%s2971 + $0x3c] sm:$0xf]
    %v3020 = vunpack.c.l.b16 %v2939
    %v3021 = vunpack.c.l.b16 %v2940
    %v3022 = vunpack.c.l.b16 %v2941
    %v3023 = vunpack.c.l.b16 %v2942
    %v3024 = vunpack.c.l.b16 %v2943
    %v3025 = vunpack.c.l.b16 %v2944
    %v3026 = vunpack.c.l.b16 %v2945
    %v3027 = vunpack.c.l.b16 %v2946
    %v3028 = vunpack.c.l.b16 %v2947
    %v3029 = vunpack.c.l.b16 %v2948
    %v3030 = vunpack.c.l.b16 %v2949
    %v3031 = vunpack.c.l.b16 %v2950
    %v3032 = vunpack.c.l.b16 %v2951
    %v3033 = vunpack.c.l.b16 %v2952
    %v3034 = vunpack.c.l.b16 %v2953
    %v3035 = vunpack.c.l.b16 %v2954
    %v3036 = vunpack.c.l.b16 %v2955
    %v3037 = vunpack.c.l.b16 %v2956
    %v3038 = vunpack.c.l.b16 %v2957
    %v3039 = vunpack.c.l.b16 %v2958
    %v3040 = vunpack.c.l.b16 %v2959
    %v3041 = vunpack.c.l.b16 %v2960
    %v3042 = vunpack.c.l.b16 %v2961
    %v3043 = vunpack.c.l.b16 %v2962
    %v3044 = vunpack.c.l.b16 %v2963
    %v3045 = vunpack.c.l.b16 %v2964
    %v3046 = vunpack.c.l.b16 %v2965
    %v3047 = vunpack.c.l.b16 %v2966
    %v3048 = vunpack.c.l.b16 %v2967
    %v3049 = vunpack.c.l.b16 %v2968
    %v3050 = vunpack.c.l.b16 %v2969
    %v3051 = vunpack.c.l.b16 %v2970
    %v3052 = vpack.c.b16 %v3021, %v3020
    %v3053 = vpack.c.b16 %v3023, %v3022
    %v3054 = vpack.c.b16 %v3025, %v3024
    %v3055 = vpack.c.b16 %v3027, %v3026
    %v3056 = vpack.c.b16 %v3029, %v3028
    %v3057 = vpack.c.b16 %v3031, %v3030
    %v3058 = vpack.c.b16 %v3033, %v3032
    %v3059 = vpack.c.b16 %v3035, %v3034
    %v3060 = vpack.c.b16 %v3037, %v3036
    %v3061 = vpack.c.b16 %v3039, %v3038
    %v3062 = vpack.c.b16 %v3041, %v3040
    %v3063 = vpack.c.b16 %v3043, %v3042
    %v3064 = vpack.c.b16 %v3045, %v3044
    %v3065 = vpack.c.b16 %v3047, %v3046
    %v3066 = vpack.c.b16 %v3049, %v3048
    %v3067 = vpack.c.b16 %v3051, %v3050
    %v3100 = vunpack.c.l.b16 %v2972
    %v3101 = vunpack.c.l.b16 %v2973
    %v3102 = vunpack.c.l.b16 %v2974
    %v3103 = vunpack.c.l.b16 %v2975
    %v3104 = vunpack.c.l.b16 %v2976
    %v3105 = vunpack.c.l.b16 %v2977
    %v3106 = vunpack.c.l.b16 %v2978
    %v3107 = vunpack.c.l.b16 %v2979
    %v3108 = vunpack.c.l.b16 %v2980
    %v3109 = vunpack.c.l.b16 %v2981
    %v3110 = vunpack.c.l.b16 %v2982
    %v3111 = vunpack.c.l.b16 %v2983
    %v3112 = vunpack.c.l.b16 %v2984
    %v3113 = vunpack.c.l.b16 %v2985
    %v3114 = vunpack.c.l.b16 %v2986
    %v3115 = vunpack.c.l.b16 %v2987
    %v3116 = vpack.c.b16 %v3101, %v3100
    %v3117 = vpack.c.b16 %v3103, %v3102
    %v3118 = vpack.c.b16 %v3105, %v3104
    %v3119 = vpack.c.b16 %v3107, %v3106
    %v3120 = vpack.c.b16 %v3109, %v3108
    %v3121 = vpack.c.b16 %v3111, %v3110
    %v3122 = vpack.c.b16 %v3113, %v3112
    %v3123 = vpack.c.b16 %v3115, %v3114
    %3132 = vmatpush.bf16.msra.mxu0 %v3123
    %3133 = vmatpush.bf16.msra.mxu0 %v3122
    %3134 = vmatpush.bf16.msra.mxu0 %v3121
    %3135 = vmatpush.bf16.msra.mxu0 %v3120
    %3136 = vmatpush.bf16.msra.mxu0 %v3119
    %3137 = vmatpush.bf16.msra.mxu0 %v3118
    %3138 = vmatpush.bf16.msra.mxu0 %v3117
    %3139 = vmatpush.bf16.msra.mxu0 %v3116
    %3140 = vmatmul.bf16.gmra.mxu0 %v3052
    %v3141 = vpop.f32.mrf.mxu0
    %v3142 = vadd.f32 0.0, %v3141
    %v3143 = vpop.f32.mrf.mxu0
    %v3144 = vadd.f32 0.0, %v3143
    %3145 = vmatmul.bf16.gmra.mxu0 %v3053
    %v3146 = vpop.f32.mrf.mxu0
    %v3147 = vadd.f32 0.0, %v3146
    %v3148 = vpop.f32.mrf.mxu0
    %v3149 = vadd.f32 0.0, %v3148
    %3150 = vmatmul.bf16.gmra.mxu0 %v3054
    %v3151 = vpop.f32.mrf.mxu0
    %v3152 = vadd.f32 0.0, %v3151
    %v3153 = vpop.f32.mrf.mxu0
    %v3154 = vadd.f32 0.0, %v3153
    %3155 = vmatmul.bf16.gmra.mxu0 %v3055
    %v3156 = vpop.f32.mrf.mxu0
    %v3157 = vadd.f32 0.0, %v3156
    %v3158 = vpop.f32.mrf.mxu0
    %v3159 = vadd.f32 0.0, %v3158
    %3160 = vmatmul.bf16.gmra.mxu0 %v3056
    %v3161 = vpop.f32.mrf.mxu0
    %v3162 = vadd.f32 0.0, %v3161
    %v3163 = vpop.f32.mrf.mxu0
    %v3164 = vadd.f32 0.0, %v3163
    %3165 = vmatmul.bf16.gmra.mxu0 %v3057
    %v3166 = vpop.f32.mrf.mxu0
    %v3167 = vadd.f32 0.0, %v3166
    %v3168 = vpop.f32.mrf.mxu0
    %v3169 = vadd.f32 0.0, %v3168
    %3170 = vmatmul.bf16.gmra.mxu0 %v3058
    %v3171 = vpop.f32.mrf.mxu0
    %v3172 = vadd.f32 0.0, %v3171
    %v3173 = vpop.f32.mrf.mxu0
    %v3174 = vadd.f32 0.0, %v3173
    %3175 = vmatmul.bf16.gmra.mxu0 %v3059
    %v3176 = vpop.f32.mrf.mxu0
    %v3177 = vadd.f32 0.0, %v3176
    %v3178 = vpop.f32.mrf.mxu0
    %v3179 = vadd.f32 0.0, %v3178
    %3180 = vmatmul.bf16.gmra.mxu0 %v3060
    %v3181 = vpop.f32.mrf.mxu0
    %v3182 = vadd.f32 0.0, %v3181
    %v3183 = vpop.f32.mrf.mxu0
    %v3184 = vadd.f32 0.0, %v3183
    %3185 = vmatmul.bf16.gmra.mxu0 %v3061
    %v3186 = vpop.f32.mrf.mxu0
    %v3187 = vadd.f32 0.0, %v3186
    %v3188 = vpop.f32.mrf.mxu0
    %v3189 = vadd.f32 0.0, %v3188
    %3190 = vmatmul.bf16.gmra.mxu0 %v3062
    %v3191 = vpop.f32.mrf.mxu0
    %v3192 = vadd.f32 0.0, %v3191
    %v3193 = vpop.f32.mrf.mxu0
    %v3194 = vadd.f32 0.0, %v3193
    %3195 = vmatmul.bf16.gmra.mxu0 %v3063
    %v3196 = vpop.f32.mrf.mxu0
    %v3197 = vadd.f32 0.0, %v3196
    %v3198 = vpop.f32.mrf.mxu0
    %v3199 = vadd.f32 0.0, %v3198
    %3200 = vmatmul.bf16.gmra.mxu0 %v3064
    %v3201 = vpop.f32.mrf.mxu0
    %v3202 = vadd.f32 0.0, %v3201
    %v3203 = vpop.f32.mrf.mxu0
    %v3204 = vadd.f32 0.0, %v3203
    %3205 = vmatmul.bf16.gmra.mxu0 %v3065
    %v3206 = vpop.f32.mrf.mxu0
    %v3207 = vadd.f32 0.0, %v3206
    %v3208 = vpop.f32.mrf.mxu0
    %v3209 = vadd.f32 0.0, %v3208
    %3210 = vmatmul.bf16.gmra.mxu0 %v3066
    %v3211 = vpop.f32.mrf.mxu0
    %v3212 = vadd.f32 0.0, %v3211
    %v3213 = vpop.f32.mrf.mxu0
    %v3214 = vadd.f32 0.0, %v3213
    %3215 = vmatmul.bf16.gmra.mxu0 %v3067
    %v3216 = vpop.f32.mrf.mxu0
    %v3217 = vadd.f32 0.0, %v3216
    %v3218 = vpop.f32.mrf.mxu0
    %v3219 = vadd.f32 0.0, %v3218
    %3220 = vdwg.mxu0
    %v3221 = vld [vmem:[#allocation3] sm:$0xff]
    %v3222 = vld [vmem:[#allocation3 + $0x8] sm:$0xff]
    %v3223 = vld [vmem:[#allocation3 + $0x10] sm:$0xff]
    %v3224 = vld [vmem:[#allocation3 + $0x18] sm:$0xff]
    %v3225 = vld [vmem:[#allocation3 + $0x20] sm:$0xff]
    %v3226 = vld [vmem:[#allocation3 + $0x28] sm:$0xff]
    %v3227 = vld [vmem:[#allocation3 + $0x30] sm:$0xff]
    %v3228 = vld [vmem:[#allocation3 + $0x38] sm:$0xff]
    %v3229 = vld [vmem:[#allocation3 + $0x40] sm:$0xff]
    %v3230 = vld [vmem:[#allocation3 + $0x48] sm:$0xff]
    %v3231 = vld [vmem:[#allocation3 + $0x50] sm:$0xff]
    %v3232 = vld [vmem:[#allocation3 + $0x58] sm:$0xff]
    %v3233 = vld [vmem:[#allocation3 + $0x60] sm:$0xff]
    %v3234 = vld [vmem:[#allocation3 + $0x68] sm:$0xff]
    %v3235 = vld [vmem:[#allocation3 + $0x70] sm:$0xff]
    %v3236 = vld [vmem:[#allocation3 + $0x78] sm:$0xff]
    %v3237 = vld [vmem:[#allocation3 + $0x80] sm:$0xff]
    %v3238 = vld [vmem:[#allocation3 + $0x88] sm:$0xff]
    %v3239 = vld [vmem:[#allocation3 + $0x90] sm:$0xff]
    %v3240 = vld [vmem:[#allocation3 + $0x98] sm:$0xff]
    %v3241 = vld [vmem:[#allocation3 + $0xa0] sm:$0xff]
    %v3242 = vld [vmem:[#allocation3 + $0xa8] sm:$0xff]
    %v3243 = vld [vmem:[#allocation3 + $0xb0] sm:$0xff]
    %v3244 = vld [vmem:[#allocation3 + $0xb8] sm:$0xff]
    %v3245 = vld [vmem:[#allocation3 + $0xc0] sm:$0xff]
    %v3246 = vld [vmem:[#allocation3 + $0xc8] sm:$0xff]
    %v3247 = vld [vmem:[#allocation3 + $0xd0] sm:$0xff]
    %v3248 = vld [vmem:[#allocation3 + $0xd8] sm:$0xff]
    %v3249 = vld [vmem:[#allocation3 + $0xe0] sm:$0xff]
    %v3250 = vld [vmem:[#allocation3 + $0xe8] sm:$0xff]
    %v3251 = vld [vmem:[#allocation3 + $0xf0] sm:$0xff]
    %v3252 = vld [vmem:[#allocation3 + $0xf8] sm:$0xff]
    %v3253 = vadd.f32 %v3221, %v3142
    %v3254 = vadd.f32 %v3222, %v3144
    %v3255 = vadd.f32 %v3223, %v3147
    %v3256 = vadd.f32 %v3224, %v3149
    %v3257 = vadd.f32 %v3225, %v3152
    %v3258 = vadd.f32 %v3226, %v3154
    %v3259 = vadd.f32 %v3227, %v3157
    %v3260 = vadd.f32 %v3228, %v3159
    %v3261 = vadd.f32 %v3229, %v3162
    %v3262 = vadd.f32 %v3230, %v3164
    %v3263 = vadd.f32 %v3231, %v3167
    %v3264 = vadd.f32 %v3232, %v3169
    %v3265 = vadd.f32 %v3233, %v3172
    %v3266 = vadd.f32 %v3234, %v3174
    %v3267 = vadd.f32 %v3235, %v3177
    %v3268 = vadd.f32 %v3236, %v3179
    %v3269 = vadd.f32 %v3237, %v3182
    %v3270 = vadd.f32 %v3238, %v3184
    %v3271 = vadd.f32 %v3239, %v3187
    %v3272 = vadd.f32 %v3240, %v3189
    %v3273 = vadd.f32 %v3241, %v3192
    %v3274 = vadd.f32 %v3242, %v3194
    %v3275 = vadd.f32 %v3243, %v3197
    %v3276 = vadd.f32 %v3244, %v3199
    %v3277 = vadd.f32 %v3245, %v3202
    %v3278 = vadd.f32 %v3246, %v3204
    %v3279 = vadd.f32 %v3247, %v3207
    %v3280 = vadd.f32 %v3248, %v3209
    %v3281 = vadd.f32 %v3249, %v3212
    %v3282 = vadd.f32 %v3250, %v3214
    %v3283 = vadd.f32 %v3251, %v3217
    %v3284 = vadd.f32 %v3252, %v3219
    %3285 = vst [vmem:[#allocation3] sm:$0xff] %v3253
    %3286 = vst [vmem:[#allocation3 + $0x8] sm:$0xff] %v3254
    %3287 = vst [vmem:[#allocation3 + $0x10] sm:$0xff] %v3255
    %3288 = vst [vmem:[#allocation3 + $0x18] sm:$0xff] %v3256
    %3289 = vst [vmem:[#allocation3 + $0x20] sm:$0xff] %v3257
    %3290 = vst [vmem:[#allocation3 + $0x28] sm:$0xff] %v3258
    %3291 = vst [vmem:[#allocation3 + $0x30] sm:$0xff] %v3259
    %3292 = vst [vmem:[#allocation3 + $0x38] sm:$0xff] %v3260
    %3293 = vst [vmem:[#allocation3 + $0x40] sm:$0xff] %v3261
    %3294 = vst [vmem:[#allocation3 + $0x48] sm:$0xff] %v3262
    %3295 = vst [vmem:[#allocation3 + $0x50] sm:$0xff] %v3263
    %3296 = vst [vmem:[#allocation3 + $0x58] sm:$0xff] %v3264
    %3297 = vst [vmem:[#allocation3 + $0x60] sm:$0xff] %v3265
    %3298 = vst [vmem:[#allocation3 + $0x68] sm:$0xff] %v3266
    %3299 = vst [vmem:[#allocation3 + $0x70] sm:$0xff] %v3267
    %3300 = vst [vmem:[#allocation3 + $0x78] sm:$0xff] %v3268
    %3301 = vst [vmem:[#allocation3 + $0x80] sm:$0xff] %v3269
    %3302 = vst [vmem:[#allocation3 + $0x88] sm:$0xff] %v3270
    %3303 = vst [vmem:[#allocation3 + $0x90] sm:$0xff] %v3271
    %3304 = vst [vmem:[#allocation3 + $0x98] sm:$0xff] %v3272
    %3305 = vst [vmem:[#allocation3 + $0xa0] sm:$0xff] %v3273
    %3306 = vst [vmem:[#allocation3 + $0xa8] sm:$0xff] %v3274
    %3307 = vst [vmem:[#allocation3 + $0xb0] sm:$0xff] %v3275
    %3308 = vst [vmem:[#allocation3 + $0xb8] sm:$0xff] %v3276
    %3309 = vst [vmem:[#allocation3 + $0xc0] sm:$0xff] %v3277
    %3310 = vst [vmem:[#allocation3 + $0xc8] sm:$0xff] %v3278
    %3311 = vst [vmem:[#allocation3 + $0xd0] sm:$0xff] %v3279
    %3312 = vst [vmem:[#allocation3 + $0xd8] sm:$0xff] %v3280
    %3313 = vst [vmem:[#allocation3 + $0xe0] sm:$0xff] %v3281
    %3314 = vst [vmem:[#allocation3 + $0xe8] sm:$0xff] %v3282
    %3315 = vst [vmem:[#allocation3 + $0xf0] sm:$0xff] %v3283
    %3316 = vst [vmem:[#allocation3 + $0xf8] sm:$0xff] %v3284
    %v3317 = vld [vmem:[#allocation2 + $0x20] sm:$0xf]
    %v3318 = vld [vmem:[#allocation2 + $0x24] sm:$0xf]
    %v3319 = vld [vmem:[#allocation2 + $0x28] sm:$0xf]
    %v3320 = vld [vmem:[#allocation2 + $0x2c] sm:$0xf]
    %v3321 = vld [vmem:[#allocation2 + $0x30] sm:$0xf]
    %v3322 = vld [vmem:[#allocation2 + $0x34] sm:$0xf]
    %v3323 = vld [vmem:[#allocation2 + $0x38] sm:$0xf]
    %v3324 = vld [vmem:[#allocation2 + $0x3c] sm:$0xf]
    %v3325 = vld [vmem:[#allocation2 + $0x40] sm:$0xf]
    %v3326 = vld [vmem:[#allocation2 + $0x44] sm:$0xf]
    %v3327 = vld [vmem:[#allocation2 + $0x48] sm:$0xf]
    %v3328 = vld [vmem:[#allocation2 + $0x4c] sm:$0xf]
    %v3329 = vld [vmem:[#allocation2 + $0x50] sm:$0xf]
    %v3330 = vld [vmem:[#allocation2 + $0x54] sm:$0xf]
    %v3331 = vld [vmem:[#allocation2 + $0x58] sm:$0xf]
    %v3332 = vld [vmem:[#allocation2 + $0x5c] sm:$0xf]
    %v3333 = vld [vmem:[#allocation2 + $0x80] sm:$0xf]
    %v3334 = vld [vmem:[#allocation2 + $0x84] sm:$0xf]
    %v3335 = vld [vmem:[#allocation2 + $0x88] sm:$0xf]
    %v3336 = vld [vmem:[#allocation2 + $0x8c] sm:$0xf]
    %v3337 = vld [vmem:[#allocation2 + $0x90] sm:$0xf]
    %v3338 = vld [vmem:[#allocation2 + $0x94] sm:$0xf]
    %v3339 = vld [vmem:[#allocation2 + $0x98] sm:$0xf]
    %v3340 = vld [vmem:[#allocation2 + $0x9c] sm:$0xf]
    %v3341 = vld [vmem:[#allocation2 + $0xa0] sm:$0xf]
    %v3342 = vld [vmem:[#allocation2 + $0xa4] sm:$0xf]
    %v3343 = vld [vmem:[#allocation2 + $0xa8] sm:$0xf]
    %v3344 = vld [vmem:[#allocation2 + $0xac] sm:$0xf]
    %v3345 = vld [vmem:[#allocation2 + $0xb0] sm:$0xf]
    %v3346 = vld [vmem:[#allocation2 + $0xb4] sm:$0xf]
    %v3347 = vld [vmem:[#allocation2 + $0xb8] sm:$0xf]
    %v3348 = vld [vmem:[#allocation2 + $0xbc] sm:$0xf]
    %s3349 = scalar_lea.vmem %s3, 256
    %v3350 = vld [vmem:[%s3349] sm:$0xf]
    %v3351 = vld [vmem:[%s3349 + $0x4] sm:$0xf]
    %v3352 = vld [vmem:[%s3349 + $0x8] sm:$0xf]
    %v3353 = vld [vmem:[%s3349 + $0xc] sm:$0xf]
    %v3354 = vld [vmem:[%s3349 + $0x10] sm:$0xf]
    %v3355 = vld [vmem:[%s3349 + $0x14] sm:$0xf]
    %v3356 = vld [vmem:[%s3349 + $0x18] sm:$0xf]
    %v3357 = vld [vmem:[%s3349 + $0x1c] sm:$0xf]
    %v3358 = vld [vmem:[%s3349 + $0x20] sm:$0xf]
    %v3359 = vld [vmem:[%s3349 + $0x24] sm:$0xf]
    %v3360 = vld [vmem:[%s3349 + $0x28] sm:$0xf]
    %v3361 = vld [vmem:[%s3349 + $0x2c] sm:$0xf]
    %v3362 = vld [vmem:[%s3349 + $0x30] sm:$0xf]
    %v3363 = vld [vmem:[%s3349 + $0x34] sm:$0xf]
    %v3364 = vld [vmem:[%s3349 + $0x38] sm:$0xf]
    %v3365 = vld [vmem:[%s3349 + $0x3c] sm:$0xf]
    %v3398 = vunpack.c.l.b16 %v3317
    %v3399 = vunpack.c.l.b16 %v3318
    %v3400 = vunpack.c.l.b16 %v3319
    %v3401 = vunpack.c.l.b16 %v3320
    %v3402 = vunpack.c.l.b16 %v3321
    %v3403 = vunpack.c.l.b16 %v3322
    %v3404 = vunpack.c.l.b16 %v3323
    %v3405 = vunpack.c.l.b16 %v3324
    %v3406 = vunpack.c.l.b16 %v3325
    %v3407 = vunpack.c.l.b16 %v3326
    %v3408 = vunpack.c.l.b16 %v3327
    %v3409 = vunpack.c.l.b16 %v3328
    %v3410 = vunpack.c.l.b16 %v3329
    %v3411 = vunpack.c.l.b16 %v3330
    %v3412 = vunpack.c.l.b16 %v3331
    %v3413 = vunpack.c.l.b16 %v3332
    %v3414 = vunpack.c.l.b16 %v3333
    %v3415 = vunpack.c.l.b16 %v3334
    %v3416 = vunpack.c.l.b16 %v3335
    %v3417 = vunpack.c.l.b16 %v3336
    %v3418 = vunpack.c.l.b16 %v3337
    %v3419 = vunpack.c.l.b16 %v3338
    %v3420 = vunpack.c.l.b16 %v3339
    %v3421 = vunpack.c.l.b16 %v3340
    %v3422 = vunpack.c.l.b16 %v3341
    %v3423 = vunpack.c.l.b16 %v3342
    %v3424 = vunpack.c.l.b16 %v3343
    %v3425 = vunpack.c.l.b16 %v3344
    %v3426 = vunpack.c.l.b16 %v3345
    %v3427 = vunpack.c.l.b16 %v3346
    %v3428 = vunpack.c.l.b16 %v3347
    %v3429 = vunpack.c.l.b16 %v3348
    %v3430 = vpack.c.b16 %v3399, %v3398
    %v3431 = vpack.c.b16 %v3401, %v3400
    %v3432 = vpack.c.b16 %v3403, %v3402
    %v3433 = vpack.c.b16 %v3405, %v3404
    %v3434 = vpack.c.b16 %v3407, %v3406
    %v3435 = vpack.c.b16 %v3409, %v3408
    %v3436 = vpack.c.b16 %v3411, %v3410
    %v3437 = vpack.c.b16 %v3413, %v3412
    %v3438 = vpack.c.b16 %v3415, %v3414
    %v3439 = vpack.c.b16 %v3417, %v3416
    %v3440 = vpack.c.b16 %v3419, %v3418
    %v3441 = vpack.c.b16 %v3421, %v3420
    %v3442 = vpack.c.b16 %v3423, %v3422
    %v3443 = vpack.c.b16 %v3425, %v3424
    %v3444 = vpack.c.b16 %v3427, %v3426
    %v3445 = vpack.c.b16 %v3429, %v3428
    %v3478 = vunpack.c.l.b16 %v3350
    %v3479 = vunpack.c.l.b16 %v3351
    %v3480 = vunpack.c.l.b16 %v3352
    %v3481 = vunpack.c.l.b16 %v3353
    %v3482 = vunpack.c.l.b16 %v3354
    %v3483 = vunpack.c.l.b16 %v3355
    %v3484 = vunpack.c.l.b16 %v3356
    %v3485 = vunpack.c.l.b16 %v3357
    %v3486 = vunpack.c.l.b16 %v3358
    %v3487 = vunpack.c.l.b16 %v3359
    %v3488 = vunpack.c.l.b16 %v3360
    %v3489 = vunpack.c.l.b16 %v3361
    %v3490 = vunpack.c.l.b16 %v3362
    %v3491 = vunpack.c.l.b16 %v3363
    %v3492 = vunpack.c.l.b16 %v3364
    %v3493 = vunpack.c.l.b16 %v3365
    %v3494 = vpack.c.b16 %v3479, %v3478
    %v3495 = vpack.c.b16 %v3481, %v3480
    %v3496 = vpack.c.b16 %v3483, %v3482
    %v3497 = vpack.c.b16 %v3485, %v3484
    %v3498 = vpack.c.b16 %v3487, %v3486
    %v3499 = vpack.c.b16 %v3489, %v3488
    %v3500 = vpack.c.b16 %v3491, %v3490
    %v3501 = vpack.c.b16 %v3493, %v3492
    %3510 = vmatpush.bf16.msra.mxu0 %v3501
    %3511 = vmatpush.bf16.msra.mxu0 %v3500
    %3512 = vmatpush.bf16.msra.mxu0 %v3499
    %3513 = vmatpush.bf16.msra.mxu0 %v3498
    %3514 = vmatpush.bf16.msra.mxu0 %v3497
    %3515 = vmatpush.bf16.msra.mxu0 %v3496
    %3516 = vmatpush.bf16.msra.mxu0 %v3495
    %3517 = vmatpush.bf16.msra.mxu0 %v3494
    %3518 = vmatmul.bf16.gmra.mxu0 %v3430
    %v3519 = vpop.f32.mrf.mxu0
    %v3520 = vadd.f32 0.0, %v3519
    %v3521 = vpop.f32.mrf.mxu0
    %v3522 = vadd.f32 0.0, %v3521
    %3523 = vmatmul.bf16.gmra.mxu0 %v3431
    %v3524 = vpop.f32.mrf.mxu0
    %v3525 = vadd.f32 0.0, %v3524
    %v3526 = vpop.f32.mrf.mxu0
    %v3527 = vadd.f32 0.0, %v3526
    %3528 = vmatmul.bf16.gmra.mxu0 %v3432
    %v3529 = vpop.f32.mrf.mxu0
    %v3530 = vadd.f32 0.0, %v3529
    %v3531 = vpop.f32.mrf.mxu0
    %v3532 = vadd.f32 0.0, %v3531
    %3533 = vmatmul.bf16.gmra.mxu0 %v3433
    %v3534 = vpop.f32.mrf.mxu0
    %v3535 = vadd.f32 0.0, %v3534
    %v3536 = vpop.f32.mrf.mxu0
    %v3537 = vadd.f32 0.0, %v3536
    %3538 = vmatmul.bf16.gmra.mxu0 %v3434
    %v3539 = vpop.f32.mrf.mxu0
    %v3540 = vadd.f32 0.0, %v3539
    %v3541 = vpop.f32.mrf.mxu0
    %v3542 = vadd.f32 0.0, %v3541
    %3543 = vmatmul.bf16.gmra.mxu0 %v3435
    %v3544 = vpop.f32.mrf.mxu0
    %v3545 = vadd.f32 0.0, %v3544
    %v3546 = vpop.f32.mrf.mxu0
    %v3547 = vadd.f32 0.0, %v3546
    %3548 = vmatmul.bf16.gmra.mxu0 %v3436
    %v3549 = vpop.f32.mrf.mxu0
    %v3550 = vadd.f32 0.0, %v3549
    %v3551 = vpop.f32.mrf.mxu0
    %v3552 = vadd.f32 0.0, %v3551
    %3553 = vmatmul.bf16.gmra.mxu0 %v3437
    %v3554 = vpop.f32.mrf.mxu0
    %v3555 = vadd.f32 0.0, %v3554
    %v3556 = vpop.f32.mrf.mxu0
    %v3557 = vadd.f32 0.0, %v3556
    %3558 = vmatmul.bf16.gmra.mxu0 %v3438
    %v3559 = vpop.f32.mrf.mxu0
    %v3560 = vadd.f32 0.0, %v3559
    %v3561 = vpop.f32.mrf.mxu0
    %v3562 = vadd.f32 0.0, %v3561
    %3563 = vmatmul.bf16.gmra.mxu0 %v3439
    %v3564 = vpop.f32.mrf.mxu0
    %v3565 = vadd.f32 0.0, %v3564
    %v3566 = vpop.f32.mrf.mxu0
    %v3567 = vadd.f32 0.0, %v3566
    %3568 = vmatmul.bf16.gmra.mxu0 %v3440
    %v3569 = vpop.f32.mrf.mxu0
    %v3570 = vadd.f32 0.0, %v3569
    %v3571 = vpop.f32.mrf.mxu0
    %v3572 = vadd.f32 0.0, %v3571
    %3573 = vmatmul.bf16.gmra.mxu0 %v3441
    %v3574 = vpop.f32.mrf.mxu0
    %v3575 = vadd.f32 0.0, %v3574
    %v3576 = vpop.f32.mrf.mxu0
    %v3577 = vadd.f32 0.0, %v3576
    %3578 = vmatmul.bf16.gmra.mxu0 %v3442
    %v3579 = vpop.f32.mrf.mxu0
    %v3580 = vadd.f32 0.0, %v3579
    %v3581 = vpop.f32.mrf.mxu0
    %v3582 = vadd.f32 0.0, %v3581
    %3583 = vmatmul.bf16.gmra.mxu0 %v3443
    %v3584 = vpop.f32.mrf.mxu0
    %v3585 = vadd.f32 0.0, %v3584
    %v3586 = vpop.f32.mrf.mxu0
    %v3587 = vadd.f32 0.0, %v3586
    %3588 = vmatmul.bf16.gmra.mxu0 %v3444
    %v3589 = vpop.f32.mrf.mxu0
    %v3590 = vadd.f32 0.0, %v3589
    %v3591 = vpop.f32.mrf.mxu0
    %v3592 = vadd.f32 0.0, %v3591
    %3593 = vmatmul.bf16.gmra.mxu0 %v3445
    %v3594 = vpop.f32.mrf.mxu0
    %v3595 = vadd.f32 0.0, %v3594
    %v3596 = vpop.f32.mrf.mxu0
    %v3597 = vadd.f32 0.0, %v3596
    %3598 = vdwg.mxu0
    %v3599 = vld [vmem:[#allocation3] sm:$0xff]
    %v3600 = vld [vmem:[#allocation3 + $0x8] sm:$0xff]
    %v3601 = vld [vmem:[#allocation3 + $0x10] sm:$0xff]
    %v3602 = vld [vmem:[#allocation3 + $0x18] sm:$0xff]
    %v3603 = vld [vmem:[#allocation3 + $0x20] sm:$0xff]
    %v3604 = vld [vmem:[#allocation3 + $0x28] sm:$0xff]
    %v3605 = vld [vmem:[#allocation3 + $0x30] sm:$0xff]
    %v3606 = vld [vmem:[#allocation3 + $0x38] sm:$0xff]
    %v3607 = vld [vmem:[#allocation3 + $0x40] sm:$0xff]
    %v3608 = vld [vmem:[#allocation3 + $0x48] sm:$0xff]
    %v3609 = vld [vmem:[#allocation3 + $0x50] sm:$0xff]
    %v3610 = vld [vmem:[#allocation3 + $0x58] sm:$0xff]
    %v3611 = vld [vmem:[#allocation3 + $0x60] sm:$0xff]
    %v3612 = vld [vmem:[#allocation3 + $0x68] sm:$0xff]
    %v3613 = vld [vmem:[#allocation3 + $0x70] sm:$0xff]
    %v3614 = vld [vmem:[#allocation3 + $0x78] sm:$0xff]
    %v3615 = vld [vmem:[#allocation3 + $0x80] sm:$0xff]
    %v3616 = vld [vmem:[#allocation3 + $0x88] sm:$0xff]
    %v3617 = vld [vmem:[#allocation3 + $0x90] sm:$0xff]
    %v3618 = vld [vmem:[#allocation3 + $0x98] sm:$0xff]
    %v3619 = vld [vmem:[#allocation3 + $0xa0] sm:$0xff]
    %v3620 = vld [vmem:[#allocation3 + $0xa8] sm:$0xff]
    %v3621 = vld [vmem:[#allocation3 + $0xb0] sm:$0xff]
    %v3622 = vld [vmem:[#allocation3 + $0xb8] sm:$0xff]
    %v3623 = vld [vmem:[#allocation3 + $0xc0] sm:$0xff]
    %v3624 = vld [vmem:[#allocation3 + $0xc8] sm:$0xff]
    %v3625 = vld [vmem:[#allocation3 + $0xd0] sm:$0xff]
    %v3626 = vld [vmem:[#allocation3 + $0xd8] sm:$0xff]
    %v3627 = vld [vmem:[#allocation3 + $0xe0] sm:$0xff]
    %v3628 = vld [vmem:[#allocation3 + $0xe8] sm:$0xff]
    %v3629 = vld [vmem:[#allocation3 + $0xf0] sm:$0xff]
    %v3630 = vld [vmem:[#allocation3 + $0xf8] sm:$0xff]
    %v3631 = vadd.f32 %v3599, %v3520
    %v3632 = vadd.f32 %v3600, %v3522
    %v3633 = vadd.f32 %v3601, %v3525
    %v3634 = vadd.f32 %v3602, %v3527
    %v3635 = vadd.f32 %v3603, %v3530
    %v3636 = vadd.f32 %v3604, %v3532
    %v3637 = vadd.f32 %v3605, %v3535
    %v3638 = vadd.f32 %v3606, %v3537
    %v3639 = vadd.f32 %v3607, %v3540
    %v3640 = vadd.f32 %v3608, %v3542
    %v3641 = vadd.f32 %v3609, %v3545
    %v3642 = vadd.f32 %v3610, %v3547
    %v3643 = vadd.f32 %v3611, %v3550
    %v3644 = vadd.f32 %v3612, %v3552
    %v3645 = vadd.f32 %v3613, %v3555
    %v3646 = vadd.f32 %v3614, %v3557
    %v3647 = vadd.f32 %v3615, %v3560
    %v3648 = vadd.f32 %v3616, %v3562
    %v3649 = vadd.f32 %v3617, %v3565
    %v3650 = vadd.f32 %v3618, %v3567
    %v3651 = vadd.f32 %v3619, %v3570
    %v3652 = vadd.f32 %v3620, %v3572
    %v3653 = vadd.f32 %v3621, %v3575
    %v3654 = vadd.f32 %v3622, %v3577
    %v3655 = vadd.f32 %v3623, %v3580
    %v3656 = vadd.f32 %v3624, %v3582
    %v3657 = vadd.f32 %v3625, %v3585
    %v3658 = vadd.f32 %v3626, %v3587
    %v3659 = vadd.f32 %v3627, %v3590
    %v3660 = vadd.f32 %v3628, %v3592
    %v3661 = vadd.f32 %v3629, %v3595
    %v3662 = vadd.f32 %v3630, %v3597
    %3663 = vst [vmem:[#allocation3] sm:$0xff] %v3631
    %3664 = vst [vmem:[#allocation3 + $0x8] sm:$0xff] %v3632
    %3665 = vst [vmem:[#allocation3 + $0x10] sm:$0xff] %v3633
    %3666 = vst [vmem:[#allocation3 + $0x18] sm:$0xff] %v3634
    %3667 = vst [vmem:[#allocation3 + $0x20] sm:$0xff] %v3635
    %3668 = vst [vmem:[#allocation3 + $0x28] sm:$0xff] %v3636
    %3669 = vst [vmem:[#allocation3 + $0x30] sm:$0xff] %v3637
    %3670 = vst [vmem:[#allocation3 + $0x38] sm:$0xff] %v3638
    %3671 = vst [vmem:[#allocation3 + $0x40] sm:$0xff] %v3639
    %3672 = vst [vmem:[#allocation3 + $0x48] sm:$0xff] %v3640
    %3673 = vst [vmem:[#allocation3 + $0x50] sm:$0xff] %v3641
    %3674 = vst [vmem:[#allocation3 + $0x58] sm:$0xff] %v3642
    %3675 = vst [vmem:[#allocation3 + $0x60] sm:$0xff] %v3643
    %3676 = vst [vmem:[#allocation3 + $0x68] sm:$0xff] %v3644
    %3677 = vst [vmem:[#allocation3 + $0x70] sm:$0xff] %v3645
    %3678 = vst [vmem:[#allocation3 + $0x78] sm:$0xff] %v3646
    %3679 = vst [vmem:[#allocation3 + $0x80] sm:$0xff] %v3647
    %3680 = vst [vmem:[#allocation3 + $0x88] sm:$0xff] %v3648
    %3681 = vst [vmem:[#allocation3 + $0x90] sm:$0xff] %v3649
    %3682 = vst [vmem:[#allocation3 + $0x98] sm:$0xff] %v3650
    %3683 = vst [vmem:[#allocation3 + $0xa0] sm:$0xff] %v3651
    %3684 = vst [vmem:[#allocation3 + $0xa8] sm:$0xff] %v3652
    %3685 = vst [vmem:[#allocation3 + $0xb0] sm:$0xff] %v3653
    %3686 = vst [vmem:[#allocation3 + $0xb8] sm:$0xff] %v3654
    %3687 = vst [vmem:[#allocation3 + $0xc0] sm:$0xff] %v3655
    %3688 = vst [vmem:[#allocation3 + $0xc8] sm:$0xff] %v3656
    %3689 = vst [vmem:[#allocation3 + $0xd0] sm:$0xff] %v3657
    %3690 = vst [vmem:[#allocation3 + $0xd8] sm:$0xff] %v3658
    %3691 = vst [vmem:[#allocation3 + $0xe0] sm:$0xff] %v3659
    %3692 = vst [vmem:[#allocation3 + $0xe8] sm:$0xff] %v3660
    %3693 = vst [vmem:[#allocation3 + $0xf0] sm:$0xff] %v3661
    %3694 = vst [vmem:[#allocation3 + $0xf8] sm:$0xff] %v3662
    %v3695 = vld [vmem:[#allocation3] sm:$0xff]
    %v3696 = vld [vmem:[#allocation3 + $0x10] sm:$0xff]
    %v3697 = vld [vmem:[#allocation3 + $0x20] sm:$0xff]
    %v3698 = vld [vmem:[#allocation3 + $0x30] sm:$0xff]
    %v3699 = vld [vmem:[#allocation3 + $0x40] sm:$0xff]
    %v3700 = vld [vmem:[#allocation3 + $0x50] sm:$0xff]
    %v3701 = vld [vmem:[#allocation3 + $0x60] sm:$0xff]
    %v3702 = vld [vmem:[#allocation3 + $0x70] sm:$0xff]
    %v3703 = vld [vmem:[#allocation3 + $0x80] sm:$0xff]
    %v3704 = vld [vmem:[#allocation3 + $0x90] sm:$0xff]
    %v3705 = vld [vmem:[#allocation3 + $0xa0] sm:$0xff]
    %v3706 = vld [vmem:[#allocation3 + $0xb0] sm:$0xff]
    %v3707 = vld [vmem:[#allocation3 + $0xc0] sm:$0xff]
    %v3708 = vld [vmem:[#allocation3 + $0xd0] sm:$0xff]
    %v3709 = vld [vmem:[#allocation3 + $0xe0] sm:$0xff]
    %v3710 = vld [vmem:[#allocation3 + $0xf0] sm:$0xff]
    %v3711 = vpack.c.bf16 %v3696, %v3695
    %v3712 = vpack.c.bf16 %v3698, %v3697
    %v3713 = vpack.c.bf16 %v3700, %v3699
    %v3714 = vpack.c.bf16 %v3702, %v3701
    %v3715 = vpack.c.bf16 %v3704, %v3703
    %v3716 = vpack.c.bf16 %v3706, %v3705
    %v3717 = vpack.c.bf16 %v3708, %v3707
    %v3718 = vpack.c.bf16 %v3710, %v3709
    %v3719 = vld [vmem:[%s5] sm:$0xf]
    %v3720 = vld [vmem:[%s5 + $0x4] sm:$0xf]
    %v3721 = vld [vmem:[%s5 + $0x8] sm:$0xf]
    %v3722 = vld [vmem:[%s5 + $0xc] sm:$0xf]
    %v3723 = vld [vmem:[%s5 + $0x10] sm:$0xf]
    %v3724 = vld [vmem:[%s5 + $0x14] sm:$0xf]
    %v3725 = vld [vmem:[%s5 + $0x18] sm:$0xf]
    %v3726 = vld [vmem:[%s5 + $0x1c] sm:$0xf]
    %v3727 = vld [vmem:[%s5 + $0x20] sm:$0xf]
    %v3728 = vld [vmem:[%s5 + $0x24] sm:$0xf]
    %v3729 = vld [vmem:[%s5 + $0x28] sm:$0xf]
    %v3730 = vld [vmem:[%s5 + $0x2c] sm:$0xf]
    %v3731 = vld [vmem:[%s5 + $0x30] sm:$0xf]
    %v3732 = vld [vmem:[%s5 + $0x34] sm:$0xf]
    %v3733 = vld [vmem:[%s5 + $0x38] sm:$0xf]
    %v3734 = vld [vmem:[%s5 + $0x3c] sm:$0xf]
    %v3735 = vld [vmem:[#allocation3 + $0x1] sm:$0xff]
    %v3736 = vld [vmem:[#allocation3 + $0x11] sm:$0xff]
    %v3737 = vld [vmem:[#allocation3 + $0x21] sm:$0xff]
    %v3738 = vld [vmem:[#allocation3 + $0x31] sm:$0xff]
    %v3739 = vld [vmem:[#allocation3 + $0x41] sm:$0xff]
    %v3740 = vld [vmem:[#allocation3 + $0x51] sm:$0xff]
    %v3741 = vld [vmem:[#allocation3 + $0x61] sm:$0xff]
    %v3742 = vld [vmem:[#allocation3 + $0x71] sm:$0xff]
    %v3743 = vld [vmem:[#allocation3 + $0x81] sm:$0xff]
    %v3744 = vld [vmem:[#allocation3 + $0x91] sm:$0xff]
    %v3745 = vld [vmem:[#allocation3 + $0xa1] sm:$0xff]
    %v3746 = vld [vmem:[#allocation3 + $0xb1] sm:$0xff]
    %v3747 = vld [vmem:[#allocation3 + $0xc1] sm:$0xff]
    %v3748 = vld [vmem:[#allocation3 + $0xd1] sm:$0xff]
    %v3749 = vld [vmem:[#allocation3 + $0xe1] sm:$0xff]
    %v3750 = vld [vmem:[#allocation3 + $0xf1] sm:$0xff]
    %v3751 = vpack.c.bf16 %v3736, %v3735
    %v3752 = vpack.c.bf16 %v3738, %v3737
    %v3753 = vpack.c.bf16 %v3740, %v3739
    %v3754 = vpack.c.bf16 %v3742, %v3741
    %v3755 = vpack.c.bf16 %v3744, %v3743
    %v3756 = vpack.c.bf16 %v3746, %v3745
    %v3757 = vpack.c.bf16 %v3748, %v3747
    %v3758 = vpack.c.bf16 %v3750, %v3749
    %s3759 = scalar_lea.vmem %s5, 64
    %v3760 = vld [vmem:[%s3759] sm:$0xf]
    %v3761 = vld [vmem:[%s3759 + $0x4] sm:$0xf]
    %v3762 = vld [vmem:[%s3759 + $0x8] sm:$0xf]
    %v3763 = vld [vmem:[%s3759 + $0xc] sm:$0xf]
    %v3764 = vld [vmem:[%s3759 + $0x10] sm:$0xf]
    %v3765 = vld [vmem:[%s3759 + $0x14] sm:$0xf]
    %v3766 = vld [vmem:[%s3759 + $0x18] sm:$0xf]
    %v3767 = vld [vmem:[%s3759 + $0x1c] sm:$0xf]
    %v3768 = vld [vmem:[%s3759 + $0x20] sm:$0xf]
    %v3769 = vld [vmem:[%s3759 + $0x24] sm:$0xf]
    %v3770 = vld [vmem:[%s3759 + $0x28] sm:$0xf]
    %v3771 = vld [vmem:[%s3759 + $0x2c] sm:$0xf]
    %v3772 = vld [vmem:[%s3759 + $0x30] sm:$0xf]
    %v3773 = vld [vmem:[%s3759 + $0x34] sm:$0xf]
    %v3774 = vld [vmem:[%s3759 + $0x38] sm:$0xf]
    %v3775 = vld [vmem:[%s3759 + $0x3c] sm:$0xf]
    %v3792 = vunpack.c.l.b16 %v3760
    %v3793 = vunpack.c.l.b16 %v3761
    %v3794 = vunpack.c.l.b16 %v3762
    %v3795 = vunpack.c.l.b16 %v3763
    %v3796 = vunpack.c.l.b16 %v3764
    %v3797 = vunpack.c.l.b16 %v3765
    %v3798 = vunpack.c.l.b16 %v3766
    %v3799 = vunpack.c.l.b16 %v3767
    %v3800 = vunpack.c.l.b16 %v3768
    %v3801 = vunpack.c.l.b16 %v3769
    %v3802 = vunpack.c.l.b16 %v3770
    %v3803 = vunpack.c.l.b16 %v3771
    %v3804 = vunpack.c.l.b16 %v3772
    %v3805 = vunpack.c.l.b16 %v3773
    %v3806 = vunpack.c.l.b16 %v3774
    %v3807 = vunpack.c.l.b16 %v3775
    %v3808 = vpack.c.b16 %v3793, %v3792
    %v3809 = vpack.c.b16 %v3795, %v3794
    %v3810 = vpack.c.b16 %v3797, %v3796
    %v3811 = vpack.c.b16 %v3799, %v3798
    %v3812 = vpack.c.b16 %v3801, %v3800
    %v3813 = vpack.c.b16 %v3803, %v3802
    %v3814 = vpack.c.b16 %v3805, %v3804
    %v3815 = vpack.c.b16 %v3807, %v3806
    %3824 = vmatpush.bf16.msra.mxu0 %v3815
    %3825 = vmatpush.bf16.msra.mxu0 %v3814
    %3826 = vmatpush.bf16.msra.mxu0 %v3813
    %3827 = vmatpush.bf16.msra.mxu0 %v3812
    %3828 = vmatpush.bf16.msra.mxu0 %v3811
    %3829 = vmatpush.bf16.msra.mxu0 %v3810
    %3830 = vmatpush.bf16.msra.mxu0 %v3809
    %3831 = vmatpush.bf16.msra.mxu0 %v3808
    %3832 = vmatmul.bf16.gmra.mxu0 %v3751
    %v3833 = vpop.f32.mrf.mxu0
    %v3834 = vadd.f32 0.0, %v3833
    %v3835 = vpop.f32.mrf.mxu0
    %v3836 = vadd.f32 0.0, %v3835
    %3837 = vmatmul.bf16.gmra.mxu0 %v3752
    %v3838 = vpop.f32.mrf.mxu0
    %v3839 = vadd.f32 0.0, %v3838
    %v3840 = vpop.f32.mrf.mxu0
    %v3841 = vadd.f32 0.0, %v3840
    %3842 = vmatmul.bf16.gmra.mxu0 %v3753
    %v3843 = vpop.f32.mrf.mxu0
    %v3844 = vadd.f32 0.0, %v3843
    %v3845 = vpop.f32.mrf.mxu0
    %v3846 = vadd.f32 0.0, %v3845
    %3847 = vmatmul.bf16.gmra.mxu0 %v3754
    %v3848 = vpop.f32.mrf.mxu0
    %v3849 = vadd.f32 0.0, %v3848
    %v3850 = vpop.f32.mrf.mxu0
    %v3851 = vadd.f32 0.0, %v3850
    %3852 = vmatmul.bf16.gmra.mxu0 %v3755
    %v3853 = vpop.f32.mrf.mxu0
    %v3854 = vadd.f32 0.0, %v3853
    %v3855 = vpop.f32.mrf.mxu0
    %v3856 = vadd.f32 0.0, %v3855
    %3857 = vmatmul.bf16.gmra.mxu0 %v3756
    %v3858 = vpop.f32.mrf.mxu0
    %v3859 = vadd.f32 0.0, %v3858
    %v3860 = vpop.f32.mrf.mxu0
    %v3861 = vadd.f32 0.0, %v3860
    %3862 = vmatmul.bf16.gmra.mxu0 %v3757
    %v3863 = vpop.f32.mrf.mxu0
    %v3864 = vadd.f32 0.0, %v3863
    %v3865 = vpop.f32.mrf.mxu0
    %v3866 = vadd.f32 0.0, %v3865
    %3867 = vmatmul.bf16.gmra.mxu0 %v3758
    %v3868 = vpop.f32.mrf.mxu0
    %v3869 = vadd.f32 0.0, %v3868
    %v3870 = vpop.f32.mrf.mxu0
    %v3871 = vadd.f32 0.0, %v3870
    %3872 = vdwg.mxu0
    %v3889 = vunpack.c.l.b16 %v3719
    %v3890 = vunpack.c.l.b16 %v3720
    %v3891 = vunpack.c.l.b16 %v3721
    %v3892 = vunpack.c.l.b16 %v3722
    %v3893 = vunpack.c.l.b16 %v3723
    %v3894 = vunpack.c.l.b16 %v3724
    %v3895 = vunpack.c.l.b16 %v3725
    %v3896 = vunpack.c.l.b16 %v3726
    %v3897 = vunpack.c.l.b16 %v3727
    %v3898 = vunpack.c.l.b16 %v3728
    %v3899 = vunpack.c.l.b16 %v3729
    %v3900 = vunpack.c.l.b16 %v3730
    %v3901 = vunpack.c.l.b16 %v3731
    %v3902 = vunpack.c.l.b16 %v3732
    %v3903 = vunpack.c.l.b16 %v3733
    %v3904 = vunpack.c.l.b16 %v3734
    %v3905 = vpack.c.b16 %v3890, %v3889
    %v3906 = vpack.c.b16 %v3892, %v3891
    %v3907 = vpack.c.b16 %v3894, %v3893
    %v3908 = vpack.c.b16 %v3896, %v3895
    %v3909 = vpack.c.b16 %v3898, %v3897
    %v3910 = vpack.c.b16 %v3900, %v3899
    %v3911 = vpack.c.b16 %v3902, %v3901
    %v3912 = vpack.c.b16 %v3904, %v3903
    %3921 = vmatpush.bf16.msra.mxu0 %v3912
    %3922 = vmatpush.bf16.msra.mxu0 %v3911
    %3923 = vmatpush.bf16.msra.mxu0 %v3910
    %3924 = vmatpush.bf16.msra.mxu0 %v3909
    %3925 = vmatpush.bf16.msra.mxu0 %v3908
    %3926 = vmatpush.bf16.msra.mxu0 %v3907
    %3927 = vmatpush.bf16.msra.mxu0 %v3906
    %3928 = vmatpush.bf16.msra.mxu0 %v3905
    %3929 = vmatmul.bf16.gmra.mxu0 %v3711
    %v3930 = vpop.f32.mrf.mxu0
    %v3931 = vadd.f32 %v3834, %v3930
    %v3932 = vpop.f32.mrf.mxu0
    %v3933 = vadd.f32 %v3836, %v3932
    %3934 = vmatmul.bf16.gmra.mxu0 %v3712
    %v3935 = vpop.f32.mrf.mxu0
    %v3936 = vadd.f32 %v3839, %v3935
    %v3937 = vpop.f32.mrf.mxu0
    %v3938 = vadd.f32 %v3841, %v3937
    %3939 = vmatmul.bf16.gmra.mxu0 %v3713
    %v3940 = vpop.f32.mrf.mxu0
    %v3941 = vadd.f32 %v3844, %v3940
    %v3942 = vpop.f32.mrf.mxu0
    %v3943 = vadd.f32 %v3846, %v3942
    %3944 = vmatmul.bf16.gmra.mxu0 %v3714
    %v3945 = vpop.f32.mrf.mxu0
    %v3946 = vadd.f32 %v3849, %v3945
    %v3947 = vpop.f32.mrf.mxu0
    %v3948 = vadd.f32 %v3851, %v3947
    %3949 = vmatmul.bf16.gmra.mxu0 %v3715
    %v3950 = vpop.f32.mrf.mxu0
    %v3951 = vadd.f32 %v3854, %v3950
    %v3952 = vpop.f32.mrf.mxu0
    %v3953 = vadd.f32 %v3856, %v3952
    %3954 = vmatmul.bf16.gmra.mxu0 %v3716
    %v3955 = vpop.f32.mrf.mxu0
    %v3956 = vadd.f32 %v3859, %v3955
    %v3957 = vpop.f32.mrf.mxu0
    %v3958 = vadd.f32 %v3861, %v3957
    %3959 = vmatmul.bf16.gmra.mxu0 %v3717
    %v3960 = vpop.f32.mrf.mxu0
    %v3961 = vadd.f32 %v3864, %v3960
    %v3962 = vpop.f32.mrf.mxu0
    %v3963 = vadd.f32 %v3866, %v3962
    %3964 = vmatmul.bf16.gmra.mxu0 %v3718
    %v3965 = vpop.f32.mrf.mxu0
    %v3966 = vadd.f32 %v3869, %v3965
    %v3967 = vpop.f32.mrf.mxu0
    %v3968 = vadd.f32 %v3871, %v3967
    %3969 = vdwg.mxu0
    %v3970 = vld [vmem:[#allocation3 + $0x2] sm:$0xff]
    %v3971 = vld [vmem:[#allocation3 + $0x12] sm:$0xff]
    %v3972 = vld [vmem:[#allocation3 + $0x22] sm:$0xff]
    %v3973 = vld [vmem:[#allocation3 + $0x32] sm:$0xff]
    %v3974 = vld [vmem:[#allocation3 + $0x42] sm:$0xff]
    %v3975 = vld [vmem:[#allocation3 + $0x52] sm:$0xff]
    %v3976 = vld [vmem:[#allocation3 + $0x62] sm:$0xff]
    %v3977 = vld [vmem:[#allocation3 + $0x72] sm:$0xff]
    %v3978 = vld [vmem:[#allocation3 + $0x82] sm:$0xff]
    %v3979 = vld [vmem:[#allocation3 + $0x92] sm:$0xff]
    %v3980 = vld [vmem:[#allocation3 + $0xa2] sm:$0xff]
    %v3981 = vld [vmem:[#allocation3 + $0xb2] sm:$0xff]
    %v3982 = vld [vmem:[#allocation3 + $0xc2] sm:$0xff]
    %v3983 = vld [vmem:[#allocation3 + $0xd2] sm:$0xff]
    %v3984 = vld [vmem:[#allocation3 + $0xe2] sm:$0xff]
    %v3985 = vld [vmem:[#allocation3 + $0xf2] sm:$0xff]
    %v3986 = vpack.c.bf16 %v3971, %v3970
    %v3987 = vpack.c.bf16 %v3973, %v3972
    %v3988 = vpack.c.bf16 %v3975, %v3974
    %v3989 = vpack.c.bf16 %v3977, %v3976
    %v3990 = vpack.c.bf16 %v3979, %v3978
    %v3991 = vpack.c.bf16 %v3981, %v3980
    %v3992 = vpack.c.bf16 %v3983, %v3982
    %v3993 = vpack.c.bf16 %v3985, %v3984
    %s3994 = scalar_lea.vmem %s5, 128
    %v3995 = vld [vmem:[%s3994] sm:$0xf]
    %v3996 = vld [vmem:[%s3994 + $0x4] sm:$0xf]
    %v3997 = vld [vmem:[%s3994 + $0x8] sm:$0xf]
    %v3998 = vld [vmem:[%s3994 + $0xc] sm:$0xf]
    %v3999 = vld [vmem:[%s3994 + $0x10] sm:$0xf]
    %v4000 = vld [vmem:[%s3994 + $0x14] sm:$0xf]
    %v4001 = vld [vmem:[%s3994 + $0x18] sm:$0xf]
    %v4002 = vld [vmem:[%s3994 + $0x1c] sm:$0xf]
    %v4003 = vld [vmem:[%s3994 + $0x20] sm:$0xf]
    %v4004 = vld [vmem:[%s3994 + $0x24] sm:$0xf]
    %v4005 = vld [vmem:[%s3994 + $0x28] sm:$0xf]
    %v4006 = vld [vmem:[%s3994 + $0x2c] sm:$0xf]
    %v4007 = vld [vmem:[%s3994 + $0x30] sm:$0xf]
    %v4008 = vld [vmem:[%s3994 + $0x34] sm:$0xf]
    %v4009 = vld [vmem:[%s3994 + $0x38] sm:$0xf]
    %v4010 = vld [vmem:[%s3994 + $0x3c] sm:$0xf]
    %v4027 = vunpack.c.l.b16 %v3995
    %v4028 = vunpack.c.l.b16 %v3996
    %v4029 = vunpack.c.l.b16 %v3997
    %v4030 = vunpack.c.l.b16 %v3998
    %v4031 = vunpack.c.l.b16 %v3999
    %v4032 = vunpack.c.l.b16 %v4000
    %v4033 = vunpack.c.l.b16 %v4001
    %v4034 = vunpack.c.l.b16 %v4002
    %v4035 = vunpack.c.l.b16 %v4003
    %v4036 = vunpack.c.l.b16 %v4004
    %v4037 = vunpack.c.l.b16 %v4005
    %v4038 = vunpack.c.l.b16 %v4006
    %v4039 = vunpack.c.l.b16 %v4007
    %v4040 = vunpack.c.l.b16 %v4008
    %v4041 = vunpack.c.l.b16 %v4009
    %v4042 = vunpack.c.l.b16 %v4010
    %v4043 = vpack.c.b16 %v4028, %v4027
    %v4044 = vpack.c.b16 %v4030, %v4029
    %v4045 = vpack.c.b16 %v4032, %v4031
    %v4046 = vpack.c.b16 %v4034, %v4033
    %v4047 = vpack.c.b16 %v4036, %v4035
    %v4048 = vpack.c.b16 %v4038, %v4037
    %v4049 = vpack.c.b16 %v4040, %v4039
    %v4050 = vpack.c.b16 %v4042, %v4041
    %4059 = vmatpush.bf16.msra.mxu0 %v4050
    %4060 = vmatpush.bf16.msra.mxu0 %v4049
    %4061 = vmatpush.bf16.msra.mxu0 %v4048
    %4062 = vmatpush.bf16.msra.mxu0 %v4047
    %4063 = vmatpush.bf16.msra.mxu0 %v4046
    %4064 = vmatpush.bf16.msra.mxu0 %v4045
    %4065 = vmatpush.bf16.msra.mxu0 %v4044
    %4066 = vmatpush.bf16.msra.mxu0 %v4043
    %4067 = vmatmul.bf16.gmra.mxu0 %v3986
    %v4068 = vpop.f32.mrf.mxu0
    %v4069 = vadd.f32 0.0, %v4068
    %v4070 = vpop.f32.mrf.mxu0
    %v4071 = vadd.f32 0.0, %v4070
    %4072 = vmatmul.bf16.gmra.mxu0 %v3987
    %v4073 = vpop.f32.mrf.mxu0
    %v4074 = vadd.f32 0.0, %v4073
    %v4075 = vpop.f32.mrf.mxu0
    %v4076 = vadd.f32 0.0, %v4075
    %4077 = vmatmul.bf16.gmra.mxu0 %v3988
    %v4078 = vpop.f32.mrf.mxu0
    %v4079 = vadd.f32 0.0, %v4078
    %v4080 = vpop.f32.mrf.mxu0
    %v4081 = vadd.f32 0.0, %v4080
    %4082 = vmatmul.bf16.gmra.mxu0 %v3989
    %v4083 = vpop.f32.mrf.mxu0
    %v4084 = vadd.f32 0.0, %v4083
    %v4085 = vpop.f32.mrf.mxu0
    %v4086 = vadd.f32 0.0, %v4085
    %4087 = vmatmul.bf16.gmra.mxu0 %v3990
    %v4088 = vpop.f32.mrf.mxu0
    %v4089 = vadd.f32 0.0, %v4088
    %v4090 = vpop.f32.mrf.mxu0
    %v4091 = vadd.f32 0.0, %v4090
    %4092 = vmatmul.bf16.gmra.mxu0 %v3991
    %v4093 = vpop.f32.mrf.mxu0
    %v4094 = vadd.f32 0.0, %v4093
    %v4095 = vpop.f32.mrf.mxu0
    %v4096 = vadd.f32 0.0, %v4095
    %4097 = vmatmul.bf16.gmra.mxu0 %v3992
    %v4098 = vpop.f32.mrf.mxu0
    %v4099 = vadd.f32 0.0, %v4098
    %v4100 = vpop.f32.mrf.mxu0
    %v4101 = vadd.f32 0.0, %v4100
    %4102 = vmatmul.bf16.gmra.mxu0 %v3993
    %v4103 = vpop.f32.mrf.mxu0
    %v4104 = vadd.f32 0.0, %v4103
    %v4105 = vpop.f32.mrf.mxu0
    %v4106 = vadd.f32 0.0, %v4105
    %4107 = vdwg.mxu0
    %v4108 = vadd.f32 %v3931, %v4069
    %v4109 = vadd.f32 %v3933, %v4071
    %v4110 = vadd.f32 %v3936, %v4074
    %v4111 = vadd.f32 %v3938, %v4076
    %v4112 = vadd.f32 %v3941, %v4079
    %v4113 = vadd.f32 %v3943, %v4081
    %v4114 = vadd.f32 %v3946, %v4084
    %v4115 = vadd.f32 %v3948, %v4086
    %v4116 = vadd.f32 %v3951, %v4089
    %v4117 = vadd.f32 %v3953, %v4091
    %v4118 = vadd.f32 %v3956, %v4094
    %v4119 = vadd.f32 %v3958, %v4096
    %v4120 = vadd.f32 %v3961, %v4099
    %v4121 = vadd.f32 %v3963, %v4101
    %v4122 = vadd.f32 %v3966, %v4104
    %v4123 = vadd.f32 %v3968, %v4106
    %v4124 = vld [vmem:[#allocation3 + $0x3] sm:$0xff]
    %v4125 = vld [vmem:[#allocation3 + $0x13] sm:$0xff]
    %v4126 = vld [vmem:[#allocation3 + $0x23] sm:$0xff]
    %v4127 = vld [vmem:[#allocation3 + $0x33] sm:$0xff]
    %v4128 = vld [vmem:[#allocation3 + $0x43] sm:$0xff]
    %v4129 = vld [vmem:[#allocation3 + $0x53] sm:$0xff]
    %v4130 = vld [vmem:[#allocation3 + $0x63] sm:$0xff]
    %v4131 = vld [vmem:[#allocation3 + $0x73] sm:$0xff]
    %v4132 = vld [vmem:[#allocation3 + $0x83] sm:$0xff]
    %v4133 = vld [vmem:[#allocation3 + $0x93] sm:$0xff]
    %v4134 = vld [vmem:[#allocation3 + $0xa3] sm:$0xff]
    %v4135 = vld [vmem:[#allocation3 + $0xb3] sm:$0xff]
    %v4136 = vld [vmem:[#allocation3 + $0xc3] sm:$0xff]
    %v4137 = vld [vmem:[#allocation3 + $0xd3] sm:$0xff]
    %v4138 = vld [vmem:[#allocation3 + $0xe3] sm:$0xff]
    %v4139 = vld [vmem:[#allocation3 + $0xf3] sm:$0xff]
    %v4140 = vpack.c.bf16 %v4125, %v4124
    %v4141 = vpack.c.bf16 %v4127, %v4126
    %v4142 = vpack.c.bf16 %v4129, %v4128
    %v4143 = vpack.c.bf16 %v4131, %v4130
    %v4144 = vpack.c.bf16 %v4133, %v4132
    %v4145 = vpack.c.bf16 %v4135, %v4134
    %v4146 = vpack.c.bf16 %v4137, %v4136
    %v4147 = vpack.c.bf16 %v4139, %v4138
    %s4148 = scalar_lea.vmem %s5, 192
    %v4149 = vld [vmem:[%s4148] sm:$0xf]
    %v4150 = vld [vmem:[%s4148 + $0x4] sm:$0xf]
    %v4151 = vld [vmem:[%s4148 + $0x8] sm:$0xf]
    %v4152 = vld [vmem:[%s4148 + $0xc] sm:$0xf]
    %v4153 = vld [vmem:[%s4148 + $0x10] sm:$0xf]
    %v4154 = vld [vmem:[%s4148 + $0x14] sm:$0xf]
    %v4155 = vld [vmem:[%s4148 + $0x18] sm:$0xf]
    %v4156 = vld [vmem:[%s4148 + $0x1c] sm:$0xf]
    %v4157 = vld [vmem:[%s4148 + $0x20] sm:$0xf]
    %v4158 = vld [vmem:[%s4148 + $0x24] sm:$0xf]
    %v4159 = vld [vmem:[%s4148 + $0x28] sm:$0xf]
    %v4160 = vld [vmem:[%s4148 + $0x2c] sm:$0xf]
    %v4161 = vld [vmem:[%s4148 + $0x30] sm:$0xf]
    %v4162 = vld [vmem:[%s4148 + $0x34] sm:$0xf]
    %v4163 = vld [vmem:[%s4148 + $0x38] sm:$0xf]
    %v4164 = vld [vmem:[%s4148 + $0x3c] sm:$0xf]
    %v4181 = vunpack.c.l.b16 %v4149
    %v4182 = vunpack.c.l.b16 %v4150
    %v4183 = vunpack.c.l.b16 %v4151
    %v4184 = vunpack.c.l.b16 %v4152
    %v4185 = vunpack.c.l.b16 %v4153
    %v4186 = vunpack.c.l.b16 %v4154
    %v4187 = vunpack.c.l.b16 %v4155
    %v4188 = vunpack.c.l.b16 %v4156
    %v4189 = vunpack.c.l.b16 %v4157
    %v4190 = vunpack.c.l.b16 %v4158
    %v4191 = vunpack.c.l.b16 %v4159
    %v4192 = vunpack.c.l.b16 %v4160
    %v4193 = vunpack.c.l.b16 %v4161
    %v4194 = vunpack.c.l.b16 %v4162
    %v4195 = vunpack.c.l.b16 %v4163
    %v4196 = vunpack.c.l.b16 %v4164
    %v4197 = vpack.c.b16 %v4182, %v4181
    %v4198 = vpack.c.b16 %v4184, %v4183
    %v4199 = vpack.c.b16 %v4186, %v4185
    %v4200 = vpack.c.b16 %v4188, %v4187
    %v4201 = vpack.c.b16 %v4190, %v4189
    %v4202 = vpack.c.b16 %v4192, %v4191
    %v4203 = vpack.c.b16 %v4194, %v4193
    %v4204 = vpack.c.b16 %v4196, %v4195
    %4213 = vmatpush.bf16.msra.mxu0 %v4204
    %4214 = vmatpush.bf16.msra.mxu0 %v4203
    %4215 = vmatpush.bf16.msra.mxu0 %v4202
    %4216 = vmatpush.bf16.msra.mxu0 %v4201
    %4217 = vmatpush.bf16.msra.mxu0 %v4200
    %4218 = vmatpush.bf16.msra.mxu0 %v4199
    %4219 = vmatpush.bf16.msra.mxu0 %v4198
    %4220 = vmatpush.bf16.msra.mxu0 %v4197
    %4221 = vmatmul.bf16.gmra.mxu0 %v4140
    %v4222 = vpop.f32.mrf.mxu0
    %v4223 = vadd.f32 0.0, %v4222
    %v4224 = vpop.f32.mrf.mxu0
    %v4225 = vadd.f32 0.0, %v4224
    %4226 = vmatmul.bf16.gmra.mxu0 %v4141
    %v4227 = vpop.f32.mrf.mxu0
    %v4228 = vadd.f32 0.0, %v4227
    %v4229 = vpop.f32.mrf.mxu0
    %v4230 = vadd.f32 0.0, %v4229
    %4231 = vmatmul.bf16.gmra.mxu0 %v4142
    %v4232 = vpop.f32.mrf.mxu0
    %v4233 = vadd.f32 0.0, %v4232
    %v4234 = vpop.f32.mrf.mxu0
    %v4235 = vadd.f32 0.0, %v4234
    %4236 = vmatmul.bf16.gmra.mxu0 %v4143
    %v4237 = vpop.f32.mrf.mxu0
    %v4238 = vadd.f32 0.0, %v4237
    %v4239 = vpop.f32.mrf.mxu0
    %v4240 = vadd.f32 0.0, %v4239
    %4241 = vmatmul.bf16.gmra.mxu0 %v4144
    %v4242 = vpop.f32.mrf.mxu0
    %v4243 = vadd.f32 0.0, %v4242
    %v4244 = vpop.f32.mrf.mxu0
    %v4245 = vadd.f32 0.0, %v4244
    %4246 = vmatmul.bf16.gmra.mxu0 %v4145
    %v4247 = vpop.f32.mrf.mxu0
    %v4248 = vadd.f32 0.0, %v4247
    %v4249 = vpop.f32.mrf.mxu0
    %v4250 = vadd.f32 0.0, %v4249
    %4251 = vmatmul.bf16.gmra.mxu0 %v4146
    %v4252 = vpop.f32.mrf.mxu0
    %v4253 = vadd.f32 0.0, %v4252
    %v4254 = vpop.f32.mrf.mxu0
    %v4255 = vadd.f32 0.0, %v4254
    %4256 = vmatmul.bf16.gmra.mxu0 %v4147
    %v4257 = vpop.f32.mrf.mxu0
    %v4258 = vadd.f32 0.0, %v4257
    %v4259 = vpop.f32.mrf.mxu0
    %v4260 = vadd.f32 0.0, %v4259
    %4261 = vdwg.mxu0
    %v4262 = vadd.f32 %v4108, %v4223
    %v4263 = vadd.f32 %v4109, %v4225
    %v4264 = vadd.f32 %v4110, %v4228
    %v4265 = vadd.f32 %v4111, %v4230
    %v4266 = vadd.f32 %v4112, %v4233
    %v4267 = vadd.f32 %v4113, %v4235
    %v4268 = vadd.f32 %v4114, %v4238
    %v4269 = vadd.f32 %v4115, %v4240
    %v4270 = vadd.f32 %v4116, %v4243
    %v4271 = vadd.f32 %v4117, %v4245
    %v4272 = vadd.f32 %v4118, %v4248
    %v4273 = vadd.f32 %v4119, %v4250
    %v4274 = vadd.f32 %v4120, %v4253
    %v4275 = vadd.f32 %v4121, %v4255
    %v4276 = vadd.f32 %v4122, %v4258
    %v4277 = vadd.f32 %v4123, %v4260
    %v4278 = vld [vmem:[#allocation3 + $0x4] sm:$0xff]
    %v4279 = vld [vmem:[#allocation3 + $0x14] sm:$0xff]
    %v4280 = vld [vmem:[#allocation3 + $0x24] sm:$0xff]
    %v4281 = vld [vmem:[#allocation3 + $0x34] sm:$0xff]
    %v4282 = vld [vmem:[#allocation3 + $0x44] sm:$0xff]
    %v4283 = vld [vmem:[#allocation3 + $0x54] sm:$0xff]
    %v4284 = vld [vmem:[#allocation3 + $0x64] sm:$0xff]
    %v4285 = vld [vmem:[#allocation3 + $0x74] sm:$0xff]
    %v4286 = vld [vmem:[#allocation3 + $0x84] sm:$0xff]
    %v4287 = vld [vmem:[#allocation3 + $0x94] sm:$0xff]
    %v4288 = vld [vmem:[#allocation3 + $0xa4] sm:$0xff]
    %v4289 = vld [vmem:[#allocation3 + $0xb4] sm:$0xff]
    %v4290 = vld [vmem:[#allocation3 + $0xc4] sm:$0xff]
    %v4291 = vld [vmem:[#allocation3 + $0xd4] sm:$0xff]
    %v4292 = vld [vmem:[#allocation3 + $0xe4] sm:$0xff]
    %v4293 = vld [vmem:[#allocation3 + $0xf4] sm:$0xff]
    %v4294 = vpack.c.bf16 %v4279, %v4278
    %v4295 = vpack.c.bf16 %v4281, %v4280
    %v4296 = vpack.c.bf16 %v4283, %v4282
    %v4297 = vpack.c.bf16 %v4285, %v4284
    %v4298 = vpack.c.bf16 %v4287, %v4286
    %v4299 = vpack.c.bf16 %v4289, %v4288
    %v4300 = vpack.c.bf16 %v4291, %v4290
    %v4301 = vpack.c.bf16 %v4293, %v4292
    %s4302 = scalar_lea.vmem %s5, 256
    %v4303 = vld [vmem:[%s4302] sm:$0xf]
    %v4304 = vld [vmem:[%s4302 + $0x4] sm:$0xf]
    %v4305 = vld [vmem:[%s4302 + $0x8] sm:$0xf]
    %v4306 = vld [vmem:[%s4302 + $0xc] sm:$0xf]
    %v4307 = vld [vmem:[%s4302 + $0x10] sm:$0xf]
    %v4308 = vld [vmem:[%s4302 + $0x14] sm:$0xf]
    %v4309 = vld [vmem:[%s4302 + $0x18] sm:$0xf]
    %v4310 = vld [vmem:[%s4302 + $0x1c] sm:$0xf]
    %v4311 = vld [vmem:[%s4302 + $0x20] sm:$0xf]
    %v4312 = vld [vmem:[%s4302 + $0x24] sm:$0xf]
    %v4313 = vld [vmem:[%s4302 + $0x28] sm:$0xf]
    %v4314 = vld [vmem:[%s4302 + $0x2c] sm:$0xf]
    %v4315 = vld [vmem:[%s4302 + $0x30] sm:$0xf]
    %v4316 = vld [vmem:[%s4302 + $0x34] sm:$0xf]
    %v4317 = vld [vmem:[%s4302 + $0x38] sm:$0xf]
    %v4318 = vld [vmem:[%s4302 + $0x3c] sm:$0xf]
    %v4335 = vunpack.c.l.b16 %v4303
    %v4336 = vunpack.c.l.b16 %v4304
    %v4337 = vunpack.c.l.b16 %v4305
    %v4338 = vunpack.c.l.b16 %v4306
    %v4339 = vunpack.c.l.b16 %v4307
    %v4340 = vunpack.c.l.b16 %v4308
    %v4341 = vunpack.c.l.b16 %v4309
    %v4342 = vunpack.c.l.b16 %v4310
    %v4343 = vunpack.c.l.b16 %v4311
    %v4344 = vunpack.c.l.b16 %v4312
    %v4345 = vunpack.c.l.b16 %v4313
    %v4346 = vunpack.c.l.b16 %v4314
    %v4347 = vunpack.c.l.b16 %v4315
    %v4348 = vunpack.c.l.b16 %v4316
    %v4349 = vunpack.c.l.b16 %v4317
    %v4350 = vunpack.c.l.b16 %v4318
    %v4351 = vpack.c.b16 %v4336, %v4335
    %v4352 = vpack.c.b16 %v4338, %v4337
    %v4353 = vpack.c.b16 %v4340, %v4339
    %v4354 = vpack.c.b16 %v4342, %v4341
    %v4355 = vpack.c.b16 %v4344, %v4343
    %v4356 = vpack.c.b16 %v4346, %v4345
    %v4357 = vpack.c.b16 %v4348, %v4347
    %v4358 = vpack.c.b16 %v4350, %v4349
    %4367 = vmatpush.bf16.msra.mxu0 %v4358
    %4368 = vmatpush.bf16.msra.mxu0 %v4357
    %4369 = vmatpush.bf16.msra.mxu0 %v4356
    %4370 = vmatpush.bf16.msra.mxu0 %v4355
    %4371 = vmatpush.bf16.msra.mxu0 %v4354
    %4372 = vmatpush.bf16.msra.mxu0 %v4353
    %4373 = vmatpush.bf16.msra.mxu0 %v4352
    %4374 = vmatpush.bf16.msra.mxu0 %v4351
    %4375 = vmatmul.bf16.gmra.mxu0 %v4294
    %v4376 = vpop.f32.mrf.mxu0
    %v4377 = vadd.f32 0.0, %v4376
    %v4378 = vpop.f32.mrf.mxu0
    %v4379 = vadd.f32 0.0, %v4378
    %4380 = vmatmul.bf16.gmra.mxu0 %v4295
    %v4381 = vpop.f32.mrf.mxu0
    %v4382 = vadd.f32 0.0, %v4381
    %v4383 = vpop.f32.mrf.mxu0
    %v4384 = vadd.f32 0.0, %v4383
    %4385 = vmatmul.bf16.gmra.mxu0 %v4296
    %v4386 = vpop.f32.mrf.mxu0
    %v4387 = vadd.f32 0.0, %v4386
    %v4388 = vpop.f32.mrf.mxu0
    %v4389 = vadd.f32 0.0, %v4388
    %4390 = vmatmul.bf16.gmra.mxu0 %v4297
    %v4391 = vpop.f32.mrf.mxu0
    %v4392 = vadd.f32 0.0, %v4391
    %v4393 = vpop.f32.mrf.mxu0
    %v4394 = vadd.f32 0.0, %v4393
    %4395 = vmatmul.bf16.gmra.mxu0 %v4298
    %v4396 = vpop.f32.mrf.mxu0
    %v4397 = vadd.f32 0.0, %v4396
    %v4398 = vpop.f32.mrf.mxu0
    %v4399 = vadd.f32 0.0, %v4398
    %4400 = vmatmul.bf16.gmra.mxu0 %v4299
    %v4401 = vpop.f32.mrf.mxu0
    %v4402 = vadd.f32 0.0, %v4401
    %v4403 = vpop.f32.mrf.mxu0
    %v4404 = vadd.f32 0.0, %v4403
    %4405 = vmatmul.bf16.gmra.mxu0 %v4300
    %v4406 = vpop.f32.mrf.mxu0
    %v4407 = vadd.f32 0.0, %v4406
    %v4408 = vpop.f32.mrf.mxu0
    %v4409 = vadd.f32 0.0, %v4408
    %4410 = vmatmul.bf16.gmra.mxu0 %v4301
    %v4411 = vpop.f32.mrf.mxu0
    %v4412 = vadd.f32 0.0, %v4411
    %v4413 = vpop.f32.mrf.mxu0
    %v4414 = vadd.f32 0.0, %v4413
    %4415 = vdwg.mxu0
    %v4416 = vadd.f32 %v4262, %v4377
    %v4417 = vadd.f32 %v4263, %v4379
    %v4418 = vadd.f32 %v4264, %v4382
    %v4419 = vadd.f32 %v4265, %v4384
    %v4420 = vadd.f32 %v4266, %v4387
    %v4421 = vadd.f32 %v4267, %v4389
    %v4422 = vadd.f32 %v4268, %v4392
    %v4423 = vadd.f32 %v4269, %v4394
    %v4424 = vadd.f32 %v4270, %v4397
    %v4425 = vadd.f32 %v4271, %v4399
    %v4426 = vadd.f32 %v4272, %v4402
    %v4427 = vadd.f32 %v4273, %v4404
    %v4428 = vadd.f32 %v4274, %v4407
    %v4429 = vadd.f32 %v4275, %v4409
    %v4430 = vadd.f32 %v4276, %v4412
    %v4431 = vadd.f32 %v4277, %v4414
    %v4432 = vld [vmem:[%s4] sm:$0x1]
    %v4434 = vperm.slane %v4432, 0
    %v4436 = vadd.f32 %v4416, %v4434
    %v4437 = vadd.f32 %v4417, %v4434
    %v4438 = vadd.f32 %v4418, %v4434
    %v4439 = vadd.f32 %v4419, %v4434
    %v4440 = vadd.f32 %v4420, %v4434
    %v4441 = vadd.f32 %v4421, %v4434
    %v4442 = vadd.f32 %v4422, %v4434
    %v4443 = vadd.f32 %v4423, %v4434
    %v4444 = vadd.f32 %v4424, %v4434
    %v4445 = vadd.f32 %v4425, %v4434
    %v4446 = vadd.f32 %v4426, %v4434
    %v4447 = vadd.f32 %v4427, %v4434
    %v4448 = vadd.f32 %v4428, %v4434
    %v4449 = vadd.f32 %v4429, %v4434
    %v4450 = vadd.f32 %v4430, %v4434
    %v4451 = vadd.f32 %v4431, %v4434
    %v4452 = vmax.f32 %v4436, 0.0
    %v4453 = vmax.f32 %v4437, 0.0
    %v4454 = vmax.f32 %v4438, 0.0
    %v4455 = vmax.f32 %v4439, 0.0
    %v4456 = vmax.f32 %v4440, 0.0
    %v4457 = vmax.f32 %v4441, 0.0
    %v4458 = vmax.f32 %v4442, 0.0
    %v4459 = vmax.f32 %v4443, 0.0
    %v4460 = vmax.f32 %v4444, 0.0
    %v4461 = vmax.f32 %v4445, 0.0
    %v4462 = vmax.f32 %v4446, 0.0
    %v4463 = vmax.f32 %v4447, 0.0
    %v4464 = vmax.f32 %v4448, 0.0
    %v4465 = vmax.f32 %v4449, 0.0
    %v4466 = vmax.f32 %v4450, 0.0
    %v4467 = vmax.f32 %v4451, 0.0
    %v4468 = vmax.f32 %v4452, %v4453
    %v4469 = vmax.f32 %v4454, %v4455
    %v4470 = vmax.f32 %v4456, %v4457
    %v4471 = vmax.f32 %v4458, %v4459
    %v4472 = vmax.f32 %v4460, %v4461
    %v4473 = vmax.f32 %v4462, %v4463
    %v4474 = vmax.f32 %v4464, %v4465
    %v4475 = vmax.f32 %v4466, %v4467
    %4476 = vst [vmem:[#allocation4] sm:$0xff] %v4468
    %4477 = vst [vmem:[#allocation4 + $0x8] sm:$0xff] %v4469
    %4478 = vst [vmem:[#allocation4 + $0x10] sm:$0xff] %v4470
    %4479 = vst [vmem:[#allocation4 + $0x18] sm:$0xff] %v4471
    %4480 = vst [vmem:[#allocation4 + $0x20] sm:$0xff] %v4472
    %4481 = vst [vmem:[#allocation4 + $0x28] sm:$0xff] %v4473
    %4482 = vst [vmem:[#allocation4 + $0x30] sm:$0xff] %v4474
    %4483 = vst [vmem:[#allocation4 + $0x38] sm:$0xff] %v4475
    %v4484 = vld [vmem:[%s7] sm:$0x1]
    %v4486 = vperm.slane %v4484, 0
    %v4488 = vadd.f32 %v4486, 0.0
    %v4489 = vld [vmem:[#allocation4] sm:$0x1]
    %v4490 = vld [vmem:[#allocation4 + $0x20] sm:$0x1]
    %v4491 = vld [vmem:[#allocation4 + $0x1] sm:$0x1]
    %v4492 = vld [vmem:[#allocation4 + $0x21] sm:$0x1]
    %v4493 = vmax.f32 %v4489, %v4491
    %v4494 = vmax.f32 %v4490, %v4492
    %v4495 = vpack.c.bf16 %v4493, %v4493
    %v4496 = vpack.c.bf16 %v4494, %v4494
    %v4497 = vld [vmem:[%s6] sm:$0xf]
    %v4498 = vld [vmem:[%s6 + $0x4] sm:$0xf]
    %v4499 = vld [vmem:[%s6 + $0x8] sm:$0xf]
    %v4500 = vld [vmem:[%s6 + $0xc] sm:$0xf]
    %v4501 = vld [vmem:[%s6 + $0x10] sm:$0xf]
    %v4502 = vld [vmem:[%s6 + $0x14] sm:$0xf]
    %v4503 = vld [vmem:[%s6 + $0x18] sm:$0xf]
    %v4504 = vld [vmem:[%s6 + $0x1c] sm:$0xf]
    %v4505 = vld [vmem:[%s6 + $0x20] sm:$0xf]
    %v4506 = vld [vmem:[%s6 + $0x24] sm:$0xf]
    %v4507 = vld [vmem:[%s6 + $0x28] sm:$0xf]
    %v4508 = vld [vmem:[%s6 + $0x2c] sm:$0xf]
    %v4509 = vld [vmem:[%s6 + $0x30] sm:$0xf]
    %v4510 = vld [vmem:[%s6 + $0x34] sm:$0xf]
    %v4511 = vld [vmem:[%s6 + $0x38] sm:$0xf]
    %v4512 = vld [vmem:[%s6 + $0x3c] sm:$0xf]
    %v4515 = vunpack.c.l.b16 %v4495
    %v4516 = vunpack.c.l.b16 %v4496
    %v4517 = vrot.slane %v4516, 7
    %vm4518 = vcmask 1041409
    %v4519 = vsel %vm4518, %v4517, %v4515
    %v4520 = vpack.c.b16 %v4519, %v4519
    %v4538 = vunpack.c.l.b16 %v4497
    %v4539 = vunpack.c.l.b16 %v4498
    %v4540 = vunpack.c.l.b16 %v4499
    %v4541 = vunpack.c.l.b16 %v4500
    %v4542 = vunpack.c.l.b16 %v4501
    %v4543 = vunpack.c.l.b16 %v4502
    %v4544 = vunpack.c.l.b16 %v4503
    %v4545 = vunpack.c.l.b16 %v4504
    %v4546 = vunpack.c.l.b16 %v4505
    %v4547 = vunpack.c.l.b16 %v4506
    %v4548 = vunpack.c.l.b16 %v4507
    %v4549 = vunpack.c.l.b16 %v4508
    %v4550 = vunpack.c.l.b16 %v4509
    %v4551 = vunpack.c.l.b16 %v4510
    %v4552 = vunpack.c.l.b16 %v4511
    %v4553 = vunpack.c.l.b16 %v4512
    %v4554 = vpack.c.b16 %v4539, %v4538
    %v4555 = vpack.c.b16 %v4541, %v4540
    %v4556 = vpack.c.b16 %v4543, %v4542
    %v4557 = vpack.c.b16 %v4545, %v4544
    %v4558 = vpack.c.b16 %v4547, %v4546
    %v4559 = vpack.c.b16 %v4549, %v4548
    %v4560 = vpack.c.b16 %v4551, %v4550
    %v4561 = vpack.c.b16 %v4553, %v4552
    %4570 = vmatpush.bf16.msra.mxu0 %v4561
    %4571 = vmatpush.bf16.msra.mxu0 %v4560
    %4572 = vmatpush.bf16.msra.mxu0 %v4559
    %4573 = vmatpush.bf16.msra.mxu0 %v4558
    %4574 = vmatpush.bf16.msra.mxu0 %v4557
    %4575 = vmatpush.bf16.msra.mxu0 %v4556
    %4576 = vmatpush.bf16.msra.mxu0 %v4555
    %4577 = vmatpush.bf16.msra.mxu0 %v4554
    %4578 = vmatmul.bf16.gmra.mxu0 %v4520
    %v4579 = vpop.f32.mrf.mxu0
    %v4580 = vadd.f32 0.0, %v4579
    %v4581 = vpop.f32.mrf.mxu0
    %4582 = vdwg.mxu0
    %v4583 = vadd.f32 %v4488, %v4580
    %v4584 = vld [vmem:[#allocation4 + $0x2] sm:$0x1]
    %v4585 = vld [vmem:[#allocation4 + $0x22] sm:$0x1]
    %v4586 = vld [vmem:[#allocation4 + $0x3] sm:$0x1]
    %v4587 = vld [vmem:[#allocation4 + $0x23] sm:$0x1]
    %v4588 = vmax.f32 %v4584, %v4586
    %v4589 = vmax.f32 %v4585, %v4587
    %v4590 = vpack.c.bf16 %v4588, %v4588
    %v4591 = vpack.c.bf16 %v4589, %v4589
    %s4592 = scalar_lea.vmem %s6, 64
    %v4593 = vld [vmem:[%s4592] sm:$0xf]
    %v4594 = vld [vmem:[%s4592 + $0x4] sm:$0xf]
    %v4595 = vld [vmem:[%s4592 + $0x8] sm:$0xf]
    %v4596 = vld [vmem:[%s4592 + $0xc] sm:$0xf]
    %v4597 = vld [vmem:[%s4592 + $0x10] sm:$0xf]
    %v4598 = vld [vmem:[%s4592 + $0x14] sm:$0xf]
    %v4599 = vld [vmem:[%s4592 + $0x18] sm:$0xf]
    %v4600 = vld [vmem:[%s4592 + $0x1c] sm:$0xf]
    %v4601 = vld [vmem:[%s4592 + $0x20] sm:$0xf]
    %v4602 = vld [vmem:[%s4592 + $0x24] sm:$0xf]
    %v4603 = vld [vmem:[%s4592 + $0x28] sm:$0xf]
    %v4604 = vld [vmem:[%s4592 + $0x2c] sm:$0xf]
    %v4605 = vld [vmem:[%s4592 + $0x30] sm:$0xf]
    %v4606 = vld [vmem:[%s4592 + $0x34] sm:$0xf]
    %v4607 = vld [vmem:[%s4592 + $0x38] sm:$0xf]
    %v4608 = vld [vmem:[%s4592 + $0x3c] sm:$0xf]
    %v4611 = vunpack.c.l.b16 %v4590
    %v4612 = vunpack.c.l.b16 %v4591
    %v4613 = vrot.slane %v4612, 7
    %v4614 = vsel %vm4518, %v4613, %v4611
    %v4615 = vpack.c.b16 %v4614, %v4614
    %v4633 = vunpack.c.l.b16 %v4593
    %v4634 = vunpack.c.l.b16 %v4594
    %v4635 = vunpack.c.l.b16 %v4595
    %v4636 = vunpack.c.l.b16 %v4596
    %v4637 = vunpack.c.l.b16 %v4597
    %v4638 = vunpack.c.l.b16 %v4598
    %v4639 = vunpack.c.l.b16 %v4599
    %v4640 = vunpack.c.l.b16 %v4600
    %v4641 = vunpack.c.l.b16 %v4601
    %v4642 = vunpack.c.l.b16 %v4602
    %v4643 = vunpack.c.l.b16 %v4603
    %v4644 = vunpack.c.l.b16 %v4604
    %v4645 = vunpack.c.l.b16 %v4605
    %v4646 = vunpack.c.l.b16 %v4606
    %v4647 = vunpack.c.l.b16 %v4607
    %v4648 = vunpack.c.l.b16 %v4608
    %v4649 = vpack.c.b16 %v4634, %v4633
    %v4650 = vpack.c.b16 %v4636, %v4635
    %v4651 = vpack.c.b16 %v4638, %v4637
    %v4652 = vpack.c.b16 %v4640, %v4639
    %v4653 = vpack.c.b16 %v4642, %v4641
    %v4654 = vpack.c.b16 %v4644, %v4643
    %v4655 = vpack.c.b16 %v4646, %v4645
    %v4656 = vpack.c.b16 %v4648, %v4647
    %4665 = vmatpush.bf16.msra.mxu0 %v4656
    %4666 = vmatpush.bf16.msra.mxu0 %v4655
    %4667 = vmatpush.bf16.msra.mxu0 %v4654
    %4668 = vmatpush.bf16.msra.mxu0 %v4653
    %4669 = vmatpush.bf16.msra.mxu0 %v4652
    %4670 = vmatpush.bf16.msra.mxu0 %v4651
    %4671 = vmatpush.bf16.msra.mxu0 %v4650
    %4672 = vmatpush.bf16.msra.mxu0 %v4649
    %4673 = vmatmul.bf16.gmra.mxu0 %v4615
    %v4674 = vpop.f32.mrf.mxu0
    %v4675 = vadd.f32 0.0, %v4674
    %v4676 = vpop.f32.mrf.mxu0
    %4677 = vdwg.mxu0
    %v4678 = vadd.f32 %v4583, %v4675
    %v4679 = vld [vmem:[#allocation4 + $0x4] sm:$0x1]
    %v4680 = vld [vmem:[#allocation4 + $0x24] sm:$0x1]
    %v4681 = vld [vmem:[#allocation4 + $0x5] sm:$0x1]
    %v4682 = vld [vmem:[#allocation4 + $0x25] sm:$0x1]
    %v4683 = vmax.f32 %v4679, %v4681
    %v4684 = vmax.f32 %v4680, %v4682
    %v4685 = vpack.c.bf16 %v4683, %v4683
    %v4686 = vpack.c.bf16 %v4684, %v4684
    %s4687 = scalar_lea.vmem %s6, 128
    %v4688 = vld [vmem:[%s4687] sm:$0xf]
    %v4689 = vld [vmem:[%s4687 + $0x4] sm:$0xf]
    %v4690 = vld [vmem:[%s4687 + $0x8] sm:$0xf]
    %v4691 = vld [vmem:[%s4687 + $0xc] sm:$0xf]
    %v4692 = vld [vmem:[%s4687 + $0x10] sm:$0xf]
    %v4693 = vld [vmem:[%s4687 + $0x14] sm:$0xf]
    %v4694 = vld [vmem:[%s4687 + $0x18] sm:$0xf]
    %v4695 = vld [vmem:[%s4687 + $0x1c] sm:$0xf]
    %v4696 = vld [vmem:[%s4687 + $0x20] sm:$0xf]
    %v4697 = vld [vmem:[%s4687 + $0x24] sm:$0xf]
    %v4698 = vld [vmem:[%s4687 + $0x28] sm:$0xf]
    %v4699 = vld [vmem:[%s4687 + $0x2c] sm:$0xf]
    %v4700 = vld [vmem:[%s4687 + $0x30] sm:$0xf]
    %v4701 = vld [vmem:[%s4687 + $0x34] sm:$0xf]
    %v4702 = vld [vmem:[%s4687 + $0x38] sm:$0xf]
    %v4703 = vld [vmem:[%s4687 + $0x3c] sm:$0xf]
    %v4706 = vunpack.c.l.b16 %v4685
    %v4707 = vunpack.c.l.b16 %v4686
    %v4708 = vrot.slane %v4707, 7
    %v4709 = vsel %vm4518, %v4708, %v4706
    %v4710 = vpack.c.b16 %v4709, %v4709
    %v4728 = vunpack.c.l.b16 %v4688
    %v4729 = vunpack.c.l.b16 %v4689
    %v4730 = vunpack.c.l.b16 %v4690
    %v4731 = vunpack.c.l.b16 %v4691
    %v4732 = vunpack.c.l.b16 %v4692
    %v4733 = vunpack.c.l.b16 %v4693
    %v4734 = vunpack.c.l.b16 %v4694
    %v4735 = vunpack.c.l.b16 %v4695
    %v4736 = vunpack.c.l.b16 %v4696
    %v4737 = vunpack.c.l.b16 %v4697
    %v4738 = vunpack.c.l.b16 %v4698
    %v4739 = vunpack.c.l.b16 %v4699
    %v4740 = vunpack.c.l.b16 %v4700
    %v4741 = vunpack.c.l.b16 %v4701
    %v4742 = vunpack.c.l.b16 %v4702
    %v4743 = vunpack.c.l.b16 %v4703
    %v4744 = vpack.c.b16 %v4729, %v4728
    %v4745 = vpack.c.b16 %v4731, %v4730
    %v4746 = vpack.c.b16 %v4733, %v4732
    %v4747 = vpack.c.b16 %v4735, %v4734
    %v4748 = vpack.c.b16 %v4737, %v4736
    %v4749 = vpack.c.b16 %v4739, %v4738
    %v4750 = vpack.c.b16 %v4741, %v4740
    %v4751 = vpack.c.b16 %v4743, %v4742
    %4760 = vmatpush.bf16.msra.mxu0 %v4751
    %4761 = vmatpush.bf16.msra.mxu0 %v4750
    %4762 = vmatpush.bf16.msra.mxu0 %v4749
    %4763 = vmatpush.bf16.msra.mxu0 %v4748
    %4764 = vmatpush.bf16.msra.mxu0 %v4747
    %4765 = vmatpush.bf16.msra.mxu0 %v4746
    %4766 = vmatpush.bf16.msra.mxu0 %v4745
    %4767 = vmatpush.bf16.msra.mxu0 %v4744
    %4768 = vmatmul.bf16.gmra.mxu0 %v4710
    %v4769 = vpop.f32.mrf.mxu0
    %v4770 = vadd.f32 0.0, %v4769
    %v4771 = vpop.f32.mrf.mxu0
    %4772 = vdwg.mxu0
    %v4773 = vadd.f32 %v4678, %v4770
    %v4774 = vld [vmem:[#allocation4 + $0x6] sm:$0x1]
    %v4775 = vld [vmem:[#allocation4 + $0x26] sm:$0x1]
    %v4776 = vld [vmem:[#allocation4 + $0x7] sm:$0x1]
    %v4777 = vld [vmem:[#allocation4 + $0x27] sm:$0x1]
    %v4778 = vmax.f32 %v4774, %v4776
    %v4779 = vmax.f32 %v4775, %v4777
    %v4780 = vpack.c.bf16 %v4778, %v4778
    %v4781 = vpack.c.bf16 %v4779, %v4779
    %s4782 = scalar_lea.vmem %s6, 192
    %v4783 = vld [vmem:[%s4782] sm:$0xf]
    %v4784 = vld [vmem:[%s4782 + $0x4] sm:$0xf]
    %v4785 = vld [vmem:[%s4782 + $0x8] sm:$0xf]
    %v4786 = vld [vmem:[%s4782 + $0xc] sm:$0xf]
    %v4787 = vld [vmem:[%s4782 + $0x10] sm:$0xf]
    %v4788 = vld [vmem:[%s4782 + $0x14] sm:$0xf]
    %v4789 = vld [vmem:[%s4782 + $0x18] sm:$0xf]
    %v4790 = vld [vmem:[%s4782 + $0x1c] sm:$0xf]
    %v4791 = vld [vmem:[%s4782 + $0x20] sm:$0xf]
    %v4792 = vld [vmem:[%s4782 + $0x24] sm:$0xf]
    %v4793 = vld [vmem:[%s4782 + $0x28] sm:$0xf]
    %v4794 = vld [vmem:[%s4782 + $0x2c] sm:$0xf]
    %v4795 = vld [vmem:[%s4782 + $0x30] sm:$0xf]
    %v4796 = vld [vmem:[%s4782 + $0x34] sm:$0xf]
    %v4797 = vld [vmem:[%s4782 + $0x38] sm:$0xf]
    %v4798 = vld [vmem:[%s4782 + $0x3c] sm:$0xf]
    %v4801 = vunpack.c.l.b16 %v4780
    %v4802 = vunpack.c.l.b16 %v4781
    %v4803 = vrot.slane %v4802, 7
    %v4804 = vsel %vm4518, %v4803, %v4801
    %v4805 = vpack.c.b16 %v4804, %v4804
    %v4823 = vunpack.c.l.b16 %v4783
    %v4824 = vunpack.c.l.b16 %v4784
    %v4825 = vunpack.c.l.b16 %v4785
    %v4826 = vunpack.c.l.b16 %v4786
    %v4827 = vunpack.c.l.b16 %v4787
    %v4828 = vunpack.c.l.b16 %v4788
    %v4829 = vunpack.c.l.b16 %v4789
    %v4830 = vunpack.c.l.b16 %v4790
    %v4831 = vunpack.c.l.b16 %v4791
    %v4832 = vunpack.c.l.b16 %v4792
    %v4833 = vunpack.c.l.b16 %v4793
    %v4834 = vunpack.c.l.b16 %v4794
    %v4835 = vunpack.c.l.b16 %v4795
    %v4836 = vunpack.c.l.b16 %v4796
    %v4837 = vunpack.c.l.b16 %v4797
    %v4838 = vunpack.c.l.b16 %v4798
    %v4839 = vpack.c.b16 %v4824, %v4823
    %v4840 = vpack.c.b16 %v4826, %v4825
    %v4841 = vpack.c.b16 %v4828, %v4827
    %v4842 = vpack.c.b16 %v4830, %v4829
    %v4843 = vpack.c.b16 %v4832, %v4831
    %v4844 = vpack.c.b16 %v4834, %v4833
    %v4845 = vpack.c.b16 %v4836, %v4835
    %v4846 = vpack.c.b16 %v4838, %v4837
    %4855 = vmatpush.bf16.msra.mxu0 %v4846
    %4856 = vmatpush.bf16.msra.mxu0 %v4845
    %4857 = vmatpush.bf16.msra.mxu0 %v4844
    %4858 = vmatpush.bf16.msra.mxu0 %v4843
    %4859 = vmatpush.bf16.msra.mxu0 %v4842
    %4860 = vmatpush.bf16.msra.mxu0 %v4841
    %4861 = vmatpush.bf16.msra.mxu0 %v4840
    %4862 = vmatpush.bf16.msra.mxu0 %v4839
    %4863 = vmatmul.bf16.gmra.mxu0 %v4805
    %v4864 = vpop.f32.mrf.mxu0
    %v4865 = vadd.f32 0.0, %v4864
    %v4866 = vpop.f32.mrf.mxu0
    %4867 = vdwg.mxu0
    %v4868 = vadd.f32 %v4773, %v4865
    %v4869 = vld [vmem:[#allocation4 + $0x8] sm:$0x1]
    %v4870 = vld [vmem:[#allocation4 + $0x28] sm:$0x1]
    %v4871 = vld [vmem:[#allocation4 + $0x9] sm:$0x1]
    %v4872 = vld [vmem:[#allocation4 + $0x29] sm:$0x1]
    %v4873 = vmax.f32 %v4869, %v4871
    %v4874 = vmax.f32 %v4870, %v4872
    %v4875 = vpack.c.bf16 %v4873, %v4873
    %v4876 = vpack.c.bf16 %v4874, %v4874
    %s4877 = scalar_lea.vmem %s6, 256
    %v4878 = vld [vmem:[%s4877] sm:$0xf]
    %v4879 = vld [vmem:[%s4877 + $0x4] sm:$0xf]
    %v4880 = vld [vmem:[%s4877 + $0x8] sm:$0xf]
    %v4881 = vld [vmem:[%s4877 + $0xc] sm:$0xf]
    %v4882 = vld [vmem:[%s4877 + $0x10] sm:$0xf]
    %v4883 = vld [vmem:[%s4877 + $0x14] sm:$0xf]
    %v4884 = vld [vmem:[%s4877 + $0x18] sm:$0xf]
    %v4885 = vld [vmem:[%s4877 + $0x1c] sm:$0xf]
    %v4886 = vld [vmem:[%s4877 + $0x20] sm:$0xf]
    %v4887 = vld [vmem:[%s4877 + $0x24] sm:$0xf]
    %v4888 = vld [vmem:[%s4877 + $0x28] sm:$0xf]
    %v4889 = vld [vmem:[%s4877 + $0x2c] sm:$0xf]
    %v4890 = vld [vmem:[%s4877 + $0x30] sm:$0xf]
    %v4891 = vld [vmem:[%s4877 + $0x34] sm:$0xf]
    %v4892 = vld [vmem:[%s4877 + $0x38] sm:$0xf]
    %v4893 = vld [vmem:[%s4877 + $0x3c] sm:$0xf]
    %v4896 = vunpack.c.l.b16 %v4875
    %v4897 = vunpack.c.l.b16 %v4876
    %v4898 = vrot.slane %v4897, 7
    %v4899 = vsel %vm4518, %v4898, %v4896
    %v4900 = vpack.c.b16 %v4899, %v4899
    %v4918 = vunpack.c.l.b16 %v4878
    %v4919 = vunpack.c.l.b16 %v4879
    %v4920 = vunpack.c.l.b16 %v4880
    %v4921 = vunpack.c.l.b16 %v4881
    %v4922 = vunpack.c.l.b16 %v4882
    %v4923 = vunpack.c.l.b16 %v4883
    %v4924 = vunpack.c.l.b16 %v4884
    %v4925 = vunpack.c.l.b16 %v4885
    %v4926 = vunpack.c.l.b16 %v4886
    %v4927 = vunpack.c.l.b16 %v4887
    %v4928 = vunpack.c.l.b16 %v4888
    %v4929 = vunpack.c.l.b16 %v4889
    %v4930 = vunpack.c.l.b16 %v4890
    %v4931 = vunpack.c.l.b16 %v4891
    %v4932 = vunpack.c.l.b16 %v4892
    %v4933 = vunpack.c.l.b16 %v4893
    %v4934 = vpack.c.b16 %v4919, %v4918
    %v4935 = vpack.c.b16 %v4921, %v4920
    %v4936 = vpack.c.b16 %v4923, %v4922
    %v4937 = vpack.c.b16 %v4925, %v4924
    %v4938 = vpack.c.b16 %v4927, %v4926
    %v4939 = vpack.c.b16 %v4929, %v4928
    %v4940 = vpack.c.b16 %v4931, %v4930
    %v4941 = vpack.c.b16 %v4933, %v4932
    %4950 = vmatpush.bf16.msra.mxu0 %v4941
    %4951 = vmatpush.bf16.msra.mxu0 %v4940
    %4952 = vmatpush.bf16.msra.mxu0 %v4939
    %4953 = vmatpush.bf16.msra.mxu0 %v4938
    %4954 = vmatpush.bf16.msra.mxu0 %v4937
    %4955 = vmatpush.bf16.msra.mxu0 %v4936
    %4956 = vmatpush.bf16.msra.mxu0 %v4935
    %4957 = vmatpush.bf16.msra.mxu0 %v4934
    %4958 = vmatmul.bf16.gmra.mxu0 %v4900
    %v4959 = vpop.f32.mrf.mxu0
    %v4960 = vadd.f32 0.0, %v4959
    %v4961 = vpop.f32.mrf.mxu0
    %4962 = vdwg.mxu0
    %v4963 = vadd.f32 %v4868, %v4960
    %v4964 = vld [vmem:[#allocation4 + $0xa] sm:$0x1]
    %v4965 = vld [vmem:[#allocation4 + $0x2a] sm:$0x1]
    %v4966 = vld [vmem:[#allocation4 + $0xb] sm:$0x1]
    %v4967 = vld [vmem:[#allocation4 + $0x2b] sm:$0x1]
    %v4968 = vmax.f32 %v4964, %v4966
    %v4969 = vmax.f32 %v4965, %v4967
    %v4970 = vpack.c.bf16 %v4968, %v4968
    %v4971 = vpack.c.bf16 %v4969, %v4969
    %s4972 = scalar_lea.vmem %s6, 320
    %v4973 = vld [vmem:[%s4972] sm:$0xf]
    %v4974 = vld [vmem:[%s4972 + $0x4] sm:$0xf]
    %v4975 = vld [vmem:[%s4972 + $0x8] sm:$0xf]
    %v4976 = vld [vmem:[%s4972 + $0xc] sm:$0xf]
    %v4977 = vld [vmem:[%s4972 + $0x10] sm:$0xf]
    %v4978 = vld [vmem:[%s4972 + $0x14] sm:$0xf]
    %v4979 = vld [vmem:[%s4972 + $0x18] sm:$0xf]
    %v4980 = vld [vmem:[%s4972 + $0x1c] sm:$0xf]
    %v4981 = vld [vmem:[%s4972 + $0x20] sm:$0xf]
    %v4982 = vld [vmem:[%s4972 + $0x24] sm:$0xf]
    %v4983 = vld [vmem:[%s4972 + $0x28] sm:$0xf]
    %v4984 = vld [vmem:[%s4972 + $0x2c] sm:$0xf]
    %v4985 = vld [vmem:[%s4972 + $0x30] sm:$0xf]
    %v4986 = vld [vmem:[%s4972 + $0x34] sm:$0xf]
    %v4987 = vld [vmem:[%s4972 + $0x38] sm:$0xf]
    %v4988 = vld [vmem:[%s4972 + $0x3c] sm:$0xf]
    %v4991 = vunpack.c.l.b16 %v4970
    %v4992 = vunpack.c.l.b16 %v4971
    %v4993 = vrot.slane %v4992, 7
    %v4994 = vsel %vm4518, %v4993, %v4991
    %v4995 = vpack.c.b16 %v4994, %v4994
    %v5013 = vunpack.c.l.b16 %v4973
    %v5014 = vunpack.c.l.b16 %v4974
    %v5015 = vunpack.c.l.b16 %v4975
    %v5016 = vunpack.c.l.b16 %v4976
    %v5017 = vunpack.c.l.b16 %v4977
    %v5018 = vunpack.c.l.b16 %v4978
    %v5019 = vunpack.c.l.b16 %v4979
    %v5020 = vunpack.c.l.b16 %v4980
    %v5021 = vunpack.c.l.b16 %v4981
    %v5022 = vunpack.c.l.b16 %v4982
    %v5023 = vunpack.c.l.b16 %v4983
    %v5024 = vunpack.c.l.b16 %v4984
    %v5025 = vunpack.c.l.b16 %v4985
    %v5026 = vunpack.c.l.b16 %v4986
    %v5027 = vunpack.c.l.b16 %v4987
    %v5028 = vunpack.c.l.b16 %v4988
    %v5029 = vpack.c.b16 %v5014, %v5013
    %v5030 = vpack.c.b16 %v5016, %v5015
    %v5031 = vpack.c.b16 %v5018, %v5017
    %v5032 = vpack.c.b16 %v5020, %v5019
    %v5033 = vpack.c.b16 %v5022, %v5021
    %v5034 = vpack.c.b16 %v5024, %v5023
    %v5035 = vpack.c.b16 %v5026, %v5025
    %v5036 = vpack.c.b16 %v5028, %v5027
    %5045 = vmatpush.bf16.msra.mxu0 %v5036
    %5046 = vmatpush.bf16.msra.mxu0 %v5035
    %5047 = vmatpush.bf16.msra.mxu0 %v5034
    %5048 = vmatpush.bf16.msra.mxu0 %v5033
    %5049 = vmatpush.bf16.msra.mxu0 %v5032
    %5050 = vmatpush.bf16.msra.mxu0 %v5031
    %5051 = vmatpush.bf16.msra.mxu0 %v5030
    %5052 = vmatpush.bf16.msra.mxu0 %v5029
    %5053 = vmatmul.bf16.gmra.mxu0 %v4995
    %v5054 = vpop.f32.mrf.mxu0
    %v5055 = vadd.f32 0.0, %v5054
    %v5056 = vpop.f32.mrf.mxu0
    %5057 = vdwg.mxu0
    %v5058 = vadd.f32 %v4963, %v5055
    %v5059 = vld [vmem:[#allocation4 + $0xc] sm:$0x1]
    %v5060 = vld [vmem:[#allocation4 + $0x2c] sm:$0x1]
    %v5061 = vld [vmem:[#allocation4 + $0xd] sm:$0x1]
    %v5062 = vld [vmem:[#allocation4 + $0x2d] sm:$0x1]
    %v5063 = vmax.f32 %v5059, %v5061
    %v5064 = vmax.f32 %v5060, %v5062
    %v5065 = vpack.c.bf16 %v5063, %v5063
    %v5066 = vpack.c.bf16 %v5064, %v5064
    %s5067 = scalar_lea.vmem %s6, 384
    %v5068 = vld [vmem:[%s5067] sm:$0xf]
    %v5069 = vld [vmem:[%s5067 + $0x4] sm:$0xf]
    %v5070 = vld [vmem:[%s5067 + $0x8] sm:$0xf]
    %v5071 = vld [vmem:[%s5067 + $0xc] sm:$0xf]
    %v5072 = vld [vmem:[%s5067 + $0x10] sm:$0xf]
    %v5073 = vld [vmem:[%s5067 + $0x14] sm:$0xf]
    %v5074 = vld [vmem:[%s5067 + $0x18] sm:$0xf]
    %v5075 = vld [vmem:[%s5067 + $0x1c] sm:$0xf]
    %v5076 = vld [vmem:[%s5067 + $0x20] sm:$0xf]
    %v5077 = vld [vmem:[%s5067 + $0x24] sm:$0xf]
    %v5078 = vld [vmem:[%s5067 + $0x28] sm:$0xf]
    %v5079 = vld [vmem:[%s5067 + $0x2c] sm:$0xf]
    %v5080 = vld [vmem:[%s5067 + $0x30] sm:$0xf]
    %v5081 = vld [vmem:[%s5067 + $0x34] sm:$0xf]
    %v5082 = vld [vmem:[%s5067 + $0x38] sm:$0xf]
    %v5083 = vld [vmem:[%s5067 + $0x3c] sm:$0xf]
    %v5086 = vunpack.c.l.b16 %v5065
    %v5087 = vunpack.c.l.b16 %v5066
    %v5088 = vrot.slane %v5087, 7
    %v5089 = vsel %vm4518, %v5088, %v5086
    %v5090 = vpack.c.b16 %v5089, %v5089
    %v5108 = vunpack.c.l.b16 %v5068
    %v5109 = vunpack.c.l.b16 %v5069
    %v5110 = vunpack.c.l.b16 %v5070
    %v5111 = vunpack.c.l.b16 %v5071
    %v5112 = vunpack.c.l.b16 %v5072
    %v5113 = vunpack.c.l.b16 %v5073
    %v5114 = vunpack.c.l.b16 %v5074
    %v5115 = vunpack.c.l.b16 %v5075
    %v5116 = vunpack.c.l.b16 %v5076
    %v5117 = vunpack.c.l.b16 %v5077
    %v5118 = vunpack.c.l.b16 %v5078
    %v5119 = vunpack.c.l.b16 %v5079
    %v5120 = vunpack.c.l.b16 %v5080
    %v5121 = vunpack.c.l.b16 %v5081
    %v5122 = vunpack.c.l.b16 %v5082
    %v5123 = vunpack.c.l.b16 %v5083
    %v5124 = vpack.c.b16 %v5109, %v5108
    %v5125 = vpack.c.b16 %v5111, %v5110
    %v5126 = vpack.c.b16 %v5113, %v5112
    %v5127 = vpack.c.b16 %v5115, %v5114
    %v5128 = vpack.c.b16 %v5117, %v5116
    %v5129 = vpack.c.b16 %v5119, %v5118
    %v5130 = vpack.c.b16 %v5121, %v5120
    %v5131 = vpack.c.b16 %v5123, %v5122
    %5140 = vmatpush.bf16.msra.mxu0 %v5131
    %5141 = vmatpush.bf16.msra.mxu0 %v5130
    %5142 = vmatpush.bf16.msra.mxu0 %v5129
    %5143 = vmatpush.bf16.msra.mxu0 %v5128
    %5144 = vmatpush.bf16.msra.mxu0 %v5127
    %5145 = vmatpush.bf16.msra.mxu0 %v5126
    %5146 = vmatpush.bf16.msra.mxu0 %v5125
    %5147 = vmatpush.bf16.msra.mxu0 %v5124
    %5148 = vmatmul.bf16.gmra.mxu0 %v5090
    %v5149 = vpop.f32.mrf.mxu0
    %v5150 = vadd.f32 0.0, %v5149
    %v5151 = vpop.f32.mrf.mxu0
    %5152 = vdwg.mxu0
    %v5153 = vadd.f32 %v5058, %v5150
    %v5154 = vld [vmem:[#allocation4 + $0xe] sm:$0x1]
    %v5155 = vld [vmem:[#allocation4 + $0x2e] sm:$0x1]
    %v5156 = vld [vmem:[#allocation4 + $0xf] sm:$0x1]
    %v5157 = vld [vmem:[#allocation4 + $0x2f] sm:$0x1]
    %v5158 = vmax.f32 %v5154, %v5156
    %v5159 = vmax.f32 %v5155, %v5157
    %v5160 = vpack.c.bf16 %v5158, %v5158
    %v5161 = vpack.c.bf16 %v5159, %v5159
    %s5162 = scalar_lea.vmem %s6, 448
    %v5163 = vld [vmem:[%s5162] sm:$0xf]
    %v5164 = vld [vmem:[%s5162 + $0x4] sm:$0xf]
    %v5165 = vld [vmem:[%s5162 + $0x8] sm:$0xf]
    %v5166 = vld [vmem:[%s5162 + $0xc] sm:$0xf]
    %v5167 = vld [vmem:[%s5162 + $0x10] sm:$0xf]
    %v5168 = vld [vmem:[%s5162 + $0x14] sm:$0xf]
    %v5169 = vld [vmem:[%s5162 + $0x18] sm:$0xf]
    %v5170 = vld [vmem:[%s5162 + $0x1c] sm:$0xf]
    %v5171 = vld [vmem:[%s5162 + $0x20] sm:$0xf]
    %v5172 = vld [vmem:[%s5162 + $0x24] sm:$0xf]
    %v5173 = vld [vmem:[%s5162 + $0x28] sm:$0xf]
    %v5174 = vld [vmem:[%s5162 + $0x2c] sm:$0xf]
    %v5175 = vld [vmem:[%s5162 + $0x30] sm:$0xf]
    %v5176 = vld [vmem:[%s5162 + $0x34] sm:$0xf]
    %v5177 = vld [vmem:[%s5162 + $0x38] sm:$0xf]
    %v5178 = vld [vmem:[%s5162 + $0x3c] sm:$0xf]
    %v5181 = vunpack.c.l.b16 %v5160
    %v5182 = vunpack.c.l.b16 %v5161
    %v5183 = vrot.slane %v5182, 7
    %v5184 = vsel %vm4518, %v5183, %v5181
    %v5185 = vpack.c.b16 %v5184, %v5184
    %v5203 = vunpack.c.l.b16 %v5163
    %v5204 = vunpack.c.l.b16 %v5164
    %v5205 = vunpack.c.l.b16 %v5165
    %v5206 = vunpack.c.l.b16 %v5166
    %v5207 = vunpack.c.l.b16 %v5167
    %v5208 = vunpack.c.l.b16 %v5168
    %v5209 = vunpack.c.l.b16 %v5169
    %v5210 = vunpack.c.l.b16 %v5170
    %v5211 = vunpack.c.l.b16 %v5171
    %v5212 = vunpack.c.l.b16 %v5172
    %v5213 = vunpack.c.l.b16 %v5173
    %v5214 = vunpack.c.l.b16 %v5174
    %v5215 = vunpack.c.l.b16 %v5175
    %v5216 = vunpack.c.l.b16 %v5176
    %v5217 = vunpack.c.l.b16 %v5177
    %v5218 = vunpack.c.l.b16 %v5178
    %v5219 = vpack.c.b16 %v5204, %v5203
    %v5220 = vpack.c.b16 %v5206, %v5205
    %v5221 = vpack.c.b16 %v5208, %v5207
    %v5222 = vpack.c.b16 %v5210, %v5209
    %v5223 = vpack.c.b16 %v5212, %v5211
    %v5224 = vpack.c.b16 %v5214, %v5213
    %v5225 = vpack.c.b16 %v5216, %v5215
    %v5226 = vpack.c.b16 %v5218, %v5217
    %5235 = vmatpush.bf16.msra.mxu0 %v5226
    %5236 = vmatpush.bf16.msra.mxu0 %v5225
    %5237 = vmatpush.bf16.msra.mxu0 %v5224
    %5238 = vmatpush.bf16.msra.mxu0 %v5223
    %5239 = vmatpush.bf16.msra.mxu0 %v5222
    %5240 = vmatpush.bf16.msra.mxu0 %v5221
    %5241 = vmatpush.bf16.msra.mxu0 %v5220
    %5242 = vmatpush.bf16.msra.mxu0 %v5219
    %5243 = vmatmul.bf16.gmra.mxu0 %v5185
    %v5244 = vpop.f32.mrf.mxu0
    %v5245 = vadd.f32 0.0, %v5244
    %v5246 = vpop.f32.mrf.mxu0
    %5247 = vdwg.mxu0
    %v5248 = vadd.f32 %v5153, %v5245
    %v5249 = vld [vmem:[#allocation4 + $0x10] sm:$0x1]
    %v5250 = vld [vmem:[#allocation4 + $0x30] sm:$0x1]
    %v5251 = vld [vmem:[#allocation4 + $0x11] sm:$0x1]
    %v5252 = vld [vmem:[#allocation4 + $0x31] sm:$0x1]
    %v5253 = vmax.f32 %v5249, %v5251
    %v5254 = vmax.f32 %v5250, %v5252
    %v5255 = vpack.c.bf16 %v5253, %v5253
    %v5256 = vpack.c.bf16 %v5254, %v5254
    %s5257 = scalar_lea.vmem %s6, 512
    %v5258 = vld [vmem:[%s5257] sm:$0xf]
    %v5259 = vld [vmem:[%s5257 + $0x4] sm:$0xf]
    %v5260 = vld [vmem:[%s5257 + $0x8] sm:$0xf]
    %v5261 = vld [vmem:[%s5257 + $0xc] sm:$0xf]
    %v5262 = vld [vmem:[%s5257 + $0x10] sm:$0xf]
    %v5263 = vld [vmem:[%s5257 + $0x14] sm:$0xf]
    %v5264 = vld [vmem:[%s5257 + $0x18] sm:$0xf]
    %v5265 = vld [vmem:[%s5257 + $0x1c] sm:$0xf]
    %v5266 = vld [vmem:[%s5257 + $0x20] sm:$0xf]
    %v5267 = vld [vmem:[%s5257 + $0x24] sm:$0xf]
    %v5268 = vld [vmem:[%s5257 + $0x28] sm:$0xf]
    %v5269 = vld [vmem:[%s5257 + $0x2c] sm:$0xf]
    %v5270 = vld [vmem:[%s5257 + $0x30] sm:$0xf]
    %v5271 = vld [vmem:[%s5257 + $0x34] sm:$0xf]
    %v5272 = vld [vmem:[%s5257 + $0x38] sm:$0xf]
    %v5273 = vld [vmem:[%s5257 + $0x3c] sm:$0xf]
    %v5276 = vunpack.c.l.b16 %v5255
    %v5277 = vunpack.c.l.b16 %v5256
    %v5278 = vrot.slane %v5277, 7
    %v5279 = vsel %vm4518, %v5278, %v5276
    %v5280 = vpack.c.b16 %v5279, %v5279
    %v5298 = vunpack.c.l.b16 %v5258
    %v5299 = vunpack.c.l.b16 %v5259
    %v5300 = vunpack.c.l.b16 %v5260
    %v5301 = vunpack.c.l.b16 %v5261
    %v5302 = vunpack.c.l.b16 %v5262
    %v5303 = vunpack.c.l.b16 %v5263
    %v5304 = vunpack.c.l.b16 %v5264
    %v5305 = vunpack.c.l.b16 %v5265
    %v5306 = vunpack.c.l.b16 %v5266
    %v5307 = vunpack.c.l.b16 %v5267
    %v5308 = vunpack.c.l.b16 %v5268
    %v5309 = vunpack.c.l.b16 %v5269
    %v5310 = vunpack.c.l.b16 %v5270
    %v5311 = vunpack.c.l.b16 %v5271
    %v5312 = vunpack.c.l.b16 %v5272
    %v5313 = vunpack.c.l.b16 %v5273
    %v5314 = vpack.c.b16 %v5299, %v5298
    %v5315 = vpack.c.b16 %v5301, %v5300
    %v5316 = vpack.c.b16 %v5303, %v5302
    %v5317 = vpack.c.b16 %v5305, %v5304
    %v5318 = vpack.c.b16 %v5307, %v5306
    %v5319 = vpack.c.b16 %v5309, %v5308
    %v5320 = vpack.c.b16 %v5311, %v5310
    %v5321 = vpack.c.b16 %v5313, %v5312
    %5330 = vmatpush.bf16.msra.mxu0 %v5321
    %5331 = vmatpush.bf16.msra.mxu0 %v5320
    %5332 = vmatpush.bf16.msra.mxu0 %v5319
    %5333 = vmatpush.bf16.msra.mxu0 %v5318
    %5334 = vmatpush.bf16.msra.mxu0 %v5317
    %5335 = vmatpush.bf16.msra.mxu0 %v5316
    %5336 = vmatpush.bf16.msra.mxu0 %v5315
    %5337 = vmatpush.bf16.msra.mxu0 %v5314
    %5338 = vmatmul.bf16.gmra.mxu0 %v5280
    %v5339 = vpop.f32.mrf.mxu0
    %v5340 = vadd.f32 0.0, %v5339
    %v5341 = vpop.f32.mrf.mxu0
    %5342 = vdwg.mxu0
    %v5343 = vadd.f32 %v5248, %v5340
    %v5344 = vld [vmem:[#allocation4 + $0x12] sm:$0x1]
    %v5345 = vld [vmem:[#allocation4 + $0x32] sm:$0x1]
    %v5346 = vld [vmem:[#allocation4 + $0x13] sm:$0x1]
    %v5347 = vld [vmem:[#allocation4 + $0x33] sm:$0x1]
    %v5348 = vmax.f32 %v5344, %v5346
    %v5349 = vmax.f32 %v5345, %v5347
    %v5350 = vpack.c.bf16 %v5348, %v5348
    %v5351 = vpack.c.bf16 %v5349, %v5349
    %s5352 = scalar_lea.vmem %s6, 576
    %v5353 = vld [vmem:[%s5352] sm:$0xf]
    %v5354 = vld [vmem:[%s5352 + $0x4] sm:$0xf]
    %v5355 = vld [vmem:[%s5352 + $0x8] sm:$0xf]
    %v5356 = vld [vmem:[%s5352 + $0xc] sm:$0xf]
    %v5357 = vld [vmem:[%s5352 + $0x10] sm:$0xf]
    %v5358 = vld [vmem:[%s5352 + $0x14] sm:$0xf]
    %v5359 = vld [vmem:[%s5352 + $0x18] sm:$0xf]
    %v5360 = vld [vmem:[%s5352 + $0x1c] sm:$0xf]
    %v5361 = vld [vmem:[%s5352 + $0x20] sm:$0xf]
    %v5362 = vld [vmem:[%s5352 + $0x24] sm:$0xf]
    %v5363 = vld [vmem:[%s5352 + $0x28] sm:$0xf]
    %v5364 = vld [vmem:[%s5352 + $0x2c] sm:$0xf]
    %v5365 = vld [vmem:[%s5352 + $0x30] sm:$0xf]
    %v5366 = vld [vmem:[%s5352 + $0x34] sm:$0xf]
    %v5367 = vld [vmem:[%s5352 + $0x38] sm:$0xf]
    %v5368 = vld [vmem:[%s5352 + $0x3c] sm:$0xf]
    %v5371 = vunpack.c.l.b16 %v5350
    %v5372 = vunpack.c.l.b16 %v5351
    %v5373 = vrot.slane %v5372, 7
    %v5374 = vsel %vm4518, %v5373, %v5371
    %v5375 = vpack.c.b16 %v5374, %v5374
    %v5393 = vunpack.c.l.b16 %v5353
    %v5394 = vunpack.c.l.b16 %v5354
    %v5395 = vunpack.c.l.b16 %v5355
    %v5396 = vunpack.c.l.b16 %v5356
    %v5397 = vunpack.c.l.b16 %v5357
    %v5398 = vunpack.c.l.b16 %v5358
    %v5399 = vunpack.c.l.b16 %v5359
    %v5400 = vunpack.c.l.b16 %v5360
    %v5401 = vunpack.c.l.b16 %v5361
    %v5402 = vunpack.c.l.b16 %v5362
    %v5403 = vunpack.c.l.b16 %v5363
    %v5404 = vunpack.c.l.b16 %v5364
    %v5405 = vunpack.c.l.b16 %v5365
    %v5406 = vunpack.c.l.b16 %v5366
    %v5407 = vunpack.c.l.b16 %v5367
    %v5408 = vunpack.c.l.b16 %v5368
    %v5409 = vpack.c.b16 %v5394, %v5393
    %v5410 = vpack.c.b16 %v5396, %v5395
    %v5411 = vpack.c.b16 %v5398, %v5397
    %v5412 = vpack.c.b16 %v5400, %v5399
    %v5413 = vpack.c.b16 %v5402, %v5401
    %v5414 = vpack.c.b16 %v5404, %v5403
    %v5415 = vpack.c.b16 %v5406, %v5405
    %v5416 = vpack.c.b16 %v5408, %v5407
    %5425 = vmatpush.bf16.msra.mxu0 %v5416
    %5426 = vmatpush.bf16.msra.mxu0 %v5415
    %5427 = vmatpush.bf16.msra.mxu0 %v5414
    %5428 = vmatpush.bf16.msra.mxu0 %v5413
    %5429 = vmatpush.bf16.msra.mxu0 %v5412
    %5430 = vmatpush.bf16.msra.mxu0 %v5411
    %5431 = vmatpush.bf16.msra.mxu0 %v5410
    %5432 = vmatpush.bf16.msra.mxu0 %v5409
    %5433 = vmatmul.bf16.gmra.mxu0 %v5375
    %v5434 = vpop.f32.mrf.mxu0
    %v5435 = vadd.f32 0.0, %v5434
    %v5436 = vpop.f32.mrf.mxu0
    %5437 = vdwg.mxu0
    %v5438 = vadd.f32 %v5343, %v5435
    %v5439 = vld [vmem:[#allocation4 + $0x14] sm:$0x1]
    %v5440 = vld [vmem:[#allocation4 + $0x34] sm:$0x1]
    %v5441 = vld [vmem:[#allocation4 + $0x15] sm:$0x1]
    %v5442 = vld [vmem:[#allocation4 + $0x35] sm:$0x1]
    %v5443 = vmax.f32 %v5439, %v5441
    %v5444 = vmax.f32 %v5440, %v5442
    %v5445 = vpack.c.bf16 %v5443, %v5443
    %v5446 = vpack.c.bf16 %v5444, %v5444
    %s5447 = scalar_lea.vmem %s6, 640
    %v5448 = vld [vmem:[%s5447] sm:$0xf]
    %v5449 = vld [vmem:[%s5447 + $0x4] sm:$0xf]
    %v5450 = vld [vmem:[%s5447 + $0x8] sm:$0xf]
    %v5451 = vld [vmem:[%s5447 + $0xc] sm:$0xf]
    %v5452 = vld [vmem:[%s5447 + $0x10] sm:$0xf]
    %v5453 = vld [vmem:[%s5447 + $0x14] sm:$0xf]
    %v5454 = vld [vmem:[%s5447 + $0x18] sm:$0xf]
    %v5455 = vld [vmem:[%s5447 + $0x1c] sm:$0xf]
    %v5456 = vld [vmem:[%s5447 + $0x20] sm:$0xf]
    %v5457 = vld [vmem:[%s5447 + $0x24] sm:$0xf]
    %v5458 = vld [vmem:[%s5447 + $0x28] sm:$0xf]
    %v5459 = vld [vmem:[%s5447 + $0x2c] sm:$0xf]
    %v5460 = vld [vmem:[%s5447 + $0x30] sm:$0xf]
    %v5461 = vld [vmem:[%s5447 + $0x34] sm:$0xf]
    %v5462 = vld [vmem:[%s5447 + $0x38] sm:$0xf]
    %v5463 = vld [vmem:[%s5447 + $0x3c] sm:$0xf]
    %v5466 = vunpack.c.l.b16 %v5445
    %v5467 = vunpack.c.l.b16 %v5446
    %v5468 = vrot.slane %v5467, 7
    %v5469 = vsel %vm4518, %v5468, %v5466
    %v5470 = vpack.c.b16 %v5469, %v5469
    %v5488 = vunpack.c.l.b16 %v5448
    %v5489 = vunpack.c.l.b16 %v5449
    %v5490 = vunpack.c.l.b16 %v5450
    %v5491 = vunpack.c.l.b16 %v5451
    %v5492 = vunpack.c.l.b16 %v5452
    %v5493 = vunpack.c.l.b16 %v5453
    %v5494 = vunpack.c.l.b16 %v5454
    %v5495 = vunpack.c.l.b16 %v5455
    %v5496 = vunpack.c.l.b16 %v5456
    %v5497 = vunpack.c.l.b16 %v5457
    %v5498 = vunpack.c.l.b16 %v5458
    %v5499 = vunpack.c.l.b16 %v5459
    %v5500 = vunpack.c.l.b16 %v5460
    %v5501 = vunpack.c.l.b16 %v5461
    %v5502 = vunpack.c.l.b16 %v5462
    %v5503 = vunpack.c.l.b16 %v5463
    %v5504 = vpack.c.b16 %v5489, %v5488
    %v5505 = vpack.c.b16 %v5491, %v5490
    %v5506 = vpack.c.b16 %v5493, %v5492
    %v5507 = vpack.c.b16 %v5495, %v5494
    %v5508 = vpack.c.b16 %v5497, %v5496
    %v5509 = vpack.c.b16 %v5499, %v5498
    %v5510 = vpack.c.b16 %v5501, %v5500
    %v5511 = vpack.c.b16 %v5503, %v5502
    %5520 = vmatpush.bf16.msra.mxu0 %v5511
    %5521 = vmatpush.bf16.msra.mxu0 %v5510
    %5522 = vmatpush.bf16.msra.mxu0 %v5509
    %5523 = vmatpush.bf16.msra.mxu0 %v5508
    %5524 = vmatpush.bf16.msra.mxu0 %v5507
    %5525 = vmatpush.bf16.msra.mxu0 %v5506
    %5526 = vmatpush.bf16.msra.mxu0 %v5505
    %5527 = vmatpush.bf16.msra.mxu0 %v5504
    %5528 = vmatmul.bf16.gmra.mxu0 %v5470
    %v5529 = vpop.f32.mrf.mxu0
    %v5530 = vadd.f32 0.0, %v5529
    %v5531 = vpop.f32.mrf.mxu0
    %5532 = vdwg.mxu0
    %v5533 = vadd.f32 %v5438, %v5530
    %v5534 = vld [vmem:[#allocation4 + $0x16] sm:$0x1]
    %v5535 = vld [vmem:[#allocation4 + $0x36] sm:$0x1]
    %v5536 = vld [vmem:[#allocation4 + $0x17] sm:$0x1]
    %v5537 = vld [vmem:[#allocation4 + $0x37] sm:$0x1]
    %v5538 = vmax.f32 %v5534, %v5536
    %v5539 = vmax.f32 %v5535, %v5537
    %v5540 = vpack.c.bf16 %v5538, %v5538
    %v5541 = vpack.c.bf16 %v5539, %v5539
    %s5542 = scalar_lea.vmem %s6, 704
    %v5543 = vld [vmem:[%s5542] sm:$0xf]
    %v5544 = vld [vmem:[%s5542 + $0x4] sm:$0xf]
    %v5545 = vld [vmem:[%s5542 + $0x8] sm:$0xf]
    %v5546 = vld [vmem:[%s5542 + $0xc] sm:$0xf]
    %v5547 = vld [vmem:[%s5542 + $0x10] sm:$0xf]
    %v5548 = vld [vmem:[%s5542 + $0x14] sm:$0xf]
    %v5549 = vld [vmem:[%s5542 + $0x18] sm:$0xf]
    %v5550 = vld [vmem:[%s5542 + $0x1c] sm:$0xf]
    %v5551 = vld [vmem:[%s5542 + $0x20] sm:$0xf]
    %v5552 = vld [vmem:[%s5542 + $0x24] sm:$0xf]
    %v5553 = vld [vmem:[%s5542 + $0x28] sm:$0xf]
    %v5554 = vld [vmem:[%s5542 + $0x2c] sm:$0xf]
    %v5555 = vld [vmem:[%s5542 + $0x30] sm:$0xf]
    %v5556 = vld [vmem:[%s5542 + $0x34] sm:$0xf]
    %v5557 = vld [vmem:[%s5542 + $0x38] sm:$0xf]
    %v5558 = vld [vmem:[%s5542 + $0x3c] sm:$0xf]
    %v5561 = vunpack.c.l.b16 %v5540
    %v5562 = vunpack.c.l.b16 %v5541
    %v5563 = vrot.slane %v5562, 7
    %v5564 = vsel %vm4518, %v5563, %v5561
    %v5565 = vpack.c.b16 %v5564, %v5564
    %v5583 = vunpack.c.l.b16 %v5543
    %v5584 = vunpack.c.l.b16 %v5544
    %v5585 = vunpack.c.l.b16 %v5545
    %v5586 = vunpack.c.l.b16 %v5546
    %v5587 = vunpack.c.l.b16 %v5547
    %v5588 = vunpack.c.l.b16 %v5548
    %v5589 = vunpack.c.l.b16 %v5549
    %v5590 = vunpack.c.l.b16 %v5550
    %v5591 = vunpack.c.l.b16 %v5551
    %v5592 = vunpack.c.l.b16 %v5552
    %v5593 = vunpack.c.l.b16 %v5553
    %v5594 = vunpack.c.l.b16 %v5554
    %v5595 = vunpack.c.l.b16 %v5555
    %v5596 = vunpack.c.l.b16 %v5556
    %v5597 = vunpack.c.l.b16 %v5557
    %v5598 = vunpack.c.l.b16 %v5558
    %v5599 = vpack.c.b16 %v5584, %v5583
    %v5600 = vpack.c.b16 %v5586, %v5585
    %v5601 = vpack.c.b16 %v5588, %v5587
    %v5602 = vpack.c.b16 %v5590, %v5589
    %v5603 = vpack.c.b16 %v5592, %v5591
    %v5604 = vpack.c.b16 %v5594, %v5593
    %v5605 = vpack.c.b16 %v5596, %v5595
    %v5606 = vpack.c.b16 %v5598, %v5597
    %5615 = vmatpush.bf16.msra.mxu0 %v5606
    %5616 = vmatpush.bf16.msra.mxu0 %v5605
    %5617 = vmatpush.bf16.msra.mxu0 %v5604
    %5618 = vmatpush.bf16.msra.mxu0 %v5603
    %5619 = vmatpush.bf16.msra.mxu0 %v5602
    %5620 = vmatpush.bf16.msra.mxu0 %v5601
    %5621 = vmatpush.bf16.msra.mxu0 %v5600
    %5622 = vmatpush.bf16.msra.mxu0 %v5599
    %5623 = vmatmul.bf16.gmra.mxu0 %v5565
    %v5624 = vpop.f32.mrf.mxu0
    %v5625 = vadd.f32 0.0, %v5624
    %v5626 = vpop.f32.mrf.mxu0
    %5627 = vdwg.mxu0
    %v5628 = vadd.f32 %v5533, %v5625
    %v5629 = vld [vmem:[#allocation4 + $0x18] sm:$0x1]
    %v5630 = vld [vmem:[#allocation4 + $0x38] sm:$0x1]
    %v5631 = vld [vmem:[#allocation4 + $0x19] sm:$0x1]
    %v5632 = vld [vmem:[#allocation4 + $0x39] sm:$0x1]
    %v5633 = vmax.f32 %v5629, %v5631
    %v5634 = vmax.f32 %v5630, %v5632
    %v5635 = vpack.c.bf16 %v5633, %v5633
    %v5636 = vpack.c.bf16 %v5634, %v5634
    %s5637 = scalar_lea.vmem %s6, 768
    %v5638 = vld [vmem:[%s5637] sm:$0xf]
    %v5639 = vld [vmem:[%s5637 + $0x4] sm:$0xf]
    %v5640 = vld [vmem:[%s5637 + $0x8] sm:$0xf]
    %v5641 = vld [vmem:[%s5637 + $0xc] sm:$0xf]
    %v5642 = vld [vmem:[%s5637 + $0x10] sm:$0xf]
    %v5643 = vld [vmem:[%s5637 + $0x14] sm:$0xf]
    %v5644 = vld [vmem:[%s5637 + $0x18] sm:$0xf]
    %v5645 = vld [vmem:[%s5637 + $0x1c] sm:$0xf]
    %v5646 = vld [vmem:[%s5637 + $0x20] sm:$0xf]
    %v5647 = vld [vmem:[%s5637 + $0x24] sm:$0xf]
    %v5648 = vld [vmem:[%s5637 + $0x28] sm:$0xf]
    %v5649 = vld [vmem:[%s5637 + $0x2c] sm:$0xf]
    %v5650 = vld [vmem:[%s5637 + $0x30] sm:$0xf]
    %v5651 = vld [vmem:[%s5637 + $0x34] sm:$0xf]
    %v5652 = vld [vmem:[%s5637 + $0x38] sm:$0xf]
    %v5653 = vld [vmem:[%s5637 + $0x3c] sm:$0xf]
    %v5656 = vunpack.c.l.b16 %v5635
    %v5657 = vunpack.c.l.b16 %v5636
    %v5658 = vrot.slane %v5657, 7
    %v5659 = vsel %vm4518, %v5658, %v5656
    %v5660 = vpack.c.b16 %v5659, %v5659
    %v5678 = vunpack.c.l.b16 %v5638
    %v5679 = vunpack.c.l.b16 %v5639
    %v5680 = vunpack.c.l.b16 %v5640
    %v5681 = vunpack.c.l.b16 %v5641
    %v5682 = vunpack.c.l.b16 %v5642
    %v5683 = vunpack.c.l.b16 %v5643
    %v5684 = vunpack.c.l.b16 %v5644
    %v5685 = vunpack.c.l.b16 %v5645
    %v5686 = vunpack.c.l.b16 %v5646
    %v5687 = vunpack.c.l.b16 %v5647
    %v5688 = vunpack.c.l.b16 %v5648
    %v5689 = vunpack.c.l.b16 %v5649
    %v5690 = vunpack.c.l.b16 %v5650
    %v5691 = vunpack.c.l.b16 %v5651
    %v5692 = vunpack.c.l.b16 %v5652
    %v5693 = vunpack.c.l.b16 %v5653
    %v5694 = vpack.c.b16 %v5679, %v5678
    %v5695 = vpack.c.b16 %v5681, %v5680
    %v5696 = vpack.c.b16 %v5683, %v5682
    %v5697 = vpack.c.b16 %v5685, %v5684
    %v5698 = vpack.c.b16 %v5687, %v5686
    %v5699 = vpack.c.b16 %v5689, %v5688
    %v5700 = vpack.c.b16 %v5691, %v5690
    %v5701 = vpack.c.b16 %v5693, %v5692
    %5710 = vmatpush.bf16.msra.mxu0 %v5701
    %5711 = vmatpush.bf16.msra.mxu0 %v5700
    %5712 = vmatpush.bf16.msra.mxu0 %v5699
    %5713 = vmatpush.bf16.msra.mxu0 %v5698
    %5714 = vmatpush.bf16.msra.mxu0 %v5697
    %5715 = vmatpush.bf16.msra.mxu0 %v5696
    %5716 = vmatpush.bf16.msra.mxu0 %v5695
    %5717 = vmatpush.bf16.msra.mxu0 %v5694
    %5718 = vmatmul.bf16.gmra.mxu0 %v5660
    %v5719 = vpop.f32.mrf.mxu0
    %v5720 = vadd.f32 0.0, %v5719
    %v5721 = vpop.f32.mrf.mxu0
    %5722 = vdwg.mxu0
    %v5723 = vadd.f32 %v5628, %v5720
    %v5724 = vld [vmem:[#allocation4 + $0x1a] sm:$0x1]
    %v5725 = vld [vmem:[#allocation4 + $0x3a] sm:$0x1]
    %v5726 = vld [vmem:[#allocation4 + $0x1b] sm:$0x1]
    %v5727 = vld [vmem:[#allocation4 + $0x3b] sm:$0x1]
    %v5728 = vmax.f32 %v5724, %v5726
    %v5729 = vmax.f32 %v5725, %v5727
    %v5730 = vpack.c.bf16 %v5728, %v5728
    %v5731 = vpack.c.bf16 %v5729, %v5729
    %s5732 = scalar_lea.vmem %s6, 832
    %v5733 = vld [vmem:[%s5732] sm:$0xf]
    %v5734 = vld [vmem:[%s5732 + $0x4] sm:$0xf]
    %v5735 = vld [vmem:[%s5732 + $0x8] sm:$0xf]
    %v5736 = vld [vmem:[%s5732 + $0xc] sm:$0xf]
    %v5737 = vld [vmem:[%s5732 + $0x10] sm:$0xf]
    %v5738 = vld [vmem:[%s5732 + $0x14] sm:$0xf]
    %v5739 = vld [vmem:[%s5732 + $0x18] sm:$0xf]
    %v5740 = vld [vmem:[%s5732 + $0x1c] sm:$0xf]
    %v5741 = vld [vmem:[%s5732 + $0x20] sm:$0xf]
    %v5742 = vld [vmem:[%s5732 + $0x24] sm:$0xf]
    %v5743 = vld [vmem:[%s5732 + $0x28] sm:$0xf]
    %v5744 = vld [vmem:[%s5732 + $0x2c] sm:$0xf]
    %v5745 = vld [vmem:[%s5732 + $0x30] sm:$0xf]
    %v5746 = vld [vmem:[%s5732 + $0x34] sm:$0xf]
    %v5747 = vld [vmem:[%s5732 + $0x38] sm:$0xf]
    %v5748 = vld [vmem:[%s5732 + $0x3c] sm:$0xf]
    %v5751 = vunpack.c.l.b16 %v5730
    %v5752 = vunpack.c.l.b16 %v5731
    %v5753 = vrot.slane %v5752, 7
    %v5754 = vsel %vm4518, %v5753, %v5751
    %v5755 = vpack.c.b16 %v5754, %v5754
    %v5773 = vunpack.c.l.b16 %v5733
    %v5774 = vunpack.c.l.b16 %v5734
    %v5775 = vunpack.c.l.b16 %v5735
    %v5776 = vunpack.c.l.b16 %v5736
    %v5777 = vunpack.c.l.b16 %v5737
    %v5778 = vunpack.c.l.b16 %v5738
    %v5779 = vunpack.c.l.b16 %v5739
    %v5780 = vunpack.c.l.b16 %v5740
    %v5781 = vunpack.c.l.b16 %v5741
    %v5782 = vunpack.c.l.b16 %v5742
    %v5783 = vunpack.c.l.b16 %v5743
    %v5784 = vunpack.c.l.b16 %v5744
    %v5785 = vunpack.c.l.b16 %v5745
    %v5786 = vunpack.c.l.b16 %v5746
    %v5787 = vunpack.c.l.b16 %v5747
    %v5788 = vunpack.c.l.b16 %v5748
    %v5789 = vpack.c.b16 %v5774, %v5773
    %v5790 = vpack.c.b16 %v5776, %v5775
    %v5791 = vpack.c.b16 %v5778, %v5777
    %v5792 = vpack.c.b16 %v5780, %v5779
    %v5793 = vpack.c.b16 %v5782, %v5781
    %v5794 = vpack.c.b16 %v5784, %v5783
    %v5795 = vpack.c.b16 %v5786, %v5785
    %v5796 = vpack.c.b16 %v5788, %v5787
    %5805 = vmatpush.bf16.msra.mxu0 %v5796
    %5806 = vmatpush.bf16.msra.mxu0 %v5795
    %5807 = vmatpush.bf16.msra.mxu0 %v5794
    %5808 = vmatpush.bf16.msra.mxu0 %v5793
    %5809 = vmatpush.bf16.msra.mxu0 %v5792
    %5810 = vmatpush.bf16.msra.mxu0 %v5791
    %5811 = vmatpush.bf16.msra.mxu0 %v5790
    %5812 = vmatpush.bf16.msra.mxu0 %v5789
    %5813 = vmatmul.bf16.gmra.mxu0 %v5755
    %v5814 = vpop.f32.mrf.mxu0
    %v5815 = vadd.f32 0.0, %v5814
    %v5816 = vpop.f32.mrf.mxu0
    %5817 = vdwg.mxu0
    %v5818 = vadd.f32 %v5723, %v5815
    %v5819 = vld [vmem:[#allocation4 + $0x1c] sm:$0x1]
    %v5820 = vld [vmem:[#allocation4 + $0x3c] sm:$0x1]
    %v5821 = vld [vmem:[#allocation4 + $0x1d] sm:$0x1]
    %v5822 = vld [vmem:[#allocation4 + $0x3d] sm:$0x1]
    %v5823 = vmax.f32 %v5819, %v5821
    %v5824 = vmax.f32 %v5820, %v5822
    %v5825 = vpack.c.bf16 %v5823, %v5823
    %v5826 = vpack.c.bf16 %v5824, %v5824
    %s5827 = scalar_lea.vmem %s6, 896
    %v5828 = vld [vmem:[%s5827] sm:$0xf]
    %v5829 = vld [vmem:[%s5827 + $0x4] sm:$0xf]
    %v5830 = vld [vmem:[%s5827 + $0x8] sm:$0xf]
    %v5831 = vld [vmem:[%s5827 + $0xc] sm:$0xf]
    %v5832 = vld [vmem:[%s5827 + $0x10] sm:$0xf]
    %v5833 = vld [vmem:[%s5827 + $0x14] sm:$0xf]
    %v5834 = vld [vmem:[%s5827 + $0x18] sm:$0xf]
    %v5835 = vld [vmem:[%s5827 + $0x1c] sm:$0xf]
    %v5836 = vld [vmem:[%s5827 + $0x20] sm:$0xf]
    %v5837 = vld [vmem:[%s5827 + $0x24] sm:$0xf]
    %v5838 = vld [vmem:[%s5827 + $0x28] sm:$0xf]
    %v5839 = vld [vmem:[%s5827 + $0x2c] sm:$0xf]
    %v5840 = vld [vmem:[%s5827 + $0x30] sm:$0xf]
    %v5841 = vld [vmem:[%s5827 + $0x34] sm:$0xf]
    %v5842 = vld [vmem:[%s5827 + $0x38] sm:$0xf]
    %v5843 = vld [vmem:[%s5827 + $0x3c] sm:$0xf]
    %v5846 = vunpack.c.l.b16 %v5825
    %v5847 = vunpack.c.l.b16 %v5826
    %v5848 = vrot.slane %v5847, 7
    %v5849 = vsel %vm4518, %v5848, %v5846
    %v5850 = vpack.c.b16 %v5849, %v5849
    %v5868 = vunpack.c.l.b16 %v5828
    %v5869 = vunpack.c.l.b16 %v5829
    %v5870 = vunpack.c.l.b16 %v5830
    %v5871 = vunpack.c.l.b16 %v5831
    %v5872 = vunpack.c.l.b16 %v5832
    %v5873 = vunpack.c.l.b16 %v5833
    %v5874 = vunpack.c.l.b16 %v5834
    %v5875 = vunpack.c.l.b16 %v5835
    %v5876 = vunpack.c.l.b16 %v5836
    %v5877 = vunpack.c.l.b16 %v5837
    %v5878 = vunpack.c.l.b16 %v5838
    %v5879 = vunpack.c.l.b16 %v5839
    %v5880 = vunpack.c.l.b16 %v5840
    %v5881 = vunpack.c.l.b16 %v5841
    %v5882 = vunpack.c.l.b16 %v5842
    %v5883 = vunpack.c.l.b16 %v5843
    %v5884 = vpack.c.b16 %v5869, %v5868
    %v5885 = vpack.c.b16 %v5871, %v5870
    %v5886 = vpack.c.b16 %v5873, %v5872
    %v5887 = vpack.c.b16 %v5875, %v5874
    %v5888 = vpack.c.b16 %v5877, %v5876
    %v5889 = vpack.c.b16 %v5879, %v5878
    %v5890 = vpack.c.b16 %v5881, %v5880
    %v5891 = vpack.c.b16 %v5883, %v5882
    %5900 = vmatpush.bf16.msra.mxu0 %v5891
    %5901 = vmatpush.bf16.msra.mxu0 %v5890
    %5902 = vmatpush.bf16.msra.mxu0 %v5889
    %5903 = vmatpush.bf16.msra.mxu0 %v5888
    %5904 = vmatpush.bf16.msra.mxu0 %v5887
    %5905 = vmatpush.bf16.msra.mxu0 %v5886
    %5906 = vmatpush.bf16.msra.mxu0 %v5885
    %5907 = vmatpush.bf16.msra.mxu0 %v5884
    %5908 = vmatmul.bf16.gmra.mxu0 %v5850
    %v5909 = vpop.f32.mrf.mxu0
    %v5910 = vadd.f32 0.0, %v5909
    %v5911 = vpop.f32.mrf.mxu0
    %5912 = vdwg.mxu0
    %v5913 = vadd.f32 %v5818, %v5910
    %v5914 = vld [vmem:[#allocation4 + $0x1e] sm:$0x1]
    %v5915 = vld [vmem:[#allocation4 + $0x3e] sm:$0x1]
    %v5916 = vld [vmem:[#allocation4 + $0x1f] sm:$0x1]
    %v5917 = vld [vmem:[#allocation4 + $0x3f] sm:$0x1]
    %v5918 = vmax.f32 %v5914, %v5916
    %v5919 = vmax.f32 %v5915, %v5917
    %v5920 = vpack.c.bf16 %v5918, %v5918
    %v5921 = vpack.c.bf16 %v5919, %v5919
    %s5922 = scalar_lea.vmem %s6, 960
    %v5923 = vld [vmem:[%s5922] sm:$0xf]
    %v5924 = vld [vmem:[%s5922 + $0x4] sm:$0xf]
    %v5925 = vld [vmem:[%s5922 + $0x8] sm:$0xf]
    %v5926 = vld [vmem:[%s5922 + $0xc] sm:$0xf]
    %v5927 = vld [vmem:[%s5922 + $0x10] sm:$0xf]
    %v5928 = vld [vmem:[%s5922 + $0x14] sm:$0xf]
    %v5929 = vld [vmem:[%s5922 + $0x18] sm:$0xf]
    %v5930 = vld [vmem:[%s5922 + $0x1c] sm:$0xf]
    %v5931 = vld [vmem:[%s5922 + $0x20] sm:$0xf]
    %v5932 = vld [vmem:[%s5922 + $0x24] sm:$0xf]
    %v5933 = vld [vmem:[%s5922 + $0x28] sm:$0xf]
    %v5934 = vld [vmem:[%s5922 + $0x2c] sm:$0xf]
    %v5935 = vld [vmem:[%s5922 + $0x30] sm:$0xf]
    %v5936 = vld [vmem:[%s5922 + $0x34] sm:$0xf]
    %v5937 = vld [vmem:[%s5922 + $0x38] sm:$0xf]
    %v5938 = vld [vmem:[%s5922 + $0x3c] sm:$0xf]
    %v5941 = vunpack.c.l.b16 %v5920
    %v5942 = vunpack.c.l.b16 %v5921
    %v5943 = vrot.slane %v5942, 7
    %v5944 = vsel %vm4518, %v5943, %v5941
    %v5945 = vpack.c.b16 %v5944, %v5944
    %v5963 = vunpack.c.l.b16 %v5923
    %v5964 = vunpack.c.l.b16 %v5924
    %v5965 = vunpack.c.l.b16 %v5925
    %v5966 = vunpack.c.l.b16 %v5926
    %v5967 = vunpack.c.l.b16 %v5927
    %v5968 = vunpack.c.l.b16 %v5928
    %v5969 = vunpack.c.l.b16 %v5929
    %v5970 = vunpack.c.l.b16 %v5930
    %v5971 = vunpack.c.l.b16 %v5931
    %v5972 = vunpack.c.l.b16 %v5932
    %v5973 = vunpack.c.l.b16 %v5933
    %v5974 = vunpack.c.l.b16 %v5934
    %v5975 = vunpack.c.l.b16 %v5935
    %v5976 = vunpack.c.l.b16 %v5936
    %v5977 = vunpack.c.l.b16 %v5937
    %v5978 = vunpack.c.l.b16 %v5938
    %v5979 = vpack.c.b16 %v5964, %v5963
    %v5980 = vpack.c.b16 %v5966, %v5965
    %v5981 = vpack.c.b16 %v5968, %v5967
    %v5982 = vpack.c.b16 %v5970, %v5969
    %v5983 = vpack.c.b16 %v5972, %v5971
    %v5984 = vpack.c.b16 %v5974, %v5973
    %v5985 = vpack.c.b16 %v5976, %v5975
    %v5986 = vpack.c.b16 %v5978, %v5977
    %5995 = vmatpush.bf16.msra.mxu0 %v5986
    %5996 = vmatpush.bf16.msra.mxu0 %v5985
    %5997 = vmatpush.bf16.msra.mxu0 %v5984
    %5998 = vmatpush.bf16.msra.mxu0 %v5983
    %5999 = vmatpush.bf16.msra.mxu0 %v5982
    %6000 = vmatpush.bf16.msra.mxu0 %v5981
    %6001 = vmatpush.bf16.msra.mxu0 %v5980
    %6002 = vmatpush.bf16.msra.mxu0 %v5979
    %6003 = vmatmul.bf16.gmra.mxu0 %v5945
    %v6004 = vpop.f32.mrf.mxu0
    %v6005 = vadd.f32 0.0, %v6004
    %v6006 = vpop.f32.mrf.mxu0
    %6007 = vdwg.mxu0
    %v6008 = vadd.f32 %v5913, %v6005
    %v6009 = vpack.c.bf16 %v6008, %v6008
    %v6010 = vld [vmem:[%s8] sm:$0xf]
    %v6011 = vld [vmem:[%s8 + $0x4] sm:$0xf]
    %v6012 = vld [vmem:[%s8 + $0x8] sm:$0xf]
    %v6013 = vld [vmem:[%s8 + $0xc] sm:$0xf]
    %v6014 = vld [vmem:[%s8 + $0x10] sm:$0xf]
    %v6015 = vld [vmem:[%s8 + $0x14] sm:$0xf]
    %v6016 = vld [vmem:[%s8 + $0x18] sm:$0xf]
    %v6017 = vld [vmem:[%s8 + $0x1c] sm:$0xf]
    %v6018 = vld [vmem:[%s8 + $0x20] sm:$0xf]
    %v6019 = vld [vmem:[%s8 + $0x24] sm:$0xf]
    %v6020 = vld [vmem:[%s8 + $0x28] sm:$0xf]
    %v6021 = vld [vmem:[%s8 + $0x2c] sm:$0xf]
    %v6022 = vld [vmem:[%s8 + $0x30] sm:$0xf]
    %v6023 = vld [vmem:[%s8 + $0x34] sm:$0xf]
    %v6024 = vld [vmem:[%s8 + $0x38] sm:$0xf]
    %v6025 = vld [vmem:[%s8 + $0x3c] sm:$0xf]
    %v6026 = vld [vmem:[%s9] sm:$0x1]
    %v6028 = vperm.slane %v6026, 0
    %v6046 = vunpack.c.l.b16 %v6010
    %v6047 = vunpack.c.l.b16 %v6011
    %v6048 = vunpack.c.l.b16 %v6012
    %v6049 = vunpack.c.l.b16 %v6013
    %v6050 = vunpack.c.l.b16 %v6014
    %v6051 = vunpack.c.l.b16 %v6015
    %v6052 = vunpack.c.l.b16 %v6016
    %v6053 = vunpack.c.l.b16 %v6017
    %v6054 = vunpack.c.l.b16 %v6018
    %v6055 = vunpack.c.l.b16 %v6019
    %v6056 = vunpack.c.l.b16 %v6020
    %v6057 = vunpack.c.l.b16 %v6021
    %v6058 = vunpack.c.l.b16 %v6022
    %v6059 = vunpack.c.l.b16 %v6023
    %v6060 = vunpack.c.l.b16 %v6024
    %v6061 = vunpack.c.l.b16 %v6025
    %v6062 = vpack.c.b16 %v6047, %v6046
    %v6063 = vpack.c.b16 %v6049, %v6048
    %v6064 = vpack.c.b16 %v6051, %v6050
    %v6065 = vpack.c.b16 %v6053, %v6052
    %v6066 = vpack.c.b16 %v6055, %v6054
    %v6067 = vpack.c.b16 %v6057, %v6056
    %v6068 = vpack.c.b16 %v6059, %v6058
    %v6069 = vpack.c.b16 %v6061, %v6060
    %6078 = vmatpush.bf16.msra.mxu0 %v6069
    %6079 = vmatpush.bf16.msra.mxu0 %v6068
    %6080 = vmatpush.bf16.msra.mxu0 %v6067
    %6081 = vmatpush.bf16.msra.mxu0 %v6066
    %6082 = vmatpush.bf16.msra.mxu0 %v6065
    %6083 = vmatpush.bf16.msra.mxu0 %v6064
    %6084 = vmatpush.bf16.msra.mxu0 %v6063
    %6085 = vmatpush.bf16.msra.mxu0 %v6062
    %6086 = vmatmul.bf16.gmra.mxu0 %v6009
    %v6087 = vpop.f32.mrf.mxu0
    %v6088 = vadd.f32 %v6028, %v6087
    %v6089 = vpop.f32.mrf.mxu0
    %6090 = vdwg.mxu0
    %6091 = vst [vmem:[#allocation5] sm:$0x3] %v6088
    // Predicated region
    $region42: #{net_forward.1} parent=1 // pred_check
      _
    $region43: #{net_forward.1} parent=1 // pred_check_branch
      %6093 = sbr.rel (0) target = $region45
    $region44: #{net_forward.1} parent=1 // pred_region
      %6095 = vsyncadd [#allocation6], 0
      %s6097 = sshll.u32 [#allocation5], 4
      %s6098 = int_to_ptr.vmem [resolvable:$true] %s6097
      %s6099 = sshll.u32 %s10, 4
      %s6100 = int_to_ptr.hbm [resolvable:$true] %s6099
      %6102 = dma.vmem_to_hbm [thread:$0]  %s6098, 32, %s6100, [#allocation6]
    $region45: #{net_forward.1} parent=1 // pred_fallthru
      _
    // Predicated region
    $region46: #{net_forward.1} parent=1 // pred_check
      _
    $region47: #{net_forward.1} parent=1 // pred_check_branch
      %6104 = sbr.rel (0) target = $region49
    $region48: #{net_forward.1} parent=1 // pred_region
      %6106 = dma.done [#allocation6], 32
    $region49: #{net_forward.1} parent=1 // pred_fallthru
      _
    %6107 = vsyncpa [#allocation6], 1

</llo_original>
